<compile_context>
chip_gen: v6e
topology: v6e:2x2x1
jax: 0.10.0
libtpu: 0.0.40
codegen_flags: <defaults>
</compile_context>

<pallas_src>
import jax
import jax.numpy as jnp
from jax.experimental import pallas as pl
from jax.experimental.pallas import tpu as pltpu

EPS = 1e-5
LANES = 128


def _round_up(v, m):
    return ((v + m - 1) // m) * m


def _vmem_limit_bytes():
    # ~3/4 of physical VMEM: ~96 MiB on v5e/v6e (128 MiB), ~48 MiB on v7x (64 MiB).
    try:
        cap = pltpu.get_tpu_info().vmem_capacity_bytes
    except Exception:
        cap = 64 * 1024 * 1024
    return int(max(32 * 1024 * 1024, min(cap * 3 // 4, 100 * 1024 * 1024)))


def _pick_row_tile(N, H, W, Cp, bytes_budget=2 << 20):
    """Largest row tile TH dividing H whose f32 tile fits the budget, preferring
    >= 8 total grid steps so the BlockSpec pipeline actually overlaps DMA with
    compute (and each megacore TC gets more than one step)."""
    divisors = [d for d in range(1, H + 1) if H % d == 0]
    fits = [d for d in divisors if d * W * Cp * 4 <= bytes_budget] or [1]
    deep = [d for d in fits if N * (H // d) >= 8]
    return max(deep) if deep else max(fits)


# ---------------------------------------------------------------------------
# Kernel 1: 3x3 conv1 as 3 accumulated bf16 MXU dots + per-tile BN1 partials.
# ---------------------------------------------------------------------------
def conv1_kernel(xpad_ref, w_ref, out_ref, stats_ref):
    # xpad_ref: [1, H+2, W+2, Cp] f32 (full padded image; DMA'd once per image)
    # w_ref:    [3, 3*Cp, Cp] bf16 (rows ordered (dx, cin) within each dy plane)
    # out_ref:  [1, TH, W, Cp] bf16    stats_ref: [1, 1, 2, Cp] f32
    _, TH, W, Cp = out_ref.shape
    M = TH * W
    h = pl.program_id(1)
    r0 = pl.multiple_of(h * TH, TH)

    # TH+2 haloed input rows for this row tile, cast once to bf16 (MXU operand).
    xr = xpad_ref[0, pl.ds(r0, TH + 2), :, :].astype(jnp.bfloat16)

    acc = jnp.zeros((M, Cp), jnp.float32)
    for dy in range(3):
        # One dy row of the 3x3 stencil: K = 3*Cp contraction (fills the MXU).
        patch = jnp.concatenate(
            [xr[dy:dy + TH, dx:dx + W, :] for dx in range(3)], axis=-1)
        acc += jnp.dot(patch.reshape(M, 3 * Cp), w_ref[dy],
                       preferred_element_type=jnp.float32)

    out_ref[0] = acc.reshape(TH, W, Cp).astype(out_ref.dtype)
    # Per-tile partial BN statistics (sum, sum of squares) from the f32 accumulator.
    su = jnp.sum(acc, axis=0, keepdims=True)
    sq = jnp.sum(acc * acc, axis=0, keepdims=True)
    stats_ref[0, 0] = jnp.concatenate([su, sq], axis=0)


# ---------------------------------------------------------------------------
# Kernel 2: fused BN1 (folded scale/shift) + ReLU + 3x3 conv2 + BN2 partials.
#           conv2 halos are assembled in registers (no misaligned stores).
# ---------------------------------------------------------------------------
def bn_relu_conv2_kernel(y1_ref, sc_ref, sh_ref, w_ref, out_ref, stats_ref):
    # y1_ref: [1, H, W, Cp] bf16 raw conv1 output (full image)
    # sc/sh:  [1, Cp] f32 folded BN1 scale/shift   w_ref: [3, 3*Cp, Cp] bf16
    _, TH, W, Cp = out_ref.shape
    H = y1_ref.shape[1]
    M = TH * W
    h = pl.program_id(1)
    r0 = pl.multiple_of(h * TH, TH)

    sc = sc_ref[...]
    sh = sh_ref[...]

    def bn_relu(rows_bf16):
        return jnp.maximum(rows_bf16.astype(jnp.float32) * sc + sh, 0.0)

    # Branch-free halo rows: clamp the row index, then zero the row if it lies
    # outside the image (this reproduces conv2's SAME zero padding).
    top = jnp.where(r0 > 0,
                    bn_relu(y1_ref[0, pl.ds(jnp.maximum(r0 - 1, 0), 1), :, :]),
                    0.0)
    mid = bn_relu(y1_ref[0, pl.ds(r0, TH), :, :])
    bot = jnp.where(r0 + TH < H,
                    bn_relu(y1_ref[0, pl.ds(jnp.minimum(r0 + TH, H - 1), 1), :, :]),
                    0.0)
    rows = jnp.concatenate([top, mid, bot], axis=0).astype(jnp.bfloat16)  # (TH+2, W, Cp)

    # Column zero-halo built in registers: no offset-1 interior VMEM store.
    zcol = jnp.zeros((TH + 2, 1, Cp), jnp.bfloat16)
    ypad = jnp.concatenate([zcol, rows, zcol], axis=1)                    # (TH+2, W+2, Cp)

    acc = jnp.zeros((M, Cp), jnp.float32)
    for dy in range(3):
        patch = jnp.concatenate(
            [ypad[dy:dy + TH, dx:dx + W, :] for dx in range(3)], axis=-1)
        acc += jnp.dot(patch.reshape(M, 3 * Cp), w_ref[dy],
                       preferred_element_type=jnp.float32)

    out_ref[0] = acc.reshape(TH, W, Cp).astype(out_ref.dtype)
    su = jnp.sum(acc, axis=0, keepdims=True)
    sq = jnp.sum(acc * acc, axis=0, keepdims=True)
    stats_ref[0, 0] = jnp.concatenate([su, sq], axis=0)


# ---------------------------------------------------------------------------
# Kernel 3: fused BN2 (folded scale/shift) + residual add (Y += X) and the
#           module output relu(X).  X is aliased onto the relu(X) output.
# ---------------------------------------------------------------------------
def bn2_residual_kernel(y2_ref, sc_ref, sh_ref, x_ref, out_ref, ybr_ref):
    y2 = y2_ref[0].astype(jnp.float32)                  # (TH, W, Cp)
    x = x_ref[0]                                        # f32
    ybr_ref[0] = y2 * sc_ref[...] + sh_ref[...] + x     # residual branch Y += X
    out_ref[0] = jnp.maximum(x, 0.0)                    # module returns relu(X)


# ---------------------------------------------------------------------------
# Wrapper helpers (layout plumbing only).
# ---------------------------------------------------------------------------
def _pack_conv_weight(w_hwio, Cp):
    # (3, 3, Cin, Cout) -> zero-pad channels to Cp -> (3, 3*Cp, Cp) bf16; within
    # each dy plane rows are ordered (dx, cin), matching the in-kernel
    # concat([dx=0, dx=1, dx=2], axis=-1) patch construction.
    kh, kw, ci, co = w_hwio.shape
    w = jnp.pad(w_hwio, ((0, 0), (0, 0), (0, Cp - ci), (0, Cp - co)))
    return w.reshape(kh, kw * Cp, Cp).astype(jnp.bfloat16)


def _pad_channel_vec(v, Cp):
    return jnp.pad(v, ((0, 0), (0, Cp - v.shape[1]))).astype(jnp.float32)


def _bn_scale_shift(stats, gamma, beta, count):
    # stats: [N, nH, 2, Cp] per-tile (sum, sum_sq), f32.  Fold training-mode BN
    # (biased variance) into a single per-channel FMA: y_norm = y*scale + shift.
    # NOTE: single-pass variance (clamped, eps-regularised); kept in f32.
    s = jnp.sum(stats[:, :, 0, :], axis=(0, 1))[None, :]
    sq = jnp.sum(stats[:, :, 1, :], axis=(0, 1))[None, :]
    mean = s / count
    var = jnp.maximum(sq / count - mean * mean, 0.0)
    scale = gamma * jax.lax.rsqrt(var + EPS)
    shift = beta - mean * scale
    return scale, shift


def residual_blk_forward(x_nchw, params):
    """x_nchw: [N, C, H, W] f32. Returns (module output relu(X), residual branch Y), NCHW."""
    N, C, H, W = x_nchw.shape
    Cp = _round_up(C, LANES)
    TH = _pick_row_tile(N, H, W, Cp)
    nH = H // TH

    # NCHW -> NHWC, channels zero-padded to a lane-dense multiple of 128.
    x = jnp.transpose(x_nchw, (0, 2, 3, 1)).astype(jnp.float32)
    x = jnp.pad(x, ((0, 0), (0, 0), (0, 0), (0, Cp - C)))
    xpad = jnp.pad(x, ((0, 0), (1, 1), (1, 1), (0, 0)))         # conv1 halo

    w1 = _pack_conv_weight(params["w1"], Cp)
    w2 = _pack_conv_weight(params["w2"], Cp)
    g1 = _pad_channel_vec(params["g1"], Cp)
    b1 = _pad_channel_vec(params["be1"], Cp)
    g2 = _pad_channel_vec(params["g2"], Cp)
    b2 = _pad_channel_vec(params["be2"], Cp)

    cparams = pltpu.CompilerParams(
        dimension_semantics=("parallel", "parallel"),
        vmem_limit_bytes=_vmem_limit_bytes())

    grid = (N, nH)
    # Full-image input blocks: index maps constant in h -> each image is DMA'd
    # once per batch index and reused across its row tiles.
    xpad_spec = pl.BlockSpec((1, H + 2, W + 2, Cp), lambda n, h: (n, 0, 0, 0))
    yfull_spec = pl.BlockSpec((1, H, W, Cp), lambda n, h: (n, 0, 0, 0))
    tile_spec = pl.BlockSpec((1, TH, W, Cp), lambda n, h: (n, h, 0, 0))
    stat_spec = pl.BlockSpec((1, 1, 2, Cp), lambda n, h: (n, h, 0, 0))
    vec_spec = pl.BlockSpec((1, Cp), lambda n, h: (0, 0))
    w_spec = pl.BlockSpec((3, 3 * Cp, Cp), lambda n, h: (0, 0, 0))

    # Stage 1: conv1 (bf16 MXU) + per-tile BN1 partial statistics.
    conv1_out, stats1 = pl.pallas_call(
        conv1_kernel,
        grid=grid,
        in_specs=[xpad_spec, w_spec],
        out_specs=(tile_spec, stat_spec),
        out_shape=(jax.ShapeDtypeStruct((N, H, W, Cp), jnp.bfloat16),
                   jax.ShapeDtypeStruct((N, nH, 2, Cp), jnp.float32)),
        compiler_params=cparams,
    )(xpad, w1)
    scale1, shift1 = _bn_scale_shift(stats1, g1, b1, N * H * W)

    # Stage 2: BN1 (folded FMA) + ReLU + conv2 + per-tile BN2 partial stats.
    conv2_out, stats2 = pl.pallas_call(
        bn_relu_conv2_kernel,
        grid=grid,
        in_specs=[yfull_spec, vec_spec, vec_spec, w_spec],
        out_specs=(tile_spec, stat_spec),
        out_shape=(jax.ShapeDtypeStruct((N, H, W, Cp), jnp.bfloat16),
                   jax.ShapeDtypeStruct((N, nH, 2, Cp), jnp.float32)),
        compiler_params=cparams,
    )(conv1_out, scale1, shift1, w2)
    scale2, shift2 = _bn_scale_shift(stats2, g2, b2, N * H * W)

    # Stage 3: BN2 + residual add; module output relu(X).  X (input index 3) is
    # aliased onto the relu(X) output (output index 0): streaming in-place pass.
    out, ybr = pl.pallas_call(
        bn2_residual_kernel,
        grid=grid,
        in_specs=[tile_spec, vec_spec, vec_spec, tile_spec],
        out_specs=(tile_spec, tile_spec),
        out_shape=(jax.ShapeDtypeStruct((N, H, W, Cp), jnp.float32),
                   jax.ShapeDtypeStruct((N, H, W, Cp), jnp.float32)),
        input_output_aliases={3: 0},
        compiler_params=cparams,
    )(conv2_out, scale2, shift2, x)

    # Strip channel padding and return to NCHW.
    out = jnp.transpose(out[..., :C], (0, 3, 1, 2))
    ybr = jnp.transpose(ybr[..., :C], (0, 3, 1, 2))
    return out, ybr


residual_blk_forward = jax.jit(residual_blk_forward)


# ---------------------------------------------------------------------------
# Pure-JAX reference (for correctness checking only).
# ---------------------------------------------------------------------------
def residual_blk_reference(x_nchw, params):
    x = jnp.transpose(x_nchw, (0, 2, 3, 1)).astype(jnp.float32)

    def conv3x3(v, w):
        return jax.lax.conv_general_dilated(
            v, w, window_strides=(1, 1), padding="SAME",
            dimension_numbers=("NHWC", "HWIO", "NHWC"),
            precision=jax.lax.Precision.HIGHEST)

    def bn_train(v, g, b):
        mean = jnp.mean(v, axis=(0, 1, 2), keepdims=True)
        var = jnp.mean((v - mean) ** 2, axis=(0, 1, 2), keepdims=True)
        return (v - mean) * jax.lax.rsqrt(var + EPS) * g + b

    y = jax.nn.relu(bn_train(conv3x3(x, params["w1"]), params["g1"], params["be1"]))
    y = bn_train(conv3x3(y, params["w2"]), params["g2"], params["be2"])
    y = y + x
    out = jax.nn.relu(x)
    return (jnp.transpose(out, (0, 3, 1, 2)), jnp.transpose(y, (0, 3, 1, 2)))


if __name__ == "__main__":
    key = jax.random.PRNGKey(0)
    N, C, H, W = 2, 4, 16, 16
    ks = jax.random.split(key, 3)

    x = jax.random.normal(ks[0], (N, C, H, W), jnp.float32)

    # Synthetic parameters matching the module's shapes (HWIO conv weights, BN
    # gamma=1 / beta=0 lazy defaults).  Conv biases are omitted: a per-channel
    # conv bias is exactly cancelled by training-mode BN mean subtraction.
    params = dict(
        w1=jax.random.normal(ks[1], (3, 3, C, C), jnp.float32) * 0.1,
        g1=jnp.ones((1, C), jnp.float32),
        be1=jnp.zeros((1, C), jnp.float32),
        w2=jax.random.normal(ks[2], (3, 3, C, C), jnp.float32) * 0.1,
        g2=jnp.ones((1, C), jnp.float32),
        be2=jnp.zeros((1, C), jnp.float32),
    )

    out, y_branch = residual_blk_forward(x, params)
    jax.block_until_ready((out, y_branch))

    assert out.shape == (N, C, H, W) and y_branch.shape == (N, C, H, W)
    # Module returns relu(X) when conv3 is None (maintain_channels=True); this
    # path stays in f32 end-to-end and must match tightly.
    assert bool(jnp.allclose(out, jnp.maximum(x, 0.0), atol=1e-6))

    # Residual branch vs pure-JAX f32 reference.  Tolerance reflects bf16 MXU
    # operands / bf16 inter-stage activations (per the perf review) on top of
    # MXU-vs-XLA conv accumulation-order differences.
    ref_out, ref_ybr = residual_blk_reference(x, params)
    assert bool(jnp.allclose(out, ref_out, atol=1e-6))
    err = jnp.abs(y_branch - ref_ybr)
    assert bool(jnp.all(err <= 5e-2 + 5e-2 * jnp.abs(ref_ybr)))
    assert float(jnp.mean(err)) < 2.5e-2

    print("KERNEL_OK")
</pallas_src>

<mosaic_0001>
module attributes {stable_mosaic.version = 11 : i64} {
  func.func @conv1_kernel(%arg0: i32, %arg1: i32, %arg2: memref<1x18x18x128xf32, #tpu.memory_space<vmem>>, %arg3: memref<3x384x128xbf16, #tpu.memory_space<vmem>>, %arg4: memref<1x4x16x128xbf16, #tpu.memory_space<vmem>>, %arg5: memref<1x1x2x128xf32, #tpu.memory_space<vmem>>) attributes {dimension_semantics = [#tpu.dimension_semantics<parallel>, #tpu.dimension_semantics<parallel>], iteration_bounds = array<i64: 2, 4>, scalar_prefetch = 0 : i64, scratch_operands = 0 : i64, tpu.core_type = #tpu.core_type<tc>, window_params = [{transform_indices = @transform_0, window_bounds = array<i64: 1, 18, 18, 128>}, {pipeline_mode = #tpu.pipeline_mode<synchronous>, transform_indices = @transform_1, window_bounds = array<i64: 3, 384, 128>}, {transform_indices = @transform_2, window_bounds = array<i64: 1, 4, 16, 128>}, {transform_indices = @transform_3, window_bounds = array<i64: 1, 1, 2, 128>}]} {
    %c4_i32 = arith.constant 4 : i32
    %0 = arith.muli %arg1, %c4_i32 : i32
    %1 = tpu.assume_multiple %0, 4 : i32
    %c0 = arith.constant 0 : index
    %2 = arith.index_cast %1 : i32 to index
    %c0_0 = arith.constant 0 : index
    %c0_1 = arith.constant 0 : index
    %3 = vector.load %arg2[%c0, %2, %c0_0, %c0_1] : memref<1x18x18x128xf32, #tpu.memory_space<vmem>>, vector<1x6x18x128xf32>
    %4 = vector.shape_cast %3 : vector<1x6x18x128xf32> to vector<6x18x128xf32>
    %5 = arith.truncf %4 : vector<6x18x128xf32> to vector<6x18x128xbf16>
    %cst = arith.constant 0.000000e+00 : f32
    %6 = vector.broadcast %cst : f32 to vector<64x128xf32>
    %7 = vector.extract_strided_slice %5 {offsets = [0, 0, 0], sizes = [4, 16, 128], strides = [1, 1, 1]} : vector<6x18x128xbf16> to vector<4x16x128xbf16>
    %8 = vector.extract_strided_slice %5 {offsets = [0, 1, 0], sizes = [4, 16, 128], strides = [1, 1, 1]} : vector<6x18x128xbf16> to vector<4x16x128xbf16>
    %9 = vector.extract_strided_slice %5 {offsets = [0, 2, 0], sizes = [4, 16, 128], strides = [1, 1, 1]} : vector<6x18x128xbf16> to vector<4x16x128xbf16>
    %10 = tpu.concatenate %7, %8, %9 in 2 : vector<4x16x128xbf16>, vector<4x16x128xbf16>, vector<4x16x128xbf16> -> vector<4x16x384xbf16>
    %11 = vector.shape_cast %10 : vector<4x16x384xbf16> to vector<64x384xbf16>
    %c0_2 = arith.constant 0 : index
    %c0_3 = arith.constant 0 : index
    %c0_4 = arith.constant 0 : index
    %12 = vector.load %arg3[%c0_2, %c0_3, %c0_4] : memref<3x384x128xbf16, #tpu.memory_space<vmem>>, vector<1x384x128xbf16>
    %13 = vector.shape_cast %12 : vector<1x384x128xbf16> to vector<384x128xbf16>
    %cst_5 = arith.constant dense<0.000000e+00> : vector<64x128xf32>
    %14 = tpu.matmul %11, %13, %cst_5 {dimension_numbers = #tpu.dot_dimension_numbers<[1], [0], [0], [1], [0, 0, 1, 1], [], []>} : vector<64x384xbf16>, vector<384x128xbf16>, vector<64x128xf32> -> vector<64x128xf32>
    %15 = arith.addf %6, %14 : vector<64x128xf32>
    %16 = vector.extract_strided_slice %5 {offsets = [1, 0, 0], sizes = [4, 16, 128], strides = [1, 1, 1]} : vector<6x18x128xbf16> to vector<4x16x128xbf16>
    %17 = vector.extract_strided_slice %5 {offsets = [1, 1, 0], sizes = [4, 16, 128], strides = [1, 1, 1]} : vector<6x18x128xbf16> to vector<4x16x128xbf16>
    %18 = vector.extract_strided_slice %5 {offsets = [1, 2, 0], sizes = [4, 16, 128], strides = [1, 1, 1]} : vector<6x18x128xbf16> to vector<4x16x128xbf16>
    %19 = tpu.concatenate %16, %17, %18 in 2 : vector<4x16x128xbf16>, vector<4x16x128xbf16>, vector<4x16x128xbf16> -> vector<4x16x384xbf16>
    %20 = vector.shape_cast %19 : vector<4x16x384xbf16> to vector<64x384xbf16>
    %c1 = arith.constant 1 : index
    %c0_6 = arith.constant 0 : index
    %c0_7 = arith.constant 0 : index
    %21 = vector.load %arg3[%c1, %c0_6, %c0_7] : memref<3x384x128xbf16, #tpu.memory_space<vmem>>, vector<1x384x128xbf16>
    %22 = vector.shape_cast %21 : vector<1x384x128xbf16> to vector<384x128xbf16>
    %cst_8 = arith.constant dense<0.000000e+00> : vector<64x128xf32>
    %23 = tpu.matmul %20, %22, %cst_8 {dimension_numbers = #tpu.dot_dimension_numbers<[1], [0], [0], [1], [0, 0, 1, 1], [], []>} : vector<64x384xbf16>, vector<384x128xbf16>, vector<64x128xf32> -> vector<64x128xf32>
    %24 = arith.addf %15, %23 : vector<64x128xf32>
    %25 = vector.extract_strided_slice %5 {offsets = [2, 0, 0], sizes = [4, 16, 128], strides = [1, 1, 1]} : vector<6x18x128xbf16> to vector<4x16x128xbf16>
    %26 = vector.extract_strided_slice %5 {offsets = [2, 1, 0], sizes = [4, 16, 128], strides = [1, 1, 1]} : vector<6x18x128xbf16> to vector<4x16x128xbf16>
    %27 = vector.extract_strided_slice %5 {offsets = [2, 2, 0], sizes = [4, 16, 128], strides = [1, 1, 1]} : vector<6x18x128xbf16> to vector<4x16x128xbf16>
    %28 = tpu.concatenate %25, %26, %27 in 2 : vector<4x16x128xbf16>, vector<4x16x128xbf16>, vector<4x16x128xbf16> -> vector<4x16x384xbf16>
    %29 = vector.shape_cast %28 : vector<4x16x384xbf16> to vector<64x384xbf16>
    %c2 = arith.constant 2 : index
    %c0_9 = arith.constant 0 : index
    %c0_10 = arith.constant 0 : index
    %30 = vector.load %arg3[%c2, %c0_9, %c0_10] : memref<3x384x128xbf16, #tpu.memory_space<vmem>>, vector<1x384x128xbf16>
    %31 = vector.shape_cast %30 : vector<1x384x128xbf16> to vector<384x128xbf16>
    %cst_11 = arith.constant dense<0.000000e+00> : vector<64x128xf32>
    %32 = tpu.matmul %29, %31, %cst_11 {dimension_numbers = #tpu.dot_dimension_numbers<[1], [0], [0], [1], [0, 0, 1, 1], [], []>} : vector<64x384xbf16>, vector<384x128xbf16>, vector<64x128xf32> -> vector<64x128xf32>
    %33 = arith.addf %24, %32 : vector<64x128xf32>
    %34 = vector.shape_cast %33 : vector<64x128xf32> to vector<4x16x128xf32>
    %35 = arith.truncf %34 : vector<4x16x128xf32> to vector<4x16x128xbf16>
    %c0_12 = arith.constant 0 : index
    %c0_13 = arith.constant 0 : index
    %c0_14 = arith.constant 0 : index
    %c0_15 = arith.constant 0 : index
    %36 = vector.load %arg4[%c0_12, %c0_13, %c0_14, %c0_15] : memref<1x4x16x128xbf16, #tpu.memory_space<vmem>>, vector<1x4x16x128xbf16>
    %37 = vector.shape_cast %36 : vector<1x4x16x128xbf16> to vector<4x16x128xbf16>
    %38 = vector.shape_cast %35 : vector<4x16x128xbf16> to vector<1x4x16x128xbf16>
    tpu.vector_store %arg4[%c0_12, %c0_13, %c0_14, %c0_15], %38 {strides = array<i32>} : memref<1x4x16x128xbf16, #tpu.memory_space<vmem>>, vector<1x4x16x128xbf16>,
    %cst_16 = arith.constant dense<0.000000e+00> : vector<128xf32>
    %39 = vector.multi_reduction <add>, %33, %cst_16 [0] : vector<64x128xf32> to vector<128xf32>
    %40 = vector.shape_cast %39 : vector<128xf32> to vector<1x128xf32>
    %41 = arith.mulf %33, %33 : vector<64x128xf32>
    %cst_17 = arith.constant dense<0.000000e+00> : vector<128xf32>
    %42 = vector.multi_reduction <add>, %41, %cst_17 [0] : vector<64x128xf32> to vector<128xf32>
    %43 = vector.shape_cast %42 : vector<128xf32> to vector<1x128xf32>
    %44 = tpu.concatenate %40, %43 in 0 : vector<1x128xf32>, vector<1x128xf32> -> vector<2x128xf32>
    %c0_18 = arith.constant 0 : index
    %c0_19 = arith.constant 0 : index
    %c0_20 = arith.constant 0 : index
    %c0_21 = arith.constant 0 : index
    %45 = vector.load %arg5[%c0_18, %c0_19, %c0_20, %c0_21] : memref<1x1x2x128xf32, #tpu.memory_space<vmem>>, vector<1x1x2x128xf32>
    %46 = vector.shape_cast %45 : vector<1x1x2x128xf32> to vector<2x128xf32>
    %47 = vector.shape_cast %44 : vector<2x128xf32> to vector<1x1x2x128xf32>
    tpu.vector_store %arg5[%c0_18, %c0_19, %c0_20, %c0_21], %47 {strides = array<i32>} : memref<1x1x2x128xf32, #tpu.memory_space<vmem>>, vector<1x1x2x128xf32>,
    return
  }
  func.func @transform_0(%arg0: i32, %arg1: i32) -> (i32, i32, i32, i32) {
    %c0_i32 = arith.constant 0 : i32
    %c0_i32_0 = arith.constant 0 : i32
    %c0_i32_1 = arith.constant 0 : i32
    %c0_i32_2 = arith.constant 0 : i32
    return %arg0, %c0_i32, %c0_i32_0, %c0_i32_1 : i32, i32, i32, i32
  }
  func.func @transform_1(%arg0: i32, %arg1: i32) -> (i32, i32, i32) {
    %c0_i32 = arith.constant 0 : i32
    %c0_i32_0 = arith.constant 0 : i32
    %c0_i32_1 = arith.constant 0 : i32
    %c0_i32_2 = arith.constant 0 : i32
    return %c0_i32, %c0_i32_0, %c0_i32_1 : i32, i32, i32
  }
  func.func @transform_2(%arg0: i32, %arg1: i32) -> (i32, i32, i32, i32) {
    %c0_i32 = arith.constant 0 : i32
    %c0_i32_0 = arith.constant 0 : i32
    %c0_i32_1 = arith.constant 0 : i32
    return %arg0, %arg1, %c0_i32, %c0_i32_0 : i32, i32, i32, i32
  }
  func.func @transform_3(%arg0: i32, %arg1: i32) -> (i32, i32, i32, i32) {
    %c0_i32 = arith.constant 0 : i32
    %c0_i32_0 = arith.constant 0 : i32
    %c0_i32_1 = arith.constant 0 : i32
    return %arg0, %arg1, %c0_i32, %c0_i32_0 : i32, i32, i32, i32
  }
}

module attributes {stable_mosaic.version = 11 : i64} {
  func.func @bn2_residual_kernel(%arg0: i32, %arg1: i32, %arg2: memref<1x4x16x128xbf16, #tpu.memory_space<vmem>>, %arg3: memref<1x128xf32, #tpu.memory_space<vmem>>, %arg4: memref<1x128xf32, #tpu.memory_space<vmem>>, %arg5: memref<1x4x16x128xf32, #tpu.memory_space<vmem>>, %arg6: memref<1x4x16x128xf32, #tpu.memory_space<vmem>>, %arg7: memref<1x4x16x128xf32, #tpu.memory_space<vmem>>) attributes {dimension_semantics = [#tpu.dimension_semantics<parallel>, #tpu.dimension_semantics<parallel>], iteration_bounds = array<i64: 2, 4>, scalar_prefetch = 0 : i64, scratch_operands = 0 : i64, tpu.core_type = #tpu.core_type<tc>, window_params = [{transform_indices = @transform_0, window_bounds = array<i64: 1, 4, 16, 128>}, {pipeline_mode = #tpu.pipeline_mode<synchronous>, transform_indices = @transform_1, window_bounds = array<i64: 1, 128>}, {pipeline_mode = #tpu.pipeline_mode<synchronous>, transform_indices = @transform_2, window_bounds = array<i64: 1, 128>}, {transform_indices = @transform_3, window_bounds = array<i64: 1, 4, 16, 128>}, {transform_indices = @transform_4, window_bounds = array<i64: 1, 4, 16, 128>}, {transform_indices = @transform_5, window_bounds = array<i64: 1, 4, 16, 128>}]} {
    %c0 = arith.constant 0 : index
    %c0_0 = arith.constant 0 : index
    %c0_1 = arith.constant 0 : index
    %c0_2 = arith.constant 0 : index
    %0 = vector.load %arg2[%c0, %c0_0, %c0_1, %c0_2] : memref<1x4x16x128xbf16, #tpu.memory_space<vmem>>, vector<1x4x16x128xbf16>
    %1 = vector.shape_cast %0 : vector<1x4x16x128xbf16> to vector<4x16x128xbf16>
    %2 = arith.extf %1 : vector<4x16x128xbf16> to vector<4x16x128xf32>
    %c0_3 = arith.constant 0 : index
    %c0_4 = arith.constant 0 : index
    %c0_5 = arith.constant 0 : index
    %c0_6 = arith.constant 0 : index
    %3 = vector.load %arg5[%c0_3, %c0_4, %c0_5, %c0_6] : memref<1x4x16x128xf32, #tpu.memory_space<vmem>>, vector<1x4x16x128xf32>
    %4 = vector.shape_cast %3 : vector<1x4x16x128xf32> to vector<4x16x128xf32>
    %c0_7 = arith.constant 0 : index
    %c0_8 = arith.constant 0 : index
    %5 = vector.load %arg3[%c0_7, %c0_8] : memref<1x128xf32, #tpu.memory_space<vmem>>, vector<1x128xf32>
    %6 = vector.shape_cast %5 : vector<1x128xf32> to vector<1x1x128xf32>
    %7 = vector.broadcast %6 : vector<1x1x128xf32> to vector<4x16x128xf32>
    %8 = arith.mulf %2, %7 : vector<4x16x128xf32>
    %c0_9 = arith.constant 0 : index
    %c0_10 = arith.constant 0 : index
    %9 = vector.load %arg4[%c0_9, %c0_10] : memref<1x128xf32, #tpu.memory_space<vmem>>, vector<1x128xf32>
    %10 = vector.shape_cast %9 : vector<1x128xf32> to vector<1x1x128xf32>
    %11 = vector.broadcast %10 : vector<1x1x128xf32> to vector<4x16x128xf32>
    %12 = arith.addf %8, %11 : vector<4x16x128xf32>
    %13 = arith.addf %12, %4 : vector<4x16x128xf32>
    %c0_11 = arith.constant 0 : index
    %c0_12 = arith.constant 0 : index
    %c0_13 = arith.constant 0 : index
    %c0_14 = arith.constant 0 : index
    %14 = vector.load %arg7[%c0_11, %c0_12, %c0_13, %c0_14] : memref<1x4x16x128xf32, #tpu.memory_space<vmem>>, vector<1x4x16x128xf32>
    %15 = vector.shape_cast %14 : vector<1x4x16x128xf32> to vector<4x16x128xf32>
    %16 = vector.shape_cast %13 : vector<4x16x128xf32> to vector<1x4x16x128xf32>
    tpu.vector_store %arg7[%c0_11, %c0_12, %c0_13, %c0_14], %16 {strides = array<i32>} : memref<1x4x16x128xf32, #tpu.memory_space<vmem>>, vector<1x4x16x128xf32>,
    %cst = arith.constant 0.000000e+00 : f32
    %17 = vector.broadcast %cst : f32 to vector<4x16x128xf32>
    %18 = arith.maximumf %4, %17 : vector<4x16x128xf32>
    %c0_15 = arith.constant 0 : index
    %c0_16 = arith.constant 0 : index
    %c0_17 = arith.constant 0 : index
    %c0_18 = arith.constant 0 : index
    %19 = vector.load %arg6[%c0_15, %c0_16, %c0_17, %c0_18] : memref<1x4x16x128xf32, #tpu.memory_space<vmem>>, vector<1x4x16x128xf32>
    %20 = vector.shape_cast %19 : vector<1x4x16x128xf32> to vector<4x16x128xf32>
    %21 = vector.shape_cast %18 : vector<4x16x128xf32> to vector<1x4x16x128xf32>
    tpu.vector_store %arg6[%c0_15, %c0_16, %c0_17, %c0_18], %21 {strides = array<i32>} : memref<1x4x16x128xf32, #tpu.memory_space<vmem>>, vector<1x4x16x128xf32>,
    return
  }
  func.func @transform_0(%arg0: i32, %arg1: i32) -> (i32, i32, i32, i32) {
    %c0_i32 = arith.constant 0 : i32
    %c0_i32_0 = arith.constant 0 : i32
    %c0_i32_1 = arith.constant 0 : i32
    return %arg0, %arg1, %c0_i32, %c0_i32_0 : i32, i32, i32, i32
  }
  func.func @transform_1(%arg0: i32, %arg1: i32) -> (i32, i32) {
    %c0_i32 = arith.constant 0 : i32
    %c0_i32_0 = arith.constant 0 : i32
    %c0_i32_1 = arith.constant 0 : i32
    return %c0_i32, %c0_i32_0 : i32, i32
  }
  func.func @transform_2(%arg0: i32, %arg1: i32) -> (i32, i32) {
    %c0_i32 = arith.constant 0 : i32
    %c0_i32_0 = arith.constant 0 : i32
    %c0_i32_1 = arith.constant 0 : i32
    return %c0_i32, %c0_i32_0 : i32, i32
  }
  func.func @transform_3(%arg0: i32, %arg1: i32) -> (i32, i32, i32, i32) {
    %c0_i32 = arith.constant 0 : i32
    %c0_i32_0 = arith.constant 0 : i32
    %c0_i32_1 = arith.constant 0 : i32
    return %arg0, %arg1, %c0_i32, %c0_i32_0 : i32, i32, i32, i32
  }
  func.func @transform_4(%arg0: i32, %arg1: i32) -> (i32, i32, i32, i32) {
    %c0_i32 = arith.constant 0 : i32
    %c0_i32_0 = arith.constant 0 : i32
    %c0_i32_1 = arith.constant 0 : i32
    return %arg0, %arg1, %c0_i32, %c0_i32_0 : i32, i32, i32, i32
  }
  func.func @transform_5(%arg0: i32, %arg1: i32) -> (i32, i32, i32, i32) {
    %c0_i32 = arith.constant 0 : i32
    %c0_i32_0 = arith.constant 0 : i32
    %c0_i32_1 = arith.constant 0 : i32
    return %arg0, %arg1, %c0_i32, %c0_i32_0 : i32, i32, i32, i32
  }
}

module attributes {stable_mosaic.version = 11 : i64} {
  func.func @bn_relu_conv2_kernel(%arg0: i32, %arg1: i32, %arg2: memref<1x16x16x128xbf16, #tpu.memory_space<vmem>>, %arg3: memref<1x128xf32, #tpu.memory_space<vmem>>, %arg4: memref<1x128xf32, #tpu.memory_space<vmem>>, %arg5: memref<3x384x128xbf16, #tpu.memory_space<vmem>>, %arg6: memref<1x4x16x128xbf16, #tpu.memory_space<vmem>>, %arg7: memref<1x1x2x128xf32, #tpu.memory_space<vmem>>) attributes {dimension_semantics = [#tpu.dimension_semantics<parallel>, #tpu.dimension_semantics<parallel>], iteration_bounds = array<i64: 2, 4>, scalar_prefetch = 0 : i64, scratch_operands = 0 : i64, tpu.core_type = #tpu.core_type<tc>, window_params = [{transform_indices = @transform_0, window_bounds = array<i64: 1, 16, 16, 128>}, {pipeline_mode = #tpu.pipeline_mode<synchronous>, transform_indices = @transform_1, window_bounds = array<i64: 1, 128>}, {pipeline_mode = #tpu.pipeline_mode<synchronous>, transform_indices = @transform_2, window_bounds = array<i64: 1, 128>}, {pipeline_mode = #tpu.pipeline_mode<synchronous>, transform_indices = @transform_3, window_bounds = array<i64: 3, 384, 128>}, {transform_indices = @transform_4, window_bounds = array<i64: 1, 4, 16, 128>}, {transform_indices = @transform_5, window_bounds = array<i64: 1, 1, 2, 128>}]} {
    %c4_i32 = arith.constant 4 : i32
    %0 = arith.muli %arg1, %c4_i32 : i32
    %1 = tpu.assume_multiple %0, 4 : i32
    %c0 = arith.constant 0 : index
    %c0_0 = arith.constant 0 : index
    %2 = vector.load %arg3[%c0, %c0_0] : memref<1x128xf32, #tpu.memory_space<vmem>>, vector<1x128xf32>
    %c0_1 = arith.constant 0 : index
    %c0_2 = arith.constant 0 : index
    %3 = vector.load %arg4[%c0_1, %c0_2] : memref<1x128xf32, #tpu.memory_space<vmem>>, vector<1x128xf32>
    %c0_i32 = arith.constant 0 : i32
    %4 = arith.cmpi sgt, %1, %c0_i32 : i32
    %c1_i32 = arith.constant 1 : i32
    %5 = arith.subi %1, %c1_i32 : i32
    %c0_i32_3 = arith.constant 0 : i32
    %6 = arith.maxsi %5, %c0_i32_3 : i32
    %c0_4 = arith.constant 0 : index
    %7 = arith.index_cast %6 : i32 to index
    %c0_5 = arith.constant 0 : index
    %c0_6 = arith.constant 0 : index
    %8 = vector.load %arg2[%c0_4, %7, %c0_5, %c0_6] : memref<1x16x16x128xbf16, #tpu.memory_space<vmem>>, vector<1x1x16x128xbf16>
    %9 = vector.shape_cast %8 : vector<1x1x16x128xbf16> to vector<1x16x128xbf16>
    %10 = arith.extf %9 : vector<1x16x128xbf16> to vector<1x16x128xf32>
    %11 = vector.shape_cast %2 : vector<1x128xf32> to vector<1x1x128xf32>
    %12 = vector.broadcast %11 : vector<1x1x128xf32> to vector<1x16x128xf32>
    %13 = arith.mulf %10, %12 : vector<1x16x128xf32>
    %14 = vector.shape_cast %3 : vector<1x128xf32> to vector<1x1x128xf32>
    %15 = vector.broadcast %14 : vector<1x1x128xf32> to vector<1x16x128xf32>
    %16 = arith.addf %13, %15 : vector<1x16x128xf32>
    %cst = arith.constant 0.000000e+00 : f32
    %17 = vector.broadcast %cst : f32 to vector<1x16x128xf32>
    %18 = arith.maximumf %16, %17 : vector<1x16x128xf32>
    %cst_7 = arith.constant 0.000000e+00 : f32
    %19 = vector.broadcast %cst_7 : f32 to vector<1x16x128xf32>
    %20 = arith.select %4, %18, %19 : vector<1x16x128xf32>
    %c0_8 = arith.constant 0 : index
    %21 = arith.index_cast %1 : i32 to index
    %c0_9 = arith.constant 0 : index
    %c0_10 = arith.constant 0 : index
    %22 = vector.load %arg2[%c0_8, %21, %c0_9, %c0_10] : memref<1x16x16x128xbf16, #tpu.memory_space<vmem>>, vector<1x4x16x128xbf16>
    %23 = vector.shape_cast %22 : vector<1x4x16x128xbf16> to vector<4x16x128xbf16>
    %24 = arith.extf %23 : vector<4x16x128xbf16> to vector<4x16x128xf32>
    %25 = vector.shape_cast %2 : vector<1x128xf32> to vector<1x1x128xf32>
    %26 = vector.broadcast %25 : vector<1x1x128xf32> to vector<4x16x128xf32>
    %27 = arith.mulf %24, %26 : vector<4x16x128xf32>
    %28 = vector.shape_cast %3 : vector<1x128xf32> to vector<1x1x128xf32>
    %29 = vector.broadcast %28 : vector<1x1x128xf32> to vector<4x16x128xf32>
    %30 = arith.addf %27, %29 : vector<4x16x128xf32>
    %cst_11 = arith.constant 0.000000e+00 : f32
    %31 = vector.broadcast %cst_11 : f32 to vector<4x16x128xf32>
    %32 = arith.maximumf %30, %31 : vector<4x16x128xf32>
    %c4_i32_12 = arith.constant 4 : i32
    %33 = arith.addi %1, %c4_i32_12 : i32
    %c16_i32 = arith.constant 16 : i32
    %34 = arith.cmpi slt, %33, %c16_i32 : i32
    %c4_i32_13 = arith.constant 4 : i32
    %35 = arith.addi %1, %c4_i32_13 : i32
    %c15_i32 = arith.constant 15 : i32
    %36 = arith.minsi %35, %c15_i32 : i32
    %c0_14 = arith.constant 0 : index
    %37 = arith.index_cast %36 : i32 to index
    %c0_15 = arith.constant 0 : index
    %c0_16 = arith.constant 0 : index
    %38 = vector.load %arg2[%c0_14, %37, %c0_15, %c0_16] : memref<1x16x16x128xbf16, #tpu.memory_space<vmem>>, vector<1x1x16x128xbf16>
    %39 = vector.shape_cast %38 : vector<1x1x16x128xbf16> to vector<1x16x128xbf16>
    %40 = arith.extf %39 : vector<1x16x128xbf16> to vector<1x16x128xf32>
    %41 = vector.shape_cast %2 : vector<1x128xf32> to vector<1x1x128xf32>
    %42 = vector.broadcast %41 : vector<1x1x128xf32> to vector<1x16x128xf32>
    %43 = arith.mulf %40, %42 : vector<1x16x128xf32>
    %44 = vector.shape_cast %3 : vector<1x128xf32> to vector<1x1x128xf32>
    %45 = vector.broadcast %44 : vector<1x1x128xf32> to vector<1x16x128xf32>
    %46 = arith.addf %43, %45 : vector<1x16x128xf32>
    %cst_17 = arith.constant 0.000000e+00 : f32
    %47 = vector.broadcast %cst_17 : f32 to vector<1x16x128xf32>
    %48 = arith.maximumf %46, %47 : vector<1x16x128xf32>
    %cst_18 = arith.constant 0.000000e+00 : f32
    %49 = vector.broadcast %cst_18 : f32 to vector<1x16x128xf32>
    %50 = arith.select %34, %48, %49 : vector<1x16x128xf32>
    %51 = tpu.concatenate %20, %32, %50 in 0 : vector<1x16x128xf32>, vector<4x16x128xf32>, vector<1x16x128xf32> -> vector<6x16x128xf32>
    %52 = arith.truncf %51 : vector<6x16x128xf32> to vector<6x16x128xbf16>
    %cst_19 = arith.constant 0.000000e+00 : bf16
    %53 = vector.broadcast %cst_19 : bf16 to vector<6x1x128xbf16>
    %54 = tpu.concatenate %53, %52, %53 in 1 : vector<6x1x128xbf16>, vector<6x16x128xbf16>, vector<6x1x128xbf16> -> vector<6x18x128xbf16>
    %cst_20 = arith.constant 0.000000e+00 : f32
    %55 = vector.broadcast %cst_20 : f32 to vector<64x128xf32>
    %56 = vector.extract_strided_slice %54 {offsets = [0, 0, 0], sizes = [4, 16, 128], strides = [1, 1, 1]} : vector<6x18x128xbf16> to vector<4x16x128xbf16>
    %57 = vector.extract_strided_slice %54 {offsets = [0, 1, 0], sizes = [4, 16, 128], strides = [1, 1, 1]} : vector<6x18x128xbf16> to vector<4x16x128xbf16>
    %58 = vector.extract_strided_slice %54 {offsets = [0, 2, 0], sizes = [4, 16, 128], strides = [1, 1, 1]} : vector<6x18x128xbf16> to vector<4x16x128xbf16>
    %59 = tpu.concatenate %56, %57, %58 in 2 : vector<4x16x128xbf16>, vector<4x16x128xbf16>, vector<4x16x128xbf16> -> vector<4x16x384xbf16>
    %60 = vector.shape_cast %59 : vector<4x16x384xbf16> to vector<64x384xbf16>
    %c0_21 = arith.constant 0 : index
    %c0_22 = arith.constant 0 : index
    %c0_23 = arith.constant 0 : index
    %61 = vector.load %arg5[%c0_21, %c0_22, %c0_23] : memref<3x384x128xbf16, #tpu.memory_space<vmem>>, vector<1x384x128xbf16>
    %62 = vector.shape_cast %61 : vector<1x384x128xbf16> to vector<384x128xbf16>
    %cst_24 = arith.constant dense<0.000000e+00> : vector<64x128xf32>
    %63 = tpu.matmul %60, %62, %cst_24 {dimension_numbers = #tpu.dot_dimension_numbers<[1], [0], [0], [1], [0, 0, 1, 1], [], []>} : vector<64x384xbf16>, vector<384x128xbf16>, vector<64x128xf32> -> vector<64x128xf32>
    %64 = arith.addf %55, %63 : vector<64x128xf32>
    %65 = vector.extract_strided_slice %54 {offsets = [1, 0, 0], sizes = [4, 16, 128], strides = [1, 1, 1]} : vector<6x18x128xbf16> to vector<4x16x128xbf16>
    %66 = vector.extract_strided_slice %54 {offsets = [1, 1, 0], sizes = [4, 16, 128], strides = [1, 1, 1]} : vector<6x18x128xbf16> to vector<4x16x128xbf16>
    %67 = vector.extract_strided_slice %54 {offsets = [1, 2, 0], sizes = [4, 16, 128], strides = [1, 1, 1]} : vector<6x18x128xbf16> to vector<4x16x128xbf16>
    %68 = tpu.concatenate %65, %66, %67 in 2 : vector<4x16x128xbf16>, vector<4x16x128xbf16>, vector<4x16x128xbf16> -> vector<4x16x384xbf16>
    %69 = vector.shape_cast %68 : vector<4x16x384xbf16> to vector<64x384xbf16>
    %c1 = arith.constant 1 : index
    %c0_25 = arith.constant 0 : index
    %c0_26 = arith.constant 0 : index
    %70 = vector.load %arg5[%c1, %c0_25, %c0_26] : memref<3x384x128xbf16, #tpu.memory_space<vmem>>, vector<1x384x128xbf16>
    %71 = vector.shape_cast %70 : vector<1x384x128xbf16> to vector<384x128xbf16>
    %cst_27 = arith.constant dense<0.000000e+00> : vector<64x128xf32>
    %72 = tpu.matmul %69, %71, %cst_27 {dimension_numbers = #tpu.dot_dimension_numbers<[1], [0], [0], [1], [0, 0, 1, 1], [], []>} : vector<64x384xbf16>, vector<384x128xbf16>, vector<64x128xf32> -> vector<64x128xf32>
    %73 = arith.addf %64, %72 : vector<64x128xf32>
    %74 = vector.extract_strided_slice %54 {offsets = [2, 0, 0], sizes = [4, 16, 128], strides = [1, 1, 1]} : vector<6x18x128xbf16> to vector<4x16x128xbf16>
    %75 = vector.extract_strided_slice %54 {offsets = [2, 1, 0], sizes = [4, 16, 128], strides = [1, 1, 1]} : vector<6x18x128xbf16> to vector<4x16x128xbf16>
    %76 = vector.extract_strided_slice %54 {offsets = [2, 2, 0], sizes = [4, 16, 128], strides = [1, 1, 1]} : vector<6x18x128xbf16> to vector<4x16x128xbf16>
    %77 = tpu.concatenate %74, %75, %76 in 2 : vector<4x16x128xbf16>, vector<4x16x128xbf16>, vector<4x16x128xbf16> -> vector<4x16x384xbf16>
    %78 = vector.shape_cast %77 : vector<4x16x384xbf16> to vector<64x384xbf16>
    %c2 = arith.constant 2 : index
    %c0_28 = arith.constant 0 : index
    %c0_29 = arith.constant 0 : index
    %79 = vector.load %arg5[%c2, %c0_28, %c0_29] : memref<3x384x128xbf16, #tpu.memory_space<vmem>>, vector<1x384x128xbf16>
    %80 = vector.shape_cast %79 : vector<1x384x128xbf16> to vector<384x128xbf16>
    %cst_30 = arith.constant dense<0.000000e+00> : vector<64x128xf32>
    %81 = tpu.matmul %78, %80, %cst_30 {dimension_numbers = #tpu.dot_dimension_numbers<[1], [0], [0], [1], [0, 0, 1, 1], [], []>} : vector<64x384xbf16>, vector<384x128xbf16>, vector<64x128xf32> -> vector<64x128xf32>
    %82 = arith.addf %73, %81 : vector<64x128xf32>
    %83 = vector.shape_cast %82 : vector<64x128xf32> to vector<4x16x128xf32>
    %84 = arith.truncf %83 : vector<4x16x128xf32> to vector<4x16x128xbf16>
    %c0_31 = arith.constant 0 : index
    %c0_32 = arith.constant 0 : index
    %c0_33 = arith.constant 0 : index
    %c0_34 = arith.constant 0 : index
    %85 = vector.load %arg6[%c0_31, %c0_32, %c0_33, %c0_34] : memref<1x4x16x128xbf16, #tpu.memory_space<vmem>>, vector<1x4x16x128xbf16>
    %86 = vector.shape_cast %85 : vector<1x4x16x128xbf16> to vector<4x16x128xbf16>
    %87 = vector.shape_cast %84 : vector<4x16x128xbf16> to vector<1x4x16x128xbf16>
    tpu.vector_store %arg6[%c0_31, %c0_32, %c0_33, %c0_34], %87 {strides = array<i32>} : memref<1x4x16x128xbf16, #tpu.memory_space<vmem>>, vector<1x4x16x128xbf16>,
    %cst_35 = arith.constant dense<0.000000e+00> : vector<128xf32>
    %88 = vector.multi_reduction <add>, %82, %cst_35 [0] : vector<64x128xf32> to vector<128xf32>
    %89 = vector.shape_cast %88 : vector<128xf32> to vector<1x128xf32>
    %90 = arith.mulf %82, %82 : vector<64x128xf32>
    %cst_36 = arith.constant dense<0.000000e+00> : vector<128xf32>
    %91 = vector.multi_reduction <add>, %90, %cst_36 [0] : vector<64x128xf32> to vector<128xf32>
    %92 = vector.shape_cast %91 : vector<128xf32> to vector<1x128xf32>
    %93 = tpu.concatenate %89, %92 in 0 : vector<1x128xf32>, vector<1x128xf32> -> vector<2x128xf32>
    %c0_37 = arith.constant 0 : index
    %c0_38 = arith.constant 0 : index
    %c0_39 = arith.constant 0 : index
    %c0_40 = arith.constant 0 : index
    %94 = vector.load %arg7[%c0_37, %c0_38, %c0_39, %c0_40] : memref<1x1x2x128xf32, #tpu.memory_space<vmem>>, vector<1x1x2x128xf32>
    %95 = vector.shape_cast %94 : vector<1x1x2x128xf32> to vector<2x128xf32>
    %96 = vector.shape_cast %93 : vector<2x128xf32> to vector<1x1x2x128xf32>
    tpu.vector_store %arg7[%c0_37, %c0_38, %c0_39, %c0_40], %96 {strides = array<i32>} : memref<1x1x2x128xf32, #tpu.memory_space<vmem>>, vector<1x1x2x128xf32>,
    return
  }
  func.func @transform_0(%arg0: i32, %arg1: i32) -> (i32, i32, i32, i32) {
    %c0_i32 = arith.constant 0 : i32
    %c0_i32_0 = arith.constant 0 : i32
    %c0_i32_1 = arith.constant 0 : i32
    %c0_i32_2 = arith.constant 0 : i32
    return %arg0, %c0_i32, %c0_i32_0, %c0_i32_1 : i32, i32, i32, i32
  }
  func.func @transform_1(%arg0: i32, %arg1: i32) -> (i32, i32) {
    %c0_i32 = arith.constant 0 : i32
    %c0_i32_0 = arith.constant 0 : i32
    %c0_i32_1 = arith.constant 0 : i32
    return %c0_i32, %c0_i32_0 : i32, i32
  }
  func.func @transform_2(%arg0: i32, %arg1: i32) -> (i32, i32) {
    %c0_i32 = arith.constant 0 : i32
    %c0_i32_0 = arith.constant 0 : i32
    %c0_i32_1 = arith.constant 0 : i32
    return %c0_i32, %c0_i32_0 : i32, i32
  }
  func.func @transform_3(%arg0: i32, %arg1: i32) -> (i32, i32, i32) {
    %c0_i32 = arith.constant 0 : i32
    %c0_i32_0 = arith.constant 0 : i32
    %c0_i32_1 = arith.constant 0 : i32
    %c0_i32_2 = arith.constant 0 : i32
    return %c0_i32, %c0_i32_0, %c0_i32_1 : i32, i32, i32
  }
  func.func @transform_4(%arg0: i32, %arg1: i32) -> (i32, i32, i32, i32) {
    %c0_i32 = arith.constant 0 : i32
    %c0_i32_0 = arith.constant 0 : i32
    %c0_i32_1 = arith.constant 0 : i32
    return %arg0, %arg1, %c0_i32, %c0_i32_0 : i32, i32, i32, i32
  }
  func.func @transform_5(%arg0: i32, %arg1: i32) -> (i32, i32, i32, i32) {
    %c0_i32 = arith.constant 0 : i32
    %c0_i32_0 = arith.constant 0 : i32
    %c0_i32_1 = arith.constant 0 : i32
    return %arg0, %arg1, %c0_i32, %c0_i32_0 : i32, i32, i32, i32
  }
}

</mosaic_0001>

<llo_original>
// kernel: residual_blk_forward.5
$region0: #{residual_blk_forward.5}
  #allocation0 [shape = 'u32[]', space=smem, size = 0x4, offset = 0x4, fixed_abs, tag = 'smem constant byte address 0x4 - core index']
  #allocation1 [shape = 'u32[144,128]{1,0:T(1,128)}', space=vmem, size = 0x12000, scoped, tag = 'internal scratch']
  %s0 = inlined_call_operand.vmem [shape: bf16[2,16,16,128], index: 0, kind: input, shape index: {}]
  %s1 = inlined_call_operand.vmem [shape: f32[1,128], index: 1, kind: input, shape index: {}]
  %s2 = inlined_call_operand.vmem [shape: f32[1,128], index: 2, kind: input, shape index: {}]
  %s3 = inlined_call_operand.vmem [shape: f32[2,16,16,128], index: 3, kind: input, shape index: {}, may-alias: {3,4}]
  %s4 = inlined_call_operand.vmem [shape: f32[2,16,16,128], index: 4, kind: output, shape index: {0}, may-alias: {3,4}]
  %s5 = inlined_call_operand.vmem [shape: f32[2,16,16,128], index: 5, kind: output, shape index: {1}]
  %6 = xla_tuple %s4, %s5
  %s7 = sld [smem:[#allocation0]]
  $region57: #{residual_blk_forward.5} parent=0
    _
  %s9 = ssub.s32 1, %s7
  %s10 = scalar_select 0, %s9, %s7
  loop: start=0, step=1, limit=10
  $region2: #{residual_blk_forward.5} parent=0 // loop_pre_header
    _
  $region3: #{residual_blk_forward.5} parent=0 // loop_header
    %s12 = sphi 0, %s16
    %p13 = scmp.ge.s32.totalorder %s12, 10
    %s19 = sphi 0, %s31
    %s20 = sphi 0, %s27
    %s21 = sphi 0, %s19
    %s22 = sphi 0, %s20
    %s23 = sphi 0, %s21
    %s24 = sphi 0, %s22
    %s36 = sphi 0, %s38
    %s39 = sphi 0, %s36
    %s40 = sphi 0, %s39
    %s56 = sphi 0, %s40
    %s60 = sphi 0, %s60
    %s62 = sphi 0, %s60
    %s63 = sphi 0, %s62
    %s77 = sphi 0, %s63
    %s81 = sphi 0, %s81
    %s83 = sphi 0, %s81
    %s84 = sphi 0, %s83
    %s98 = sphi 0, %s84
    %s106 = sphi 0, %s108
    %s109 = sphi 0, %s106
    %s110 = sphi 0, %s109
    %s126 = sphi 0, %s110
    %s134 = sphi 0, %s136
    %s137 = sphi 0, %s134
    %s138 = sphi 0, %s137
    %s154 = sphi 0, %s138
    %s162 = sphi 0, %s164
    %s165 = sphi 0, %s162
    %s166 = sphi 0, %s165
    %s182 = sphi 0, %s166
  $region4: #{residual_blk_forward.5} parent=0 // loop_header_branch
    %15 = sbr.rel (%p13) target = $region8
  $region5: #{residual_blk_forward.5} parent=0 // loop_body
    %s17 = ssub.s32 %s12, 1
    %s18 = ssub.s32 %s12, 2
    %s25 = sadd.s32 1, %s20
    %p26 = scmp.ge.s32.totalorder %s25, 4
    %s27 = scalar_select %p26, 0, %s25
    %s28 = sadd.s32 1, %s19
    %s29 = scalar_select %p26, %s28, %s19
    %p30 = scmp.ge.s32.totalorder %s29, 2
    %s31 = scalar_select %p30, 0, %s29
    %s32 = ssub.s32 %s19, %s31
    %s33 = ssub.s32 %s20, %s27
    %s34 = sor.u32 %s32, %s33
    %p35 = scmp.eq.s32.totalorder %s34, 0
    %s37 = sadd.s32 %s36, 1
    %s38 = scalar_select %p35, %s36, %s37
    %p41 = pneg %p35
    %p42 = scmp.eq.s32.totalorder %s12, 7
    %p43 = por %p41, %p42
    %p44 = scmp.ne.s32.totalorder %s36, %s39
    %p45 = scmp.eq.s32.totalorder %s12, 0
    %p46 = por %p44, %p45
    %p47 = scmp.ne.s32.totalorder %s36, %s39
    %p48 = scmp.eq.s32.totalorder %s17, 7
    %p49 = por %p47, %p48
    %p50 = scmp.ne.s32.totalorder %s39, %s40
    %p51 = scmp.eq.s32.totalorder %s17, 0
    %p52 = por %p50, %p51
    %p53 = scmp.ne.s32.totalorder %s39, %s40
    %p54 = scmp.eq.s32.totalorder %s18, 7
    %p55 = por %p53, %p54
    %p57 = scmp.ne.s32.totalorder %s40, %s56
    %p58 = scmp.eq.s32.totalorder %s18, 0
    %p59 = por %p57, %p58
    %s61 = sadd.s32 %s60, 1
    %p64 = scmp.eq.s32.totalorder %s12, 7
    %p65 = scmp.ne.s32.totalorder %s60, %s62
    %p66 = scmp.eq.s32.totalorder %s12, 0
    %p67 = por %p65, %p66
    %p68 = scmp.ne.s32.totalorder %s60, %s62
    %p69 = scmp.eq.s32.totalorder %s17, 7
    %p70 = por %p68, %p69
    %p71 = scmp.ne.s32.totalorder %s62, %s63
    %p72 = scmp.eq.s32.totalorder %s17, 0
    %p73 = por %p71, %p72
    %p74 = scmp.ne.s32.totalorder %s62, %s63
    %p75 = scmp.eq.s32.totalorder %s18, 7
    %p76 = por %p74, %p75
    %p78 = scmp.ne.s32.totalorder %s63, %s77
    %p79 = scmp.eq.s32.totalorder %s18, 0
    %p80 = por %p78, %p79
    %s82 = sadd.s32 %s81, 1
    %p85 = scmp.eq.s32.totalorder %s12, 7
    %p86 = scmp.ne.s32.totalorder %s81, %s83
    %p87 = scmp.eq.s32.totalorder %s12, 0
    %p88 = por %p86, %p87
    %p89 = scmp.ne.s32.totalorder %s81, %s83
    %p90 = scmp.eq.s32.totalorder %s17, 7
    %p91 = por %p89, %p90
    %p92 = scmp.ne.s32.totalorder %s83, %s84
    %p93 = scmp.eq.s32.totalorder %s17, 0
    %p94 = por %p92, %p93
    %p95 = scmp.ne.s32.totalorder %s83, %s84
    %p96 = scmp.eq.s32.totalorder %s18, 7
    %p97 = por %p95, %p96
    %p99 = scmp.ne.s32.totalorder %s84, %s98
    %p100 = scmp.eq.s32.totalorder %s18, 0
    %p101 = por %p99, %p100
    %s102 = ssub.s32 %s19, %s31
    %s103 = ssub.s32 %s20, %s27
    %s104 = sor.u32 %s102, %s103
    %p105 = scmp.eq.s32.totalorder %s104, 0
    %s107 = sadd.s32 %s106, 1
    %s108 = scalar_select %p105, %s106, %s107
    %p111 = pneg %p105
    %p112 = scmp.eq.s32.totalorder %s12, 7
    %p113 = por %p111, %p112
    %p114 = scmp.ne.s32.totalorder %s106, %s109
    %p115 = scmp.eq.s32.totalorder %s12, 0
    %p116 = por %p114, %p115
    %p117 = scmp.ne.s32.totalorder %s106, %s109
    %p118 = scmp.eq.s32.totalorder %s17, 7
    %p119 = por %p117, %p118
    %p120 = scmp.ne.s32.totalorder %s109, %s110
    %p121 = scmp.eq.s32.totalorder %s17, 0
    %p122 = por %p120, %p121
    %p123 = scmp.ne.s32.totalorder %s109, %s110
    %p124 = scmp.eq.s32.totalorder %s18, 7
    %p125 = por %p123, %p124
    %p127 = scmp.ne.s32.totalorder %s110, %s126
    %p128 = scmp.eq.s32.totalorder %s18, 0
    %p129 = por %p127, %p128
    %s130 = ssub.s32 %s19, %s31
    %s131 = ssub.s32 %s20, %s27
    %s132 = sor.u32 %s130, %s131
    %p133 = scmp.eq.s32.totalorder %s132, 0
    %s135 = sadd.s32 %s134, 1
    %s136 = scalar_select %p133, %s134, %s135
    %p139 = pneg %p133
    %p140 = scmp.eq.s32.totalorder %s12, 7
    %p141 = por %p139, %p140
    %p142 = scmp.ne.s32.totalorder %s134, %s137
    %p143 = scmp.eq.s32.totalorder %s12, 0
    %p144 = por %p142, %p143
    %p145 = scmp.ne.s32.totalorder %s134, %s137
    %p146 = scmp.eq.s32.totalorder %s17, 7
    %p147 = por %p145, %p146
    %p148 = scmp.ne.s32.totalorder %s137, %s138
    %p149 = scmp.eq.s32.totalorder %s17, 0
    %p150 = por %p148, %p149
    %p151 = scmp.ne.s32.totalorder %s137, %s138
    %p152 = scmp.eq.s32.totalorder %s18, 7
    %p153 = por %p151, %p152
    %p155 = scmp.ne.s32.totalorder %s138, %s154
    %p156 = scmp.eq.s32.totalorder %s18, 0
    %p157 = por %p155, %p156
    %s158 = ssub.s32 %s19, %s31
    %s159 = ssub.s32 %s20, %s27
    %s160 = sor.u32 %s158, %s159
    %p161 = scmp.eq.s32.totalorder %s160, 0
    %s163 = sadd.s32 %s162, 1
    %s164 = scalar_select %p161, %s162, %s163
    %p167 = pneg %p161
    %p168 = scmp.eq.s32.totalorder %s12, 7
    %p169 = por %p167, %p168
    %p170 = scmp.ne.s32.totalorder %s162, %s165
    %p171 = scmp.eq.s32.totalorder %s12, 0
    %p172 = por %p170, %p171
    %p173 = scmp.ne.s32.totalorder %s162, %s165
    %p174 = scmp.eq.s32.totalorder %s17, 7
    %p175 = por %p173, %p174
    %p176 = scmp.ne.s32.totalorder %s165, %s166
    %p177 = scmp.eq.s32.totalorder %s17, 0
    %p178 = por %p176, %p177
    %p179 = scmp.ne.s32.totalorder %s165, %s166
    %p180 = scmp.eq.s32.totalorder %s18, 7
    %p181 = por %p179, %p180
    %p183 = scmp.ne.s32.totalorder %s166, %s182
    %p184 = scmp.eq.s32.totalorder %s18, 0
    %p185 = por %p183, %p184
    %p186 = scmp.le.s32.totalorder 1, %s12
    %p187 = scmp.lt.s32.totalorder %s12, 9
    %p188 = pnand %p186, %p187
    %p189 = pneg %p188
    // Predicated region
    $region9: #{residual_blk_forward.5} parent=5 // pred_check
      _
    $region10: #{residual_blk_forward.5} parent=5 // pred_check_branch
      %191 = sbr.rel (%p188) target = $region12
    $region11: #{residual_blk_forward.5} parent=5 // pred_region
      %s192 = ssub.s32 %s12, 1
      // Predicated region
      $region13: #{residual_blk_forward.5} parent=11 // pred_check
        %p193 = pneg %p73
      $region14: #{residual_blk_forward.5} parent=11 // pred_check_branch
        %195 = sbr.rel (%p193) target = $region16
      $region15: #{residual_blk_forward.5} parent=11 // pred_region
        _
      $region16: #{residual_blk_forward.5} parent=11 // pred_fallthru
        _
      // Predicated region
      $region17: #{residual_blk_forward.5} parent=11 // pred_check
        %p196 = pneg %p94
      $region18: #{residual_blk_forward.5} parent=11 // pred_check_branch
        %198 = sbr.rel (%p196) target = $region20
      $region19: #{residual_blk_forward.5} parent=11 // pred_region
        _
      $region20: #{residual_blk_forward.5} parent=11 // pred_fallthru
        _
    $region12: #{residual_blk_forward.5} parent=5 // pred_fallthru
      _
    %p199 = scmp.lt.s32.totalorder %s12, 8
    // Predicated region
    $region21: #{residual_blk_forward.5} parent=5 // pred_check
      %p200 = pneg %p199
    $region22: #{residual_blk_forward.5} parent=5 // pred_check_branch
      %202 = sbr.rel (%p200) target = $region24
    $region23: #{residual_blk_forward.5} parent=5 // pred_region
      // Predicated region
      $region25: #{residual_blk_forward.5} parent=23 // pred_check
        %p203 = pneg %p46
      $region26: #{residual_blk_forward.5} parent=23 // pred_check_branch
        %205 = sbr.rel (%p203) target = $region28
      $region27: #{residual_blk_forward.5} parent=23 // pred_region
        %s206 = smul.u32 4, %s20
        %p207 = scmp.lt.s32.totalorder %s19, 1
        %s208 = scalar_select %p207, %s19, 1
        %p209 = scmp.lt.s32.totalorder %s206, 15
        %s210 = scalar_select %p209, %s206, 15
        %s211 = smul.addr %s210, 2
        %s212 = smul.addr %s208, 32
        %s213 = sadd.s32 %s211, %s212
        %s214 = smul.addr %s213, 4
        %s215 = scalar_lea.vmem %s0, %s214
        %s216 = smul.u32 4, %s20
      $region28: #{residual_blk_forward.5} parent=23 // pred_fallthru
        _
      // Predicated region
      $region29: #{residual_blk_forward.5} parent=23 // pred_check
        %p217 = pneg %p116
      $region30: #{residual_blk_forward.5} parent=23 // pred_check_branch
        %219 = sbr.rel (%p217) target = $region32
      $region31: #{residual_blk_forward.5} parent=23 // pred_region
        %s220 = smul.u32 4, %s20
        %p221 = scmp.lt.s32.totalorder %s19, 1
        %s222 = scalar_select %p221, %s19, 1
        %p223 = scmp.lt.s32.totalorder %s220, 15
        %s224 = scalar_select %p223, %s220, 15
        %s225 = smul.addr %s224, 2
        %s226 = smul.addr %s222, 32
        %s227 = sadd.s32 %s225, %s226
        %s228 = smul.addr %s227, 8
        %s229 = scalar_lea.vmem %s3, %s228
        %s230 = smul.u32 4, %s20
      $region32: #{residual_blk_forward.5} parent=23 // pred_fallthru
        _
    $region24: #{residual_blk_forward.5} parent=5 // pred_fallthru
      _
    %p231 = scmp.le.s32.totalorder 1, %s12
    %p232 = scmp.lt.s32.totalorder %s12, 9
    %p233 = pnand %p231, %p232
    %p234 = pneg %p233
    // Predicated region
    $region33: #{residual_blk_forward.5} parent=5 // pred_check
      _
    $region34: #{residual_blk_forward.5} parent=5 // pred_check_branch
      %236 = sbr.rel (%p233) target = $region36
    $region35: #{residual_blk_forward.5} parent=5 // pred_region
      %s237 = ssub.s32 %s12, 1
      %s238 = smul.u32 4, %s22
      %p239 = scmp.lt.s32.totalorder %s21, 1
      %s240 = scalar_select %p239, %s21, 1
      %p241 = scmp.lt.s32.totalorder %s238, 15
      %s242 = scalar_select %p241, %s238, 15
      %s243 = smul.addr %s242, 2
      %s244 = smul.addr %s240, 32
      %s245 = sadd.s32 %s243, %s244
      %s246 = smul.addr %s245, 4
      %s247 = scalar_lea.vmem %s0, %s246
      %p248 = pneg %p52
      %p249 = pneg %p49
      %p250 = pneg %p73
      %p251 = pneg %p70
      %p252 = pneg %p94
      %p253 = pneg %p91
      %s254 = smul.u32 4, %s22
      %p255 = scmp.lt.s32.totalorder %s21, 1
      %s256 = scalar_select %p255, %s21, 1
      %p257 = scmp.lt.s32.totalorder %s254, 15
      %s258 = scalar_select %p257, %s254, 15
      %s259 = smul.addr %s258, 2
      %s260 = smul.addr %s256, 32
      %s261 = sadd.s32 %s259, %s260
      %s262 = smul.addr %s261, 8
      %s263 = scalar_lea.vmem %s3, %s262
      %p264 = pneg %p122
      %p265 = pneg %p119
      %p266 = pneg %p150
      %p267 = pneg %p147
      %s268 = smul.u32 4, %s22
      %p269 = scmp.lt.s32.totalorder %s21, 1
      %s270 = scalar_select %p269, %s21, 1
      %p271 = scmp.lt.s32.totalorder %s268, 15
      %s272 = scalar_select %p271, %s268, 15
      %s273 = smul.addr %s272, 2
      %s274 = smul.addr %s270, 32
      %s275 = sadd.s32 %s273, %s274
      %s276 = smul.addr %s275, 8
      %s277 = scalar_lea.vmem %s4, %s276
      %p278 = pneg %p178
      %p279 = pneg %p175
      %s280 = smul.u32 4, %s22
      %p281 = scmp.lt.s32.totalorder %s21, 1
      %s282 = scalar_select %p281, %s21, 1
      %p283 = scmp.lt.s32.totalorder %s280, 15
      %s284 = scalar_select %p283, %s280, 15
      %s285 = smul.addr %s284, 2
      %s286 = smul.addr %s282, 32
      %s287 = sadd.s32 %s285, %s286
      %s288 = smul.addr %s287, 8
      %s289 = scalar_lea.vmem %s5, %s288
      %s290 = smul.u32 4, %s22
      %p291 = scmp.lt.s32.totalorder %s21, 1
      %s292 = scalar_select %p291, %s21, 1
      %p293 = scmp.lt.s32.totalorder %s290, 15
      %s294 = scalar_select %p293, %s290, 15
      %s295 = smul.addr %s294, 2
      %s296 = smul.addr %s292, 32
      %s297 = sadd.s32 %s295, %s296
      %s298 = smul.addr %s297, 4
      %s299 = scalar_lea.vmem %s0, %s298
      %s300 = smul.u32 4, %s22
      %s301 = smul.u32 4, %s22
      %p302 = scmp.lt.s32.totalorder %s21, 1
      %s303 = scalar_select %p302, %s21, 1
      %p304 = scmp.lt.s32.totalorder %s301, 15
      %s305 = scalar_select %p304, %s301, 15
      %s306 = smul.addr %s305, 2
      %s307 = smul.addr %s303, 32
      %s308 = sadd.s32 %s306, %s307
      %s309 = smul.addr %s308, 8
      %s310 = scalar_lea.vmem %s3, %s309
      %s311 = smul.u32 4, %s22
      %s312 = smul.u32 4, %s22
      %p313 = scmp.lt.s32.totalorder %s21, 1
      %s314 = scalar_select %p313, %s21, 1
      %p315 = scmp.lt.s32.totalorder %s312, 15
      %s316 = scalar_select %p315, %s312, 15
      %s317 = smul.addr %s316, 2
      %s318 = smul.addr %s314, 32
      %s319 = sadd.s32 %s317, %s318
      %s320 = smul.addr %s319, 8
      %s321 = scalar_lea.vmem %s4, %s320
      %s322 = smul.u32 4, %s22
      %s323 = smul.u32 4, %s22
      %p324 = scmp.lt.s32.totalorder %s21, 1
      %s325 = scalar_select %p324, %s21, 1
      %p326 = scmp.lt.s32.totalorder %s323, 15
      %s327 = scalar_select %p326, %s323, 15
      %s328 = smul.addr %s327, 2
      %s329 = smul.addr %s325, 32
      %s330 = sadd.s32 %s328, %s329
      %s331 = smul.addr %s330, 8
      %s332 = scalar_lea.vmem %s5, %s331
      %s333 = smul.u32 4, %s22
      %v334 = vld [vmem:[%s299] sm:$0xf]
      %v335 = vld [vmem:[%s299 + $0x4] sm:$0xf]
      %v336 = vld [vmem:[%s299 + $0x8] sm:$0xf]
      %v337 = vld [vmem:[%s299 + $0xc] sm:$0xf]
      %v338 = vld [vmem:[%s299 + $0x10] sm:$0xf]
      %v339 = vld [vmem:[%s299 + $0x14] sm:$0xf]
      %v340 = vld [vmem:[%s299 + $0x18] sm:$0xf]
      %v341 = vld [vmem:[%s299 + $0x1c] sm:$0xf]
      %v342 = vunpack.c.l.bf16 %v334
      %v343 = vunpack.c.l.bf16 %v335
      %v344 = vunpack.c.l.bf16 %v336
      %v345 = vunpack.c.l.bf16 %v337
      %v346 = vunpack.c.l.bf16 %v338
      %v347 = vunpack.c.l.bf16 %v339
      %v348 = vunpack.c.l.bf16 %v340
      %v349 = vunpack.c.l.bf16 %v341
      %v350 = vld [vmem:[%s310] sm:$0xff]
      %v351 = vld [vmem:[%s310 + $0x8] sm:$0xff]
      %v352 = vld [vmem:[%s310 + $0x10] sm:$0xff]
      %v353 = vld [vmem:[%s310 + $0x18] sm:$0xff]
      %v354 = vld [vmem:[%s310 + $0x20] sm:$0xff]
      %v355 = vld [vmem:[%s310 + $0x28] sm:$0xff]
      %v356 = vld [vmem:[%s310 + $0x30] sm:$0xff]
      %v357 = vld [vmem:[%s310 + $0x38] sm:$0xff]
      %v358 = vld [vmem:[%s1] sm:$0x1]
      %v360 = vlaneseq
      %v361 = vshrl.u32 %v360, 7
      %v362 = vsub.s32 0, %v361
      %v363 = vrot.slane %v358, %v362
      %v365 = vmul.f32 %v342, %v363
      %v366 = vmul.f32 %v343, %v363
      %v367 = vmul.f32 %v344, %v363
      %v368 = vmul.f32 %v345, %v363
      %v369 = vmul.f32 %v346, %v363
      %v370 = vmul.f32 %v347, %v363
      %v371 = vmul.f32 %v348, %v363
      %v372 = vmul.f32 %v349, %v363
      %v373 = vld [vmem:[%s2] sm:$0x1]
      %v375 = vlaneseq
      %v376 = vshrl.u32 %v375, 7
      %v377 = vsub.s32 0, %v376
      %v378 = vrot.slane %v373, %v377
      %v380 = vadd.f32 %v365, %v378
      %v381 = vadd.f32 %v366, %v378
      %v382 = vadd.f32 %v367, %v378
      %v383 = vadd.f32 %v368, %v378
      %v384 = vadd.f32 %v369, %v378
      %v385 = vadd.f32 %v370, %v378
      %v386 = vadd.f32 %v371, %v378
      %v387 = vadd.f32 %v372, %v378
      %v388 = vadd.f32 %v380, %v350
      %v389 = vadd.f32 %v381, %v351
      %v390 = vadd.f32 %v382, %v352
      %v391 = vadd.f32 %v383, %v353
      %v392 = vadd.f32 %v384, %v354
      %v393 = vadd.f32 %v385, %v355
      %v394 = vadd.f32 %v386, %v356
      %v395 = vadd.f32 %v387, %v357
      %396 = vst [vmem:[%s332] sm:$0xff] %v388
      %397 = vst [vmem:[%s332 + $0x8] sm:$0xff] %v389
      %398 = vst [vmem:[%s332 + $0x10] sm:$0xff] %v390
      %399 = vst [vmem:[%s332 + $0x18] sm:$0xff] %v391
      %400 = vst [vmem:[%s332 + $0x20] sm:$0xff] %v392
      %401 = vst [vmem:[%s332 + $0x28] sm:$0xff] %v393
      %402 = vst [vmem:[%s332 + $0x30] sm:$0xff] %v394
      %403 = vst [vmem:[%s332 + $0x38] sm:$0xff] %v395
      %v404 = vmax.f32 %v350, 0.0
      %v405 = vmax.f32 %v351, 0.0
      %v406 = vmax.f32 %v352, 0.0
      %v407 = vmax.f32 %v353, 0.0
      %v408 = vmax.f32 %v354, 0.0
      %v409 = vmax.f32 %v355, 0.0
      %v410 = vmax.f32 %v356, 0.0
      %v411 = vmax.f32 %v357, 0.0
      %412 = vst [vmem:[%s321] sm:$0xff] %v404
      %413 = vst [vmem:[%s321 + $0x8] sm:$0xff] %v405
      %414 = vst [vmem:[%s321 + $0x10] sm:$0xff] %v406
      %415 = vst [vmem:[%s321 + $0x18] sm:$0xff] %v407
      %416 = vst [vmem:[%s321 + $0x20] sm:$0xff] %v408
      %417 = vst [vmem:[%s321 + $0x28] sm:$0xff] %v409
      %418 = vst [vmem:[%s321 + $0x30] sm:$0xff] %v410
      %419 = vst [vmem:[%s321 + $0x38] sm:$0xff] %v411
      %s420 = smul.u32 4, %s22
      %p421 = scmp.lt.s32.totalorder %s21, 1
      %s422 = scalar_select %p421, %s21, 1
      %p423 = scmp.lt.s32.totalorder %s420, 15
      %s424 = scalar_select %p423, %s420, 15
      %s425 = smul.addr %s424, 2
      %s426 = smul.addr %s422, 32
      %s427 = sadd.s32 %s425, %s426
      %s428 = smul.addr %s427, 8
      %s429 = scalar_lea.vmem %s4, %s428
      %s430 = smul.u32 4, %s22
      %p431 = scmp.lt.s32.totalorder %s21, 1
      %s432 = scalar_select %p431, %s21, 1
      %p433 = scmp.lt.s32.totalorder %s430, 15
      %s434 = scalar_select %p433, %s430, 15
      %s435 = smul.addr %s434, 2
      %s436 = smul.addr %s432, 32
      %s437 = sadd.s32 %s435, %s436
      %s438 = smul.addr %s437, 8
      %s439 = scalar_lea.vmem %s5, %s438
      // Predicated region
      $region37: #{residual_blk_forward.5} parent=35 // pred_check
        %p440 = pneg %p147
      $region38: #{residual_blk_forward.5} parent=35 // pred_check_branch
        %442 = sbr.rel (%p440) target = $region40
      $region39: #{residual_blk_forward.5} parent=35 // pred_region
        %s443 = smul.u32 4, %s22
      $region40: #{residual_blk_forward.5} parent=35 // pred_fallthru
        _
      // Predicated region
      $region41: #{residual_blk_forward.5} parent=35 // pred_check
        %p444 = pneg %p175
      $region42: #{residual_blk_forward.5} parent=35 // pred_check_branch
        %446 = sbr.rel (%p444) target = $region44
      $region43: #{residual_blk_forward.5} parent=35 // pred_region
        %s447 = smul.u32 4, %s22
      $region44: #{residual_blk_forward.5} parent=35 // pred_fallthru
        _
    $region36: #{residual_blk_forward.5} parent=5 // pred_fallthru
      _
    %p448 = scmp.le.s32.totalorder 2, %s12
    // Predicated region
    $region45: #{residual_blk_forward.5} parent=5 // pred_check
      %p449 = pneg %p448
    $region46: #{residual_blk_forward.5} parent=5 // pred_check_branch
      %451 = sbr.rel (%p449) target = $region48
    $region47: #{residual_blk_forward.5} parent=5 // pred_region
      %s452 = ssub.s32 %s12, 2
      // Predicated region
      $region49: #{residual_blk_forward.5} parent=47 // pred_check
        %p453 = pneg %p153
      $region50: #{residual_blk_forward.5} parent=47 // pred_check_branch
        %455 = sbr.rel (%p453) target = $region52
      $region51: #{residual_blk_forward.5} parent=47 // pred_region
        %s456 = smul.u32 4, %s24
        %p457 = scmp.lt.s32.totalorder %s23, 1
        %s458 = scalar_select %p457, %s23, 1
        %p459 = scmp.lt.s32.totalorder %s456, 15
        %s460 = scalar_select %p459, %s456, 15
        %s461 = smul.addr %s460, 2
        %s462 = smul.addr %s458, 32
        %s463 = sadd.s32 %s461, %s462
        %s464 = smul.addr %s463, 8
        %s465 = scalar_lea.vmem %s4, %s464
      $region52: #{residual_blk_forward.5} parent=47 // pred_fallthru
        _
      // Predicated region
      $region53: #{residual_blk_forward.5} parent=47 // pred_check
        %p466 = pneg %p181
      $region54: #{residual_blk_forward.5} parent=47 // pred_check_branch
        %468 = sbr.rel (%p466) target = $region56
      $region55: #{residual_blk_forward.5} parent=47 // pred_region
        %s469 = smul.u32 4, %s24
        %p470 = scmp.lt.s32.totalorder %s23, 1
        %s471 = scalar_select %p470, %s23, 1
        %p472 = scmp.lt.s32.totalorder %s469, 15
        %s473 = scalar_select %p472, %s469, 15
        %s474 = smul.addr %s473, 2
        %s475 = smul.addr %s471, 32
        %s476 = sadd.s32 %s474, %s475
        %s477 = smul.addr %s476, 8
        %s478 = scalar_lea.vmem %s5, %s477
      $region56: #{residual_blk_forward.5} parent=47 // pred_fallthru
        _
    $region48: #{residual_blk_forward.5} parent=5 // pred_fallthru
      _
  $region6: #{residual_blk_forward.5} parent=0 // loop_footer
    %s16 = sadd.s32 1, %s12
  $region7: #{residual_blk_forward.5} parent=0 // loop_footer_branch
    %11 = sbr.rel target = $region3
  $region8: #{residual_blk_forward.5} parent=0 // loop_exit
    _

// kernel: residual_blk_forward.3
$region0: #{residual_blk_forward.3}
  #allocation0 [shape = 'u32[]', space=smem, size = 0x4, offset = 0x4, fixed_abs, tag = 'smem constant byte address 0x4 - core index']
  #allocation1 [shape = 'u32[144,128]{1,0:T(1,128)}', space=vmem, size = 0x12000, scoped, tag = 'internal scratch']
  %s0 = inlined_call_operand.vmem [shape: f32[2,18,18,128], index: 0, kind: input, shape index: {}]
  %s1 = inlined_call_operand.vmem [shape: bf16[3,384,128], index: 1, kind: input, shape index: {}]
  %s2 = inlined_call_operand.vmem [shape: bf16[2,16,16,128], index: 2, kind: output, shape index: {0}]
  %s3 = inlined_call_operand.vmem [shape: f32[2,4,2,128], index: 3, kind: output, shape index: {1}]
  %4 = xla_tuple %s2, %s3
  %s5 = sld [smem:[#allocation0]]
  $region49: #{residual_blk_forward.3} parent=0
    _
  %s7 = ssub.s32 1, %s5
  %s8 = scalar_select 0, %s7, %s5
  loop: start=0, step=1, limit=10
  $region2: #{residual_blk_forward.3} parent=0 // loop_pre_header
    _
  $region3: #{residual_blk_forward.3} parent=0 // loop_header
    %s10 = sphi 0, %s14
    %p11 = scmp.ge.s32.totalorder %s10, 10
    %s17 = sphi 0, %s29
    %s18 = sphi 0, %s25
    %s19 = sphi 0, %s17
    %s20 = sphi 0, %s18
    %s21 = sphi 0, %s19
    %s22 = sphi 0, %s20
    %s32 = sphi 0, %s34
    %s35 = sphi 0, %s32
    %s36 = sphi 0, %s35
    %s52 = sphi 0, %s36
    %s56 = sphi 0, %s56
    %s58 = sphi 0, %s56
    %s59 = sphi 0, %s58
    %s73 = sphi 0, %s59
    %s81 = sphi 0, %s83
    %s84 = sphi 0, %s81
    %s85 = sphi 0, %s84
    %s101 = sphi 0, %s85
    %s109 = sphi 0, %s111
    %s112 = sphi 0, %s109
    %s113 = sphi 0, %s112
    %s129 = sphi 0, %s113
  $region4: #{residual_blk_forward.3} parent=0 // loop_header_branch
    %13 = sbr.rel (%p11) target = $region8
  $region5: #{residual_blk_forward.3} parent=0 // loop_body
    %s15 = ssub.s32 %s10, 1
    %s16 = ssub.s32 %s10, 2
    %s23 = sadd.s32 1, %s18
    %p24 = scmp.ge.s32.totalorder %s23, 4
    %s25 = scalar_select %p24, 0, %s23
    %s26 = sadd.s32 1, %s17
    %s27 = scalar_select %p24, %s26, %s17
    %p28 = scmp.ge.s32.totalorder %s27, 2
    %s29 = scalar_select %p28, 0, %s27
    %s30 = ssub.s32 %s17, %s29
    %p31 = scmp.eq.s32.totalorder %s30, 0
    %s33 = sadd.s32 %s32, 1
    %s34 = scalar_select %p31, %s32, %s33
    %p37 = pneg %p31
    %p38 = scmp.eq.s32.totalorder %s10, 7
    %p39 = por %p37, %p38
    %p40 = scmp.ne.s32.totalorder %s32, %s35
    %p41 = scmp.eq.s32.totalorder %s10, 0
    %p42 = por %p40, %p41
    %p43 = scmp.ne.s32.totalorder %s32, %s35
    %p44 = scmp.eq.s32.totalorder %s15, 7
    %p45 = por %p43, %p44
    %p46 = scmp.ne.s32.totalorder %s35, %s36
    %p47 = scmp.eq.s32.totalorder %s15, 0
    %p48 = por %p46, %p47
    %p49 = scmp.ne.s32.totalorder %s35, %s36
    %p50 = scmp.eq.s32.totalorder %s16, 7
    %p51 = por %p49, %p50
    %p53 = scmp.ne.s32.totalorder %s36, %s52
    %p54 = scmp.eq.s32.totalorder %s16, 0
    %p55 = por %p53, %p54
    %s57 = sadd.s32 %s56, 1
    %p60 = scmp.eq.s32.totalorder %s10, 7
    %p61 = scmp.ne.s32.totalorder %s56, %s58
    %p62 = scmp.eq.s32.totalorder %s10, 0
    %p63 = por %p61, %p62
    %p64 = scmp.ne.s32.totalorder %s56, %s58
    %p65 = scmp.eq.s32.totalorder %s15, 7
    %p66 = por %p64, %p65
    %p67 = scmp.ne.s32.totalorder %s58, %s59
    %p68 = scmp.eq.s32.totalorder %s15, 0
    %p69 = por %p67, %p68
    %p70 = scmp.ne.s32.totalorder %s58, %s59
    %p71 = scmp.eq.s32.totalorder %s16, 7
    %p72 = por %p70, %p71
    %p74 = scmp.ne.s32.totalorder %s59, %s73
    %p75 = scmp.eq.s32.totalorder %s16, 0
    %p76 = por %p74, %p75
    %s77 = ssub.s32 %s17, %s29
    %s78 = ssub.s32 %s18, %s25
    %s79 = sor.u32 %s77, %s78
    %p80 = scmp.eq.s32.totalorder %s79, 0
    %s82 = sadd.s32 %s81, 1
    %s83 = scalar_select %p80, %s81, %s82
    %p86 = pneg %p80
    %p87 = scmp.eq.s32.totalorder %s10, 7
    %p88 = por %p86, %p87
    %p89 = scmp.ne.s32.totalorder %s81, %s84
    %p90 = scmp.eq.s32.totalorder %s10, 0
    %p91 = por %p89, %p90
    %p92 = scmp.ne.s32.totalorder %s81, %s84
    %p93 = scmp.eq.s32.totalorder %s15, 7
    %p94 = por %p92, %p93
    %p95 = scmp.ne.s32.totalorder %s84, %s85
    %p96 = scmp.eq.s32.totalorder %s15, 0
    %p97 = por %p95, %p96
    %p98 = scmp.ne.s32.totalorder %s84, %s85
    %p99 = scmp.eq.s32.totalorder %s16, 7
    %p100 = por %p98, %p99
    %p102 = scmp.ne.s32.totalorder %s85, %s101
    %p103 = scmp.eq.s32.totalorder %s16, 0
    %p104 = por %p102, %p103
    %s105 = ssub.s32 %s17, %s29
    %s106 = ssub.s32 %s18, %s25
    %s107 = sor.u32 %s105, %s106
    %p108 = scmp.eq.s32.totalorder %s107, 0
    %s110 = sadd.s32 %s109, 1
    %s111 = scalar_select %p108, %s109, %s110
    %p114 = pneg %p108
    %p115 = scmp.eq.s32.totalorder %s10, 7
    %p116 = por %p114, %p115
    %p117 = scmp.ne.s32.totalorder %s109, %s112
    %p118 = scmp.eq.s32.totalorder %s10, 0
    %p119 = por %p117, %p118
    %p120 = scmp.ne.s32.totalorder %s109, %s112
    %p121 = scmp.eq.s32.totalorder %s15, 7
    %p122 = por %p120, %p121
    %p123 = scmp.ne.s32.totalorder %s112, %s113
    %p124 = scmp.eq.s32.totalorder %s15, 0
    %p125 = por %p123, %p124
    %p126 = scmp.ne.s32.totalorder %s112, %s113
    %p127 = scmp.eq.s32.totalorder %s16, 7
    %p128 = por %p126, %p127
    %p130 = scmp.ne.s32.totalorder %s113, %s129
    %p131 = scmp.eq.s32.totalorder %s16, 0
    %p132 = por %p130, %p131
    %p133 = scmp.le.s32.totalorder 1, %s10
    %p134 = scmp.lt.s32.totalorder %s10, 9
    %p135 = pnand %p133, %p134
    %p136 = pneg %p135
    // Predicated region
    $region9: #{residual_blk_forward.3} parent=5 // pred_check
      _
    $region10: #{residual_blk_forward.3} parent=5 // pred_check_branch
      %138 = sbr.rel (%p135) target = $region12
    $region11: #{residual_blk_forward.3} parent=5 // pred_region
      %s139 = ssub.s32 %s10, 1
      // Predicated region
      $region13: #{residual_blk_forward.3} parent=11 // pred_check
        %p140 = pneg %p69
      $region14: #{residual_blk_forward.3} parent=11 // pred_check_branch
        %142 = sbr.rel (%p140) target = $region16
      $region15: #{residual_blk_forward.3} parent=11 // pred_region
        _
      $region16: #{residual_blk_forward.3} parent=11 // pred_fallthru
        _
    $region12: #{residual_blk_forward.3} parent=5 // pred_fallthru
      _
    %p143 = scmp.lt.s32.totalorder %s10, 8
    // Predicated region
    $region17: #{residual_blk_forward.3} parent=5 // pred_check
      %p144 = pneg %p143
    $region18: #{residual_blk_forward.3} parent=5 // pred_check_branch
      %146 = sbr.rel (%p144) target = $region20
    $region19: #{residual_blk_forward.3} parent=5 // pred_region
      // Predicated region
      $region21: #{residual_blk_forward.3} parent=19 // pred_check
        %p147 = pneg %p42
      $region22: #{residual_blk_forward.3} parent=19 // pred_check_branch
        %149 = sbr.rel (%p147) target = $region24
      $region23: #{residual_blk_forward.3} parent=19 // pred_region
        %p150 = scmp.lt.s32.totalorder %s17, 1
        %s151 = scalar_select %p150, %s17, 1
        %s152 = smul.addr %s151, 54
        %s153 = smul.addr %s152, 8
        %s154 = scalar_lea.vmem %s0, %s153
      $region24: #{residual_blk_forward.3} parent=19 // pred_fallthru
        _
    $region20: #{residual_blk_forward.3} parent=5 // pred_fallthru
      _
    %p155 = scmp.le.s32.totalorder 1, %s10
    %p156 = scmp.lt.s32.totalorder %s10, 9
    %p157 = pnand %p155, %p156
    %p158 = pneg %p157
    // Predicated region
    $region25: #{residual_blk_forward.3} parent=5 // pred_check
      _
    $region26: #{residual_blk_forward.3} parent=5 // pred_check_branch
      %160 = sbr.rel (%p157) target = $region28
    $region27: #{residual_blk_forward.3} parent=5 // pred_region
      %s161 = ssub.s32 %s10, 1
      %p162 = scmp.lt.s32.totalorder %s19, 1
      %s163 = scalar_select %p162, %s19, 1
      %s164 = smul.addr %s163, 54
      %s165 = smul.addr %s164, 8
      %s166 = scalar_lea.vmem %s0, %s165
      %p167 = pneg %p48
      %p168 = pneg %p45
      %p169 = pneg %p69
      %p170 = pneg %p66
      %p171 = pneg %p97
      %p172 = pneg %p94
      %s173 = smul.u32 4, %s20
      %p174 = scmp.lt.s32.totalorder %s19, 1
      %s175 = scalar_select %p174, %s19, 1
      %p176 = scmp.lt.s32.totalorder %s173, 15
      %s177 = scalar_select %p176, %s173, 15
      %s178 = smul.addr %s177, 2
      %s179 = smul.addr %s175, 32
      %s180 = sadd.s32 %s178, %s179
      %s181 = smul.addr %s180, 4
      %s182 = scalar_lea.vmem %s2, %s181
      %p183 = pneg %p125
      %p184 = pneg %p122
      %p185 = scmp.lt.s32.totalorder %s19, 1
      %s186 = scalar_select %p185, %s19, 1
      %p187 = scmp.lt.s32.totalorder %s20, 3
      %s188 = scalar_select %p187, %s20, 3
      %s189 = smul.addr %s186, 4
      %s190 = sadd.s32 %s188, %s189
      %s191 = smul.addr %s190, 2
      %s192 = scalar_lea.vmem %s3, %s191
      %p193 = scmp.lt.s32.totalorder %s19, 1
      %s194 = scalar_select %p193, %s19, 1
      %s195 = smul.addr %s194, 54
      %s196 = smul.addr %s195, 8
      %s197 = scalar_lea.vmem %s0, %s196
      %s198 = smul.u32 4, %s20
      %p199 = scmp.lt.s32.totalorder %s19, 1
      %s200 = scalar_select %p199, %s19, 1
      %p201 = scmp.lt.s32.totalorder %s198, 15
      %s202 = scalar_select %p201, %s198, 15
      %s203 = smul.addr %s202, 2
      %s204 = smul.addr %s200, 32
      %s205 = sadd.s32 %s203, %s204
      %s206 = smul.addr %s205, 4
      %s207 = scalar_lea.vmem %s2, %s206
      %s208 = smul.u32 4, %s20
      %p209 = scmp.lt.s32.totalorder %s19, 1
      %s210 = scalar_select %p209, %s19, 1
      %p211 = scmp.lt.s32.totalorder %s20, 3
      %s212 = scalar_select %p211, %s20, 3
      %s213 = smul.addr %s210, 4
      %s214 = sadd.s32 %s212, %s213
      %s215 = smul.addr %s214, 2
      %s216 = scalar_lea.vmem %s3, %s215
      %s218 = smul.u32 %s20, 4
      %s219 = smul.u32 %s218, 24
      %s220 = scalar_lea.vmem %s197, %s219
      %v221 = vld [vmem:[%s220] sm:$0xff]
      %v222 = vld [vmem:[%s220 + $0x8] sm:$0xff]
      %v223 = vld [vmem:[%s220 + $0x10] sm:$0x3]
      %v224 = vld [vmem:[%s220 + $0x18] sm:$0xff]
      %v225 = vld [vmem:[%s220 + $0x20] sm:$0xff]
      %v226 = vld [vmem:[%s220 + $0x28] sm:$0x3]
      %v227 = vld [vmem:[%s220 + $0x30] sm:$0xff]
      %v228 = vld [vmem:[%s220 + $0x38] sm:$0xff]
      %v229 = vld [vmem:[%s220 + $0x40] sm:$0x3]
      %v230 = vld [vmem:[%s220 + $0x48] sm:$0xff]
      %v231 = vld [vmem:[%s220 + $0x50] sm:$0xff]
      %v232 = vld [vmem:[%s220 + $0x58] sm:$0x3]
      %v233 = vld [vmem:[%s220 + $0x60] sm:$0xff]
      %v234 = vld [vmem:[%s220 + $0x68] sm:$0xff]
      %v235 = vld [vmem:[%s220 + $0x70] sm:$0x3]
      %v236 = vld [vmem:[%s220 + $0x78] sm:$0xff]
      %v237 = vld [vmem:[%s220 + $0x80] sm:$0xff]
      %v238 = vld [vmem:[%s220 + $0x88] sm:$0x3]
      %v239 = vpack.c.bf16 %v222, %v221
      %v240 = vpack.c.bf16 %v223, %v223
      %v241 = vpack.c.bf16 %v225, %v224
      %v242 = vpack.c.bf16 %v226, %v226
      %v243 = vpack.c.bf16 %v228, %v227
      %v244 = vpack.c.bf16 %v229, %v229
      %v245 = vpack.c.bf16 %v231, %v230
      %v246 = vpack.c.bf16 %v232, %v232
      %v247 = vpack.c.bf16 %v234, %v233
      %v248 = vpack.c.bf16 %v235, %v235
      %v249 = vpack.c.bf16 %v237, %v236
      %v250 = vpack.c.bf16 %v238, %v238
      %vm251 = vsmask.f32 7424
      %v253 = vshrl.u32 %v239, 16
      %v255 = vshll.u32 %v239, 16
      %v257 = vrot.slane %v255, 1
      %v258 = vor.u32 %v253, %v257
      %v260 = vshll.u32 %v240, 16
      %v262 = vrot.slane %v260, 1
      %v263 = vsel %vm251, %v258, %v262
      %v265 = vshrl.u32 %v241, 16
      %v267 = vshll.u32 %v241, 16
      %v269 = vrot.slane %v267, 1
      %v270 = vor.u32 %v265, %v269
      %v272 = vshll.u32 %v242, 16
      %v274 = vrot.slane %v272, 1
      %v275 = vsel %vm251, %v270, %v274
      %v277 = vshrl.u32 %v243, 16
      %v279 = vshll.u32 %v243, 16
      %v281 = vrot.slane %v279, 1
      %v282 = vor.u32 %v277, %v281
      %v284 = vshll.u32 %v244, 16
      %v286 = vrot.slane %v284, 1
      %v287 = vsel %vm251, %v282, %v286
      %v289 = vshrl.u32 %v245, 16
      %v291 = vshll.u32 %v245, 16
      %v293 = vrot.slane %v291, 1
      %v294 = vor.u32 %v289, %v293
      %v296 = vshll.u32 %v246, 16
      %v298 = vrot.slane %v296, 1
      %v299 = vsel %vm251, %v294, %v298
      %vm312 = vcmask 1046528
      %v313 = vrot.slane %v239, 1
      %v314 = vrot.slane %v240, 1
      %v315 = vsel %vm312, %v313, %v314
      %v316 = vrot.slane %v241, 1
      %v317 = vrot.slane %v242, 1
      %v318 = vsel %vm312, %v316, %v317
      %v319 = vrot.slane %v243, 1
      %v320 = vrot.slane %v244, 1
      %v321 = vsel %vm312, %v319, %v320
      %v322 = vrot.slane %v245, 1
      %v323 = vrot.slane %v246, 1
      %v324 = vsel %vm312, %v322, %v323
      %v329 = vld [vmem:[%s1] sm:$0xf]
      %v330 = vld [vmem:[%s1 + $0x4] sm:$0xf]
      %v331 = vld [vmem:[%s1 + $0x8] sm:$0xf]
      %v332 = vld [vmem:[%s1 + $0xc] sm:$0xf]
      %v333 = vld [vmem:[%s1 + $0x10] sm:$0xf]
      %v334 = vld [vmem:[%s1 + $0x14] sm:$0xf]
      %v335 = vld [vmem:[%s1 + $0x18] sm:$0xf]
      %v336 = vld [vmem:[%s1 + $0x1c] sm:$0xf]
      %v337 = vld [vmem:[%s1 + $0x20] sm:$0xf]
      %v338 = vld [vmem:[%s1 + $0x24] sm:$0xf]
      %v339 = vld [vmem:[%s1 + $0x28] sm:$0xf]
      %v340 = vld [vmem:[%s1 + $0x2c] sm:$0xf]
      %v341 = vld [vmem:[%s1 + $0x30] sm:$0xf]
      %v342 = vld [vmem:[%s1 + $0x34] sm:$0xf]
      %v343 = vld [vmem:[%s1 + $0x38] sm:$0xf]
      %v344 = vld [vmem:[%s1 + $0x3c] sm:$0xf]
      %v345 = vld [vmem:[%s1 + $0x40] sm:$0xf]
      %v346 = vld [vmem:[%s1 + $0x44] sm:$0xf]
      %v347 = vld [vmem:[%s1 + $0x48] sm:$0xf]
      %v348 = vld [vmem:[%s1 + $0x4c] sm:$0xf]
      %v349 = vld [vmem:[%s1 + $0x50] sm:$0xf]
      %v350 = vld [vmem:[%s1 + $0x54] sm:$0xf]
      %v351 = vld [vmem:[%s1 + $0x58] sm:$0xf]
      %v352 = vld [vmem:[%s1 + $0x5c] sm:$0xf]
      %v353 = vld [vmem:[%s1 + $0x60] sm:$0xf]
      %v354 = vld [vmem:[%s1 + $0x64] sm:$0xf]
      %v355 = vld [vmem:[%s1 + $0x68] sm:$0xf]
      %v356 = vld [vmem:[%s1 + $0x6c] sm:$0xf]
      %v357 = vld [vmem:[%s1 + $0x70] sm:$0xf]
      %v358 = vld [vmem:[%s1 + $0x74] sm:$0xf]
      %v359 = vld [vmem:[%s1 + $0x78] sm:$0xf]
      %v360 = vld [vmem:[%s1 + $0x7c] sm:$0xf]
      %v361 = vld [vmem:[%s1 + $0x80] sm:$0xf]
      %v362 = vld [vmem:[%s1 + $0x84] sm:$0xf]
      %v363 = vld [vmem:[%s1 + $0x88] sm:$0xf]
      %v364 = vld [vmem:[%s1 + $0x8c] sm:$0xf]
      %v365 = vld [vmem:[%s1 + $0x90] sm:$0xf]
      %v366 = vld [vmem:[%s1 + $0x94] sm:$0xf]
      %v367 = vld [vmem:[%s1 + $0x98] sm:$0xf]
      %v368 = vld [vmem:[%s1 + $0x9c] sm:$0xf]
      %v369 = vld [vmem:[%s1 + $0xa0] sm:$0xf]
      %v370 = vld [vmem:[%s1 + $0xa4] sm:$0xf]
      %v371 = vld [vmem:[%s1 + $0xa8] sm:$0xf]
      %v372 = vld [vmem:[%s1 + $0xac] sm:$0xf]
      %v373 = vld [vmem:[%s1 + $0xb0] sm:$0xf]
      %v374 = vld [vmem:[%s1 + $0xb4] sm:$0xf]
      %v375 = vld [vmem:[%s1 + $0xb8] sm:$0xf]
      %v376 = vld [vmem:[%s1 + $0xbc] sm:$0xf]
      %v378 = vshrl.u32 %v247, 16
      %v380 = vshll.u32 %v247, 16
      %v382 = vrot.slane %v380, 1
      %v383 = vor.u32 %v378, %v382
      %v385 = vshll.u32 %v248, 16
      %v387 = vrot.slane %v385, 1
      %v388 = vsel %vm251, %v383, %v387
      %v392 = vrot.slane %v247, 1
      %v393 = vrot.slane %v248, 1
      %v394 = vsel %vm312, %v392, %v393
      %s396 = scalar_lea.vmem %s1, 192
      %v397 = vld [vmem:[%s396] sm:$0xf]
      %v398 = vld [vmem:[%s396 + $0x4] sm:$0xf]
      %v399 = vld [vmem:[%s396 + $0x8] sm:$0xf]
      %v400 = vld [vmem:[%s396 + $0xc] sm:$0xf]
      %v401 = vld [vmem:[%s396 + $0x10] sm:$0xf]
      %v402 = vld [vmem:[%s396 + $0x14] sm:$0xf]
      %v403 = vld [vmem:[%s396 + $0x18] sm:$0xf]
      %v404 = vld [vmem:[%s396 + $0x1c] sm:$0xf]
      %v405 = vld [vmem:[%s396 + $0x20] sm:$0xf]
      %v406 = vld [vmem:[%s396 + $0x24] sm:$0xf]
      %v407 = vld [vmem:[%s396 + $0x28] sm:$0xf]
      %v408 = vld [vmem:[%s396 + $0x2c] sm:$0xf]
      %v409 = vld [vmem:[%s396 + $0x30] sm:$0xf]
      %v410 = vld [vmem:[%s396 + $0x34] sm:$0xf]
      %v411 = vld [vmem:[%s396 + $0x38] sm:$0xf]
      %v412 = vld [vmem:[%s396 + $0x3c] sm:$0xf]
      %v413 = vld [vmem:[%s396 + $0x40] sm:$0xf]
      %v414 = vld [vmem:[%s396 + $0x44] sm:$0xf]
      %v415 = vld [vmem:[%s396 + $0x48] sm:$0xf]
      %v416 = vld [vmem:[%s396 + $0x4c] sm:$0xf]
      %v417 = vld [vmem:[%s396 + $0x50] sm:$0xf]
      %v418 = vld [vmem:[%s396 + $0x54] sm:$0xf]
      %v419 = vld [vmem:[%s396 + $0x58] sm:$0xf]
      %v420 = vld [vmem:[%s396 + $0x5c] sm:$0xf]
      %v421 = vld [vmem:[%s396 + $0x60] sm:$0xf]
      %v422 = vld [vmem:[%s396 + $0x64] sm:$0xf]
      %v423 = vld [vmem:[%s396 + $0x68] sm:$0xf]
      %v424 = vld [vmem:[%s396 + $0x6c] sm:$0xf]
      %v425 = vld [vmem:[%s396 + $0x70] sm:$0xf]
      %v426 = vld [vmem:[%s396 + $0x74] sm:$0xf]
      %v427 = vld [vmem:[%s396 + $0x78] sm:$0xf]
      %v428 = vld [vmem:[%s396 + $0x7c] sm:$0xf]
      %v429 = vld [vmem:[%s396 + $0x80] sm:$0xf]
      %v430 = vld [vmem:[%s396 + $0x84] sm:$0xf]
      %v431 = vld [vmem:[%s396 + $0x88] sm:$0xf]
      %v432 = vld [vmem:[%s396 + $0x8c] sm:$0xf]
      %v433 = vld [vmem:[%s396 + $0x90] sm:$0xf]
      %v434 = vld [vmem:[%s396 + $0x94] sm:$0xf]
      %v435 = vld [vmem:[%s396 + $0x98] sm:$0xf]
      %v436 = vld [vmem:[%s396 + $0x9c] sm:$0xf]
      %v437 = vld [vmem:[%s396 + $0xa0] sm:$0xf]
      %v438 = vld [vmem:[%s396 + $0xa4] sm:$0xf]
      %v439 = vld [vmem:[%s396 + $0xa8] sm:$0xf]
      %v440 = vld [vmem:[%s396 + $0xac] sm:$0xf]
      %v441 = vld [vmem:[%s396 + $0xb0] sm:$0xf]
      %v442 = vld [vmem:[%s396 + $0xb4] sm:$0xf]
      %v443 = vld [vmem:[%s396 + $0xb8] sm:$0xf]
      %v444 = vld [vmem:[%s396 + $0xbc] sm:$0xf]
      %v493 = vunpack.c.l.b16 %v397
      %v494 = vunpack.c.l.b16 %v398
      %v495 = vunpack.c.l.b16 %v399
      %v496 = vunpack.c.l.b16 %v400
      %v497 = vunpack.c.l.b16 %v401
      %v498 = vunpack.c.l.b16 %v402
      %v499 = vunpack.c.l.b16 %v403
      %v500 = vunpack.c.l.b16 %v404
      %v501 = vunpack.c.l.b16 %v405
      %v502 = vunpack.c.l.b16 %v406
      %v503 = vunpack.c.l.b16 %v407
      %v504 = vunpack.c.l.b16 %v408
      %v505 = vunpack.c.l.b16 %v409
      %v506 = vunpack.c.l.b16 %v410
      %v507 = vunpack.c.l.b16 %v411
      %v508 = vunpack.c.l.b16 %v412
      %v509 = vunpack.c.l.b16 %v413
      %v510 = vunpack.c.l.b16 %v414
      %v511 = vunpack.c.l.b16 %v415
      %v512 = vunpack.c.l.b16 %v416
      %v513 = vunpack.c.l.b16 %v417
      %v514 = vunpack.c.l.b16 %v418
      %v515 = vunpack.c.l.b16 %v419
      %v516 = vunpack.c.l.b16 %v420
      %v517 = vunpack.c.l.b16 %v421
      %v518 = vunpack.c.l.b16 %v422
      %v519 = vunpack.c.l.b16 %v423
      %v520 = vunpack.c.l.b16 %v424
      %v521 = vunpack.c.l.b16 %v425
      %v522 = vunpack.c.l.b16 %v426
      %v523 = vunpack.c.l.b16 %v427
      %v524 = vunpack.c.l.b16 %v428
      %v525 = vunpack.c.l.b16 %v429
      %v526 = vunpack.c.l.b16 %v430
      %v527 = vunpack.c.l.b16 %v431
      %v528 = vunpack.c.l.b16 %v432
      %v529 = vunpack.c.l.b16 %v433
      %v530 = vunpack.c.l.b16 %v434
      %v531 = vunpack.c.l.b16 %v435
      %v532 = vunpack.c.l.b16 %v436
      %v533 = vunpack.c.l.b16 %v437
      %v534 = vunpack.c.l.b16 %v438
      %v535 = vunpack.c.l.b16 %v439
      %v536 = vunpack.c.l.b16 %v440
      %v537 = vunpack.c.l.b16 %v441
      %v538 = vunpack.c.l.b16 %v442
      %v539 = vunpack.c.l.b16 %v443
      %v540 = vunpack.c.l.b16 %v444
      %v541 = vpack.c.b16 %v494, %v493
      %v542 = vpack.c.b16 %v496, %v495
      %v543 = vpack.c.b16 %v498, %v497
      %v544 = vpack.c.b16 %v500, %v499
      %v545 = vpack.c.b16 %v502, %v501
      %v546 = vpack.c.b16 %v504, %v503
      %v547 = vpack.c.b16 %v506, %v505
      %v548 = vpack.c.b16 %v508, %v507
      %v549 = vpack.c.b16 %v510, %v509
      %v550 = vpack.c.b16 %v512, %v511
      %v551 = vpack.c.b16 %v514, %v513
      %v552 = vpack.c.b16 %v516, %v515
      %v553 = vpack.c.b16 %v518, %v517
      %v554 = vpack.c.b16 %v520, %v519
      %v555 = vpack.c.b16 %v522, %v521
      %v556 = vpack.c.b16 %v524, %v523
      %v557 = vpack.c.b16 %v526, %v525
      %v558 = vpack.c.b16 %v528, %v527
      %v559 = vpack.c.b16 %v530, %v529
      %v560 = vpack.c.b16 %v532, %v531
      %v561 = vpack.c.b16 %v534, %v533
      %v562 = vpack.c.b16 %v536, %v535
      %v563 = vpack.c.b16 %v538, %v537
      %v564 = vpack.c.b16 %v540, %v539
      %589 = vmatprep.subr.bf16.mxu0 0
      %590 = vmatpush1.bf16.msra.mxu0 %v548
      %591 = vmatprep.subr.bf16.mxu0 0
      %592 = vmatpush1.bf16.msra.mxu0 %v547
      %593 = vmatprep.subr.bf16.mxu0 0
      %594 = vmatpush1.bf16.msra.mxu0 %v546
      %595 = vmatprep.subr.bf16.mxu0 0
      %596 = vmatpush1.bf16.msra.mxu0 %v545
      %597 = vmatprep.subr.bf16.mxu0 0
      %598 = vmatpush1.bf16.msra.mxu0 %v544
      %599 = vmatprep.subr.bf16.mxu0 0
      %600 = vmatpush1.bf16.msra.mxu0 %v543
      %601 = vmatprep.subr.bf16.mxu0 0
      %602 = vmatpush1.bf16.msra.mxu0 %v542
      %603 = vmatprep.subr.bf16.mxu0 0
      %604 = vmatpush1.bf16.msra.mxu0 %v541
      %605 = vmatprep.subr.bf16.mxu0 0
      %606 = vmatpush2.bf16.msra.mxu0 %v556
      %607 = vmatprep.subr.bf16.mxu0 0
      %608 = vmatpush2.bf16.msra.mxu0 %v555
      %609 = vmatprep.subr.bf16.mxu0 0
      %610 = vmatpush2.bf16.msra.mxu0 %v554
      %611 = vmatprep.subr.bf16.mxu0 0
      %612 = vmatpush2.bf16.msra.mxu0 %v553
      %613 = vmatprep.subr.bf16.mxu0 0
      %614 = vmatpush2.bf16.msra.mxu0 %v552
      %615 = vmatprep.subr.bf16.mxu0 0
      %616 = vmatpush2.bf16.msra.mxu0 %v551
      %617 = vmatprep.subr.bf16.mxu0 0
      %618 = vmatpush2.bf16.msra.mxu0 %v550
      %619 = vmatprep.subr.bf16.mxu0 0
      %620 = vmatpush2.bf16.msra.mxu0 %v549
      %621 = vmatprep.mubr.bf16.mxu0 %v275
      %622 = vmatmul.mubr.bf16.gmra.mxu0 %v241
      %v623 = vpop.f32.mrf.mxu0
      %v624 = vadd.f32 0.0, %v623
      %v625 = vpop.f32.mrf.mxu0
      %v626 = vpop.f32.mrf.mxu0
      %v627 = vadd.f32 0.0, %v626
      %v628 = vpop.f32.mrf.mxu0
      %629 = vmatprep.mubr.bf16.mxu0 %v287
      %630 = vmatmul.mubr.bf16.gmra.mxu0 %v243
      %v631 = vpop.f32.mrf.mxu0
      %v632 = vadd.f32 0.0, %v631
      %v633 = vpop.f32.mrf.mxu0
      %v634 = vpop.f32.mrf.mxu0
      %v635 = vadd.f32 0.0, %v634
      %v636 = vpop.f32.mrf.mxu0
      %637 = vmatprep.mubr.bf16.mxu0 %v299
      %638 = vmatmul.mubr.bf16.gmra.mxu0 %v245
      %v639 = vpop.f32.mrf.mxu0
      %v640 = vadd.f32 0.0, %v639
      %v641 = vpop.f32.mrf.mxu0
      %v642 = vpop.f32.mrf.mxu0
      %v643 = vadd.f32 0.0, %v642
      %v644 = vpop.f32.mrf.mxu0
      %645 = vmatprep.mubr.bf16.mxu0 %v388
      %646 = vmatmul.mubr.bf16.gmra.mxu0 %v247
      %v647 = vpop.f32.mrf.mxu0
      %v648 = vadd.f32 0.0, %v647
      %v649 = vpop.f32.mrf.mxu0
      %v650 = vpop.f32.mrf.mxu0
      %v651 = vadd.f32 0.0, %v650
      %v652 = vpop.f32.mrf.mxu0
      %653 = vdwg.mxu0
      %654 = vmatprep.subr.bf16.mxu0 0
      %655 = vmatpush1.bf16.msra.mxu0 %v564
      %656 = vmatprep.subr.bf16.mxu0 0
      %657 = vmatpush1.bf16.msra.mxu0 %v563
      %658 = vmatprep.subr.bf16.mxu0 0
      %659 = vmatpush1.bf16.msra.mxu0 %v562
      %660 = vmatprep.subr.bf16.mxu0 0
      %661 = vmatpush1.bf16.msra.mxu0 %v561
      %662 = vmatprep.subr.bf16.mxu0 0
      %663 = vmatpush1.bf16.msra.mxu0 %v560
      %664 = vmatprep.subr.bf16.mxu0 0
      %665 = vmatpush1.bf16.msra.mxu0 %v559
      %666 = vmatprep.subr.bf16.mxu0 0
      %667 = vmatpush1.bf16.msra.mxu0 %v558
      %668 = vmatprep.subr.bf16.mxu0 0
      %669 = vmatpush1.bf16.msra.mxu0 %v557
      %670 = vmatprep.subr.bf16.mxu0 0
      %671 = vmatpush2.bf16.msra.mxu0 0
      %672 = vmatprep.subr.bf16.mxu0 0
      %673 = vmatpush2.bf16.msra.mxu0 0
      %674 = vmatprep.subr.bf16.mxu0 0
      %675 = vmatpush2.bf16.msra.mxu0 0
      %676 = vmatprep.subr.bf16.mxu0 0
      %677 = vmatpush2.bf16.msra.mxu0 0
      %678 = vmatprep.subr.bf16.mxu0 0
      %679 = vmatpush2.bf16.msra.mxu0 0
      %680 = vmatprep.subr.bf16.mxu0 0
      %681 = vmatpush2.bf16.msra.mxu0 0
      %682 = vmatprep.subr.bf16.mxu0 0
      %683 = vmatpush2.bf16.msra.mxu0 0
      %684 = vmatprep.subr.bf16.mxu0 0
      %685 = vmatpush2.bf16.msra.mxu0 0
      %686 = vmatprep.mubr.bf16.mxu0 0
      %687 = vmatmul.mubr.bf16.gmra.mxu0 %v318
      %v688 = vpop.f32.mrf.mxu0
      %v689 = vadd.f32 %v624, %v688
      %v690 = vpop.f32.mrf.mxu0
      %v691 = vpop.f32.mrf.mxu0
      %v692 = vadd.f32 %v627, %v691
      %v693 = vpop.f32.mrf.mxu0
      %694 = vmatprep.mubr.bf16.mxu0 0
      %695 = vmatmul.mubr.bf16.gmra.mxu0 %v321
      %v696 = vpop.f32.mrf.mxu0
      %v697 = vadd.f32 %v632, %v696
      %v698 = vpop.f32.mrf.mxu0
      %v699 = vpop.f32.mrf.mxu0
      %v700 = vadd.f32 %v635, %v699
      %v701 = vpop.f32.mrf.mxu0
      %702 = vmatprep.mubr.bf16.mxu0 0
      %703 = vmatmul.mubr.bf16.gmra.mxu0 %v324
      %v704 = vpop.f32.mrf.mxu0
      %v705 = vadd.f32 %v640, %v704
      %v706 = vpop.f32.mrf.mxu0
      %v707 = vpop.f32.mrf.mxu0
      %v708 = vadd.f32 %v643, %v707
      %v709 = vpop.f32.mrf.mxu0
      %710 = vmatprep.mubr.bf16.mxu0 0
      %711 = vmatmul.mubr.bf16.gmra.mxu0 %v394
      %v712 = vpop.f32.mrf.mxu0
      %v713 = vadd.f32 %v648, %v712
      %v714 = vpop.f32.mrf.mxu0
      %v715 = vpop.f32.mrf.mxu0
      %v716 = vadd.f32 %v651, %v715
      %v717 = vpop.f32.mrf.mxu0
      %718 = vdwg.mxu0
      %v767 = vunpack.c.l.b16 %v329
      %v768 = vunpack.c.l.b16 %v330
      %v769 = vunpack.c.l.b16 %v331
      %v770 = vunpack.c.l.b16 %v332
      %v771 = vunpack.c.l.b16 %v333
      %v772 = vunpack.c.l.b16 %v334
      %v773 = vunpack.c.l.b16 %v335
      %v774 = vunpack.c.l.b16 %v336
      %v775 = vunpack.c.l.b16 %v337
      %v776 = vunpack.c.l.b16 %v338
      %v777 = vunpack.c.l.b16 %v339
      %v778 = vunpack.c.l.b16 %v340
      %v779 = vunpack.c.l.b16 %v341
      %v780 = vunpack.c.l.b16 %v342
      %v781 = vunpack.c.l.b16 %v343
      %v782 = vunpack.c.l.b16 %v344
      %v783 = vunpack.c.l.b16 %v345
      %v784 = vunpack.c.l.b16 %v346
      %v785 = vunpack.c.l.b16 %v347
      %v786 = vunpack.c.l.b16 %v348
      %v787 = vunpack.c.l.b16 %v349
      %v788 = vunpack.c.l.b16 %v350
      %v789 = vunpack.c.l.b16 %v351
      %v790 = vunpack.c.l.b16 %v352
      %v791 = vunpack.c.l.b16 %v353
      %v792 = vunpack.c.l.b16 %v354
      %v793 = vunpack.c.l.b16 %v355
      %v794 = vunpack.c.l.b16 %v356
      %v795 = vunpack.c.l.b16 %v357
      %v796 = vunpack.c.l.b16 %v358
      %v797 = vunpack.c.l.b16 %v359
      %v798 = vunpack.c.l.b16 %v360
      %v799 = vunpack.c.l.b16 %v361
      %v800 = vunpack.c.l.b16 %v362
      %v801 = vunpack.c.l.b16 %v363
      %v802 = vunpack.c.l.b16 %v364
      %v803 = vunpack.c.l.b16 %v365
      %v804 = vunpack.c.l.b16 %v366
      %v805 = vunpack.c.l.b16 %v367
      %v806 = vunpack.c.l.b16 %v368
      %v807 = vunpack.c.l.b16 %v369
      %v808 = vunpack.c.l.b16 %v370
      %v809 = vunpack.c.l.b16 %v371
      %v810 = vunpack.c.l.b16 %v372
      %v811 = vunpack.c.l.b16 %v373
      %v812 = vunpack.c.l.b16 %v374
      %v813 = vunpack.c.l.b16 %v375
      %v814 = vunpack.c.l.b16 %v376
      %v815 = vpack.c.b16 %v768, %v767
      %v816 = vpack.c.b16 %v770, %v769
      %v817 = vpack.c.b16 %v772, %v771
      %v818 = vpack.c.b16 %v774, %v773
      %v819 = vpack.c.b16 %v776, %v775
      %v820 = vpack.c.b16 %v778, %v777
      %v821 = vpack.c.b16 %v780, %v779
      %v822 = vpack.c.b16 %v782, %v781
      %v823 = vpack.c.b16 %v784, %v783
      %v824 = vpack.c.b16 %v786, %v785
      %v825 = vpack.c.b16 %v788, %v787
      %v826 = vpack.c.b16 %v790, %v789
      %v827 = vpack.c.b16 %v792, %v791
      %v828 = vpack.c.b16 %v794, %v793
      %v829 = vpack.c.b16 %v796, %v795
      %v830 = vpack.c.b16 %v798, %v797
      %v831 = vpack.c.b16 %v800, %v799
      %v832 = vpack.c.b16 %v802, %v801
      %v833 = vpack.c.b16 %v804, %v803
      %v834 = vpack.c.b16 %v806, %v805
      %v835 = vpack.c.b16 %v808, %v807
      %v836 = vpack.c.b16 %v810, %v809
      %v837 = vpack.c.b16 %v812, %v811
      %v838 = vpack.c.b16 %v814, %v813
      %863 = vmatprep.subr.bf16.mxu0 0
      %864 = vmatpush1.bf16.msra.mxu0 %v822
      %865 = vmatprep.subr.bf16.mxu0 0
      %866 = vmatpush1.bf16.msra.mxu0 %v821
      %867 = vmatprep.subr.bf16.mxu0 0
      %868 = vmatpush1.bf16.msra.mxu0 %v820
      %869 = vmatprep.subr.bf16.mxu0 0
      %870 = vmatpush1.bf16.msra.mxu0 %v819
      %871 = vmatprep.subr.bf16.mxu0 0
      %872 = vmatpush1.bf16.msra.mxu0 %v818
      %873 = vmatprep.subr.bf16.mxu0 0
      %874 = vmatpush1.bf16.msra.mxu0 %v817
      %875 = vmatprep.subr.bf16.mxu0 0
      %876 = vmatpush1.bf16.msra.mxu0 %v816
      %877 = vmatprep.subr.bf16.mxu0 0
      %878 = vmatpush1.bf16.msra.mxu0 %v815
      %879 = vmatprep.subr.bf16.mxu0 0
      %880 = vmatpush2.bf16.msra.mxu0 %v830
      %881 = vmatprep.subr.bf16.mxu0 0
      %882 = vmatpush2.bf16.msra.mxu0 %v829
      %883 = vmatprep.subr.bf16.mxu0 0
      %884 = vmatpush2.bf16.msra.mxu0 %v828
      %885 = vmatprep.subr.bf16.mxu0 0
      %886 = vmatpush2.bf16.msra.mxu0 %v827
      %887 = vmatprep.subr.bf16.mxu0 0
      %888 = vmatpush2.bf16.msra.mxu0 %v826
      %889 = vmatprep.subr.bf16.mxu0 0
      %890 = vmatpush2.bf16.msra.mxu0 %v825
      %891 = vmatprep.subr.bf16.mxu0 0
      %892 = vmatpush2.bf16.msra.mxu0 %v824
      %893 = vmatprep.subr.bf16.mxu0 0
      %894 = vmatpush2.bf16.msra.mxu0 %v823
      %895 = vmatprep.mubr.bf16.mxu0 %v263
      %896 = vmatmul.mubr.bf16.gmra.mxu0 %v239
      %v897 = vpop.f32.mrf.mxu0
      %v898 = vadd.f32 %v689, %v897
      %v899 = vpop.f32.mrf.mxu0
      %v900 = vpop.f32.mrf.mxu0
      %v901 = vadd.f32 %v692, %v900
      %v902 = vpop.f32.mrf.mxu0
      %903 = vmatprep.mubr.bf16.mxu0 %v275
      %904 = vmatmul.mubr.bf16.gmra.mxu0 %v241
      %v905 = vpop.f32.mrf.mxu0
      %v906 = vadd.f32 %v697, %v905
      %v907 = vpop.f32.mrf.mxu0
      %v908 = vpop.f32.mrf.mxu0
      %v909 = vadd.f32 %v700, %v908
      %v910 = vpop.f32.mrf.mxu0
      %911 = vmatprep.mubr.bf16.mxu0 %v287
      %912 = vmatmul.mubr.bf16.gmra.mxu0 %v243
      %v913 = vpop.f32.mrf.mxu0
      %v914 = vadd.f32 %v705, %v913
      %v915 = vpop.f32.mrf.mxu0
      %v916 = vpop.f32.mrf.mxu0
      %v917 = vadd.f32 %v708, %v916
      %v918 = vpop.f32.mrf.mxu0
      %919 = vmatprep.mubr.bf16.mxu0 %v299
      %920 = vmatmul.mubr.bf16.gmra.mxu0 %v245
      %v921 = vpop.f32.mrf.mxu0
      %v922 = vadd.f32 %v713, %v921
      %v923 = vpop.f32.mrf.mxu0
      %v924 = vpop.f32.mrf.mxu0
      %v925 = vadd.f32 %v716, %v924
      %v926 = vpop.f32.mrf.mxu0
      %927 = vdwg.mxu0
      %928 = vmatprep.subr.bf16.mxu0 0
      %929 = vmatpush1.bf16.msra.mxu0 %v838
      %930 = vmatprep.subr.bf16.mxu0 0
      %931 = vmatpush1.bf16.msra.mxu0 %v837
      %932 = vmatprep.subr.bf16.mxu0 0
      %933 = vmatpush1.bf16.msra.mxu0 %v836
      %934 = vmatprep.subr.bf16.mxu0 0
      %935 = vmatpush1.bf16.msra.mxu0 %v835
      %936 = vmatprep.subr.bf16.mxu0 0
      %937 = vmatpush1.bf16.msra.mxu0 %v834
      %938 = vmatprep.subr.bf16.mxu0 0
      %939 = vmatpush1.bf16.msra.mxu0 %v833
      %940 = vmatprep.subr.bf16.mxu0 0
      %941 = vmatpush1.bf16.msra.mxu0 %v832
      %942 = vmatprep.subr.bf16.mxu0 0
      %943 = vmatpush1.bf16.msra.mxu0 %v831
      %944 = vmatprep.subr.bf16.mxu0 0
      %945 = vmatpush2.bf16.msra.mxu0 0
      %946 = vmatprep.subr.bf16.mxu0 0
      %947 = vmatpush2.bf16.msra.mxu0 0
      %948 = vmatprep.subr.bf16.mxu0 0
      %949 = vmatpush2.bf16.msra.mxu0 0
      %950 = vmatprep.subr.bf16.mxu0 0
      %951 = vmatpush2.bf16.msra.mxu0 0
      %952 = vmatprep.subr.bf16.mxu0 0
      %953 = vmatpush2.bf16.msra.mxu0 0
      %954 = vmatprep.subr.bf16.mxu0 0
      %955 = vmatpush2.bf16.msra.mxu0 0
      %956 = vmatprep.subr.bf16.mxu0 0
      %957 = vmatpush2.bf16.msra.mxu0 0
      %958 = vmatprep.subr.bf16.mxu0 0
      %959 = vmatpush2.bf16.msra.mxu0 0
      %960 = vmatprep.mubr.bf16.mxu0 0
      %961 = vmatmul.mubr.bf16.gmra.mxu0 %v315
      %v962 = vpop.f32.mrf.mxu0
      %v963 = vadd.f32 %v898, %v962
      %v964 = vpop.f32.mrf.mxu0
      %v965 = vpop.f32.mrf.mxu0
      %v966 = vadd.f32 %v901, %v965
      %v967 = vpop.f32.mrf.mxu0
      %968 = vmatprep.mubr.bf16.mxu0 0
      %969 = vmatmul.mubr.bf16.gmra.mxu0 %v318
      %v970 = vpop.f32.mrf.mxu0
      %v971 = vadd.f32 %v906, %v970
      %v972 = vpop.f32.mrf.mxu0
      %v973 = vpop.f32.mrf.mxu0
      %v974 = vadd.f32 %v909, %v973
      %v975 = vpop.f32.mrf.mxu0
      %976 = vmatprep.mubr.bf16.mxu0 0
      %977 = vmatmul.mubr.bf16.gmra.mxu0 %v321
      %v978 = vpop.f32.mrf.mxu0
      %v979 = vadd.f32 %v914, %v978
      %v980 = vpop.f32.mrf.mxu0
      %v981 = vpop.f32.mrf.mxu0
      %v982 = vadd.f32 %v917, %v981
      %v983 = vpop.f32.mrf.mxu0
      %984 = vmatprep.mubr.bf16.mxu0 0
      %985 = vmatmul.mubr.bf16.gmra.mxu0 %v324
      %v986 = vpop.f32.mrf.mxu0
      %v987 = vadd.f32 %v922, %v986
      %v988 = vpop.f32.mrf.mxu0
      %v989 = vpop.f32.mrf.mxu0
      %v990 = vadd.f32 %v925, %v989
      %v991 = vpop.f32.mrf.mxu0
      %992 = vdwg.mxu0
      %v994 = vshrl.u32 %v249, 16
      %v996 = vshll.u32 %v249, 16
      %v998 = vrot.slane %v996, 1
      %v999 = vor.u32 %v994, %v998
      %v1001 = vshll.u32 %v250, 16
      %v1003 = vrot.slane %v1001, 1
      %v1004 = vsel %vm251, %v999, %v1003
      %v1008 = vrot.slane %v249, 1
      %v1009 = vrot.slane %v250, 1
      %v1010 = vsel %vm312, %v1008, %v1009
      %s1012 = scalar_lea.vmem %s1, 384
      %v1013 = vld [vmem:[%s1012] sm:$0xf]
      %v1014 = vld [vmem:[%s1012 + $0x4] sm:$0xf]
      %v1015 = vld [vmem:[%s1012 + $0x8] sm:$0xf]
      %v1016 = vld [vmem:[%s1012 + $0xc] sm:$0xf]
      %v1017 = vld [vmem:[%s1012 + $0x10] sm:$0xf]
      %v1018 = vld [vmem:[%s1012 + $0x14] sm:$0xf]
      %v1019 = vld [vmem:[%s1012 + $0x18] sm:$0xf]
      %v1020 = vld [vmem:[%s1012 + $0x1c] sm:$0xf]
      %v1021 = vld [vmem:[%s1012 + $0x20] sm:$0xf]
      %v1022 = vld [vmem:[%s1012 + $0x24] sm:$0xf]
      %v1023 = vld [vmem:[%s1012 + $0x28] sm:$0xf]
      %v1024 = vld [vmem:[%s1012 + $0x2c] sm:$0xf]
      %v1025 = vld [vmem:[%s1012 + $0x30] sm:$0xf]
      %v1026 = vld [vmem:[%s1012 + $0x34] sm:$0xf]
      %v1027 = vld [vmem:[%s1012 + $0x38] sm:$0xf]
      %v1028 = vld [vmem:[%s1012 + $0x3c] sm:$0xf]
      %v1029 = vld [vmem:[%s1012 + $0x40] sm:$0xf]
      %v1030 = vld [vmem:[%s1012 + $0x44] sm:$0xf]
      %v1031 = vld [vmem:[%s1012 + $0x48] sm:$0xf]
      %v1032 = vld [vmem:[%s1012 + $0x4c] sm:$0xf]
      %v1033 = vld [vmem:[%s1012 + $0x50] sm:$0xf]
      %v1034 = vld [vmem:[%s1012 + $0x54] sm:$0xf]
      %v1035 = vld [vmem:[%s1012 + $0x58] sm:$0xf]
      %v1036 = vld [vmem:[%s1012 + $0x5c] sm:$0xf]
      %v1037 = vld [vmem:[%s1012 + $0x60] sm:$0xf]
      %v1038 = vld [vmem:[%s1012 + $0x64] sm:$0xf]
      %v1039 = vld [vmem:[%s1012 + $0x68] sm:$0xf]
      %v1040 = vld [vmem:[%s1012 + $0x6c] sm:$0xf]
      %v1041 = vld [vmem:[%s1012 + $0x70] sm:$0xf]
      %v1042 = vld [vmem:[%s1012 + $0x74] sm:$0xf]
      %v1043 = vld [vmem:[%s1012 + $0x78] sm:$0xf]
      %v1044 = vld [vmem:[%s1012 + $0x7c] sm:$0xf]
      %v1045 = vld [vmem:[%s1012 + $0x80] sm:$0xf]
      %v1046 = vld [vmem:[%s1012 + $0x84] sm:$0xf]
      %v1047 = vld [vmem:[%s1012 + $0x88] sm:$0xf]
      %v1048 = vld [vmem:[%s1012 + $0x8c] sm:$0xf]
      %v1049 = vld [vmem:[%s1012 + $0x90] sm:$0xf]
      %v1050 = vld [vmem:[%s1012 + $0x94] sm:$0xf]
      %v1051 = vld [vmem:[%s1012 + $0x98] sm:$0xf]
      %v1052 = vld [vmem:[%s1012 + $0x9c] sm:$0xf]
      %v1053 = vld [vmem:[%s1012 + $0xa0] sm:$0xf]
      %v1054 = vld [vmem:[%s1012 + $0xa4] sm:$0xf]
      %v1055 = vld [vmem:[%s1012 + $0xa8] sm:$0xf]
      %v1056 = vld [vmem:[%s1012 + $0xac] sm:$0xf]
      %v1057 = vld [vmem:[%s1012 + $0xb0] sm:$0xf]
      %v1058 = vld [vmem:[%s1012 + $0xb4] sm:$0xf]
      %v1059 = vld [vmem:[%s1012 + $0xb8] sm:$0xf]
      %v1060 = vld [vmem:[%s1012 + $0xbc] sm:$0xf]
      %v1109 = vunpack.c.l.b16 %v1013
      %v1110 = vunpack.c.l.b16 %v1014
      %v1111 = vunpack.c.l.b16 %v1015
      %v1112 = vunpack.c.l.b16 %v1016
      %v1113 = vunpack.c.l.b16 %v1017
      %v1114 = vunpack.c.l.b16 %v1018
      %v1115 = vunpack.c.l.b16 %v1019
      %v1116 = vunpack.c.l.b16 %v1020
      %v1117 = vunpack.c.l.b16 %v1021
      %v1118 = vunpack.c.l.b16 %v1022
      %v1119 = vunpack.c.l.b16 %v1023
      %v1120 = vunpack.c.l.b16 %v1024
      %v1121 = vunpack.c.l.b16 %v1025
      %v1122 = vunpack.c.l.b16 %v1026
      %v1123 = vunpack.c.l.b16 %v1027
      %v1124 = vunpack.c.l.b16 %v1028
      %v1125 = vunpack.c.l.b16 %v1029
      %v1126 = vunpack.c.l.b16 %v1030
      %v1127 = vunpack.c.l.b16 %v1031
      %v1128 = vunpack.c.l.b16 %v1032
      %v1129 = vunpack.c.l.b16 %v1033
      %v1130 = vunpack.c.l.b16 %v1034
      %v1131 = vunpack.c.l.b16 %v1035
      %v1132 = vunpack.c.l.b16 %v1036
      %v1133 = vunpack.c.l.b16 %v1037
      %v1134 = vunpack.c.l.b16 %v1038
      %v1135 = vunpack.c.l.b16 %v1039
      %v1136 = vunpack.c.l.b16 %v1040
      %v1137 = vunpack.c.l.b16 %v1041
      %v1138 = vunpack.c.l.b16 %v1042
      %v1139 = vunpack.c.l.b16 %v1043
      %v1140 = vunpack.c.l.b16 %v1044
      %v1141 = vunpack.c.l.b16 %v1045
      %v1142 = vunpack.c.l.b16 %v1046
      %v1143 = vunpack.c.l.b16 %v1047
      %v1144 = vunpack.c.l.b16 %v1048
      %v1145 = vunpack.c.l.b16 %v1049
      %v1146 = vunpack.c.l.b16 %v1050
      %v1147 = vunpack.c.l.b16 %v1051
      %v1148 = vunpack.c.l.b16 %v1052
      %v1149 = vunpack.c.l.b16 %v1053
      %v1150 = vunpack.c.l.b16 %v1054
      %v1151 = vunpack.c.l.b16 %v1055
      %v1152 = vunpack.c.l.b16 %v1056
      %v1153 = vunpack.c.l.b16 %v1057
      %v1154 = vunpack.c.l.b16 %v1058
      %v1155 = vunpack.c.l.b16 %v1059
      %v1156 = vunpack.c.l.b16 %v1060
      %v1157 = vpack.c.b16 %v1110, %v1109
      %v1158 = vpack.c.b16 %v1112, %v1111
      %v1159 = vpack.c.b16 %v1114, %v1113
      %v1160 = vpack.c.b16 %v1116, %v1115
      %v1161 = vpack.c.b16 %v1118, %v1117
      %v1162 = vpack.c.b16 %v1120, %v1119
      %v1163 = vpack.c.b16 %v1122, %v1121
      %v1164 = vpack.c.b16 %v1124, %v1123
      %v1165 = vpack.c.b16 %v1126, %v1125
      %v1166 = vpack.c.b16 %v1128, %v1127
      %v1167 = vpack.c.b16 %v1130, %v1129
      %v1168 = vpack.c.b16 %v1132, %v1131
      %v1169 = vpack.c.b16 %v1134, %v1133
      %v1170 = vpack.c.b16 %v1136, %v1135
      %v1171 = vpack.c.b16 %v1138, %v1137
      %v1172 = vpack.c.b16 %v1140, %v1139
      %v1173 = vpack.c.b16 %v1142, %v1141
      %v1174 = vpack.c.b16 %v1144, %v1143
      %v1175 = vpack.c.b16 %v1146, %v1145
      %v1176 = vpack.c.b16 %v1148, %v1147
      %v1177 = vpack.c.b16 %v1150, %v1149
      %v1178 = vpack.c.b16 %v1152, %v1151
      %v1179 = vpack.c.b16 %v1154, %v1153
      %v1180 = vpack.c.b16 %v1156, %v1155
      %1205 = vmatprep.subr.bf16.mxu0 0
      %1206 = vmatpush1.bf16.msra.mxu0 %v1164
      %1207 = vmatprep.subr.bf16.mxu0 0
      %1208 = vmatpush1.bf16.msra.mxu0 %v1163
      %1209 = vmatprep.subr.bf16.mxu0 0
      %1210 = vmatpush1.bf16.msra.mxu0 %v1162
      %1211 = vmatprep.subr.bf16.mxu0 0
      %1212 = vmatpush1.bf16.msra.mxu0 %v1161
      %1213 = vmatprep.subr.bf16.mxu0 0
      %1214 = vmatpush1.bf16.msra.mxu0 %v1160
      %1215 = vmatprep.subr.bf16.mxu0 0
      %1216 = vmatpush1.bf16.msra.mxu0 %v1159
      %1217 = vmatprep.subr.bf16.mxu0 0
      %1218 = vmatpush1.bf16.msra.mxu0 %v1158
      %1219 = vmatprep.subr.bf16.mxu0 0
      %1220 = vmatpush1.bf16.msra.mxu0 %v1157
      %1221 = vmatprep.subr.bf16.mxu0 0
      %1222 = vmatpush2.bf16.msra.mxu0 %v1172
      %1223 = vmatprep.subr.bf16.mxu0 0
      %1224 = vmatpush2.bf16.msra.mxu0 %v1171
      %1225 = vmatprep.subr.bf16.mxu0 0
      %1226 = vmatpush2.bf16.msra.mxu0 %v1170
      %1227 = vmatprep.subr.bf16.mxu0 0
      %1228 = vmatpush2.bf16.msra.mxu0 %v1169
      %1229 = vmatprep.subr.bf16.mxu0 0
      %1230 = vmatpush2.bf16.msra.mxu0 %v1168
      %1231 = vmatprep.subr.bf16.mxu0 0
      %1232 = vmatpush2.bf16.msra.mxu0 %v1167
      %1233 = vmatprep.subr.bf16.mxu0 0
      %1234 = vmatpush2.bf16.msra.mxu0 %v1166
      %1235 = vmatprep.subr.bf16.mxu0 0
      %1236 = vmatpush2.bf16.msra.mxu0 %v1165
      %1237 = vmatprep.mubr.bf16.mxu0 %v287
      %1238 = vmatmul.mubr.bf16.gmra.mxu0 %v243
      %v1239 = vpop.f32.mrf.mxu0
      %v1240 = vadd.f32 0.0, %v1239
      %v1241 = vpop.f32.mrf.mxu0
      %v1242 = vpop.f32.mrf.mxu0
      %v1243 = vadd.f32 0.0, %v1242
      %v1244 = vpop.f32.mrf.mxu0
      %1245 = vmatprep.mubr.bf16.mxu0 %v299
      %1246 = vmatmul.mubr.bf16.gmra.mxu0 %v245
      %v1247 = vpop.f32.mrf.mxu0
      %v1248 = vadd.f32 0.0, %v1247
      %v1249 = vpop.f32.mrf.mxu0
      %v1250 = vpop.f32.mrf.mxu0
      %v1251 = vadd.f32 0.0, %v1250
      %v1252 = vpop.f32.mrf.mxu0
      %1253 = vmatprep.mubr.bf16.mxu0 %v388
      %1254 = vmatmul.mubr.bf16.gmra.mxu0 %v247
      %v1255 = vpop.f32.mrf.mxu0
      %v1256 = vadd.f32 0.0, %v1255
      %v1257 = vpop.f32.mrf.mxu0
      %v1258 = vpop.f32.mrf.mxu0
      %v1259 = vadd.f32 0.0, %v1258
      %v1260 = vpop.f32.mrf.mxu0
      %1261 = vmatprep.mubr.bf16.mxu0 %v1004
      %1262 = vmatmul.mubr.bf16.gmra.mxu0 %v249
      %v1263 = vpop.f32.mrf.mxu0
      %v1264 = vadd.f32 0.0, %v1263
      %v1265 = vpop.f32.mrf.mxu0
      %v1266 = vpop.f32.mrf.mxu0
      %v1267 = vadd.f32 0.0, %v1266
      %v1268 = vpop.f32.mrf.mxu0
      %1269 = vdwg.mxu0
      %1270 = vmatprep.subr.bf16.mxu0 0
      %1271 = vmatpush1.bf16.msra.mxu0 %v1180
      %1272 = vmatprep.subr.bf16.mxu0 0
      %1273 = vmatpush1.bf16.msra.mxu0 %v1179
      %1274 = vmatprep.subr.bf16.mxu0 0
      %1275 = vmatpush1.bf16.msra.mxu0 %v1178
      %1276 = vmatprep.subr.bf16.mxu0 0
      %1277 = vmatpush1.bf16.msra.mxu0 %v1177
      %1278 = vmatprep.subr.bf16.mxu0 0
      %1279 = vmatpush1.bf16.msra.mxu0 %v1176
      %1280 = vmatprep.subr.bf16.mxu0 0
      %1281 = vmatpush1.bf16.msra.mxu0 %v1175
      %1282 = vmatprep.subr.bf16.mxu0 0
      %1283 = vmatpush1.bf16.msra.mxu0 %v1174
      %1284 = vmatprep.subr.bf16.mxu0 0
      %1285 = vmatpush1.bf16.msra.mxu0 %v1173
      %1286 = vmatprep.subr.bf16.mxu0 0
      %1287 = vmatpush2.bf16.msra.mxu0 0
      %1288 = vmatprep.subr.bf16.mxu0 0
      %1289 = vmatpush2.bf16.msra.mxu0 0
      %1290 = vmatprep.subr.bf16.mxu0 0
      %1291 = vmatpush2.bf16.msra.mxu0 0
      %1292 = vmatprep.subr.bf16.mxu0 0
      %1293 = vmatpush2.bf16.msra.mxu0 0
      %1294 = vmatprep.subr.bf16.mxu0 0
      %1295 = vmatpush2.bf16.msra.mxu0 0
      %1296 = vmatprep.subr.bf16.mxu0 0
      %1297 = vmatpush2.bf16.msra.mxu0 0
      %1298 = vmatprep.subr.bf16.mxu0 0
      %1299 = vmatpush2.bf16.msra.mxu0 0
      %1300 = vmatprep.subr.bf16.mxu0 0
      %1301 = vmatpush2.bf16.msra.mxu0 0
      %1302 = vmatprep.mubr.bf16.mxu0 0
      %1303 = vmatmul.mubr.bf16.gmra.mxu0 %v321
      %v1304 = vpop.f32.mrf.mxu0
      %v1305 = vadd.f32 %v1240, %v1304
      %v1306 = vpop.f32.mrf.mxu0
      %v1307 = vpop.f32.mrf.mxu0
      %v1308 = vadd.f32 %v1243, %v1307
      %v1309 = vpop.f32.mrf.mxu0
      %1310 = vmatprep.mubr.bf16.mxu0 0
      %1311 = vmatmul.mubr.bf16.gmra.mxu0 %v324
      %v1312 = vpop.f32.mrf.mxu0
      %v1313 = vadd.f32 %v1248, %v1312
      %v1314 = vpop.f32.mrf.mxu0
      %v1315 = vpop.f32.mrf.mxu0
      %v1316 = vadd.f32 %v1251, %v1315
      %v1317 = vpop.f32.mrf.mxu0
      %1318 = vmatprep.mubr.bf16.mxu0 0
      %1319 = vmatmul.mubr.bf16.gmra.mxu0 %v394
      %v1320 = vpop.f32.mrf.mxu0
      %v1321 = vadd.f32 %v1256, %v1320
      %v1322 = vpop.f32.mrf.mxu0
      %v1323 = vpop.f32.mrf.mxu0
      %v1324 = vadd.f32 %v1259, %v1323
      %v1325 = vpop.f32.mrf.mxu0
      %1326 = vmatprep.mubr.bf16.mxu0 0
      %1327 = vmatmul.mubr.bf16.gmra.mxu0 %v1010
      %v1328 = vpop.f32.mrf.mxu0
      %v1329 = vadd.f32 %v1264, %v1328
      %v1330 = vpop.f32.mrf.mxu0
      %v1331 = vpop.f32.mrf.mxu0
      %v1332 = vadd.f32 %v1267, %v1331
      %v1333 = vpop.f32.mrf.mxu0
      %1334 = vdwg.mxu0
      %v1335 = vadd.f32 %v963, %v1305
      %v1336 = vadd.f32 %v966, %v1308
      %v1337 = vadd.f32 %v971, %v1313
      %v1338 = vadd.f32 %v974, %v1316
      %v1339 = vadd.f32 %v979, %v1321
      %v1340 = vadd.f32 %v982, %v1324
      %v1341 = vadd.f32 %v987, %v1329
      %v1342 = vadd.f32 %v990, %v1332
      %v1343 = vpack.c.bf16 %v1336, %v1335
      %v1344 = vpack.c.bf16 %v1338, %v1337
      %v1345 = vpack.c.bf16 %v1340, %v1339
      %v1346 = vpack.c.bf16 %v1342, %v1341
      %v1351 = vunpack.c.l.b16 %v1343
      %v1352 = vunpack.c.h.b16 %v1343
      %v1353 = vunpack.c.l.b16 %v1344
      %v1354 = vunpack.c.h.b16 %v1344
      %v1355 = vunpack.c.l.b16 %v1345
      %v1356 = vunpack.c.h.b16 %v1345
      %v1357 = vunpack.c.l.b16 %v1346
      %v1358 = vunpack.c.h.b16 %v1346
      %v1359 = vpack.c.b16 %v1351, %v1351
      %v1360 = vpack.c.b16 %v1352, %v1352
      %v1361 = vpack.c.b16 %v1353, %v1353
      %v1362 = vpack.c.b16 %v1354, %v1354
      %v1363 = vpack.c.b16 %v1355, %v1355
      %v1364 = vpack.c.b16 %v1356, %v1356
      %v1365 = vpack.c.b16 %v1357, %v1357
      %v1366 = vpack.c.b16 %v1358, %v1358
      %1375 = vst [vmem:[%s207] sm:$0xf] %v1359
      %1376 = vst [vmem:[%s207 + $0x4] sm:$0xf] %v1360
      %1377 = vst [vmem:[%s207 + $0x8] sm:$0xf] %v1361
      %1378 = vst [vmem:[%s207 + $0xc] sm:$0xf] %v1362
      %1379 = vst [vmem:[%s207 + $0x10] sm:$0xf] %v1363
      %1380 = vst [vmem:[%s207 + $0x14] sm:$0xf] %v1364
      %1381 = vst [vmem:[%s207 + $0x18] sm:$0xf] %v1365
      %1382 = vst [vmem:[%s207 + $0x1c] sm:$0xf] %v1366
      %v1383 = vadd.f32 %v1335, %v1336
      %v1384 = vadd.f32 %v1383, %v1337
      %v1385 = vadd.f32 %v1384, %v1338
      %v1386 = vadd.f32 %v1385, %v1339
      %v1387 = vadd.f32 %v1386, %v1340
      %v1388 = vadd.f32 %v1387, %v1341
      %v1389 = vadd.f32 %v1388, %v1342
      %v1390 = vrot.slane %v1389, 4
      %v1391 = vadd.f32 %v1389, %v1390
      %v1392 = vrot.slane %v1391, 2
      %v1393 = vadd.f32 %v1391, %v1392
      %v1394 = vrot.slane %v1393, 1
      %v1395 = vadd.f32 %v1393, %v1394
      %v1396 = vmul.f32 %v1335, %v1335
      %v1397 = vmul.f32 %v1336, %v1336
      %v1398 = vmul.f32 %v1337, %v1337
      %v1399 = vmul.f32 %v1338, %v1338
      %v1400 = vmul.f32 %v1339, %v1339
      %v1401 = vmul.f32 %v1340, %v1340
      %v1402 = vmul.f32 %v1341, %v1341
      %v1403 = vmul.f32 %v1342, %v1342
      %v1404 = vadd.f32 %v1396, %v1397
      %v1405 = vadd.f32 %v1404, %v1398
      %v1406 = vadd.f32 %v1405, %v1399
      %v1407 = vadd.f32 %v1406, %v1400
      %v1408 = vadd.f32 %v1407, %v1401
      %v1409 = vadd.f32 %v1408, %v1402
      %v1410 = vadd.f32 %v1409, %v1403
      %v1411 = vrot.slane %v1410, 4
      %v1412 = vadd.f32 %v1410, %v1411
      %v1413 = vrot.slane %v1412, 2
      %v1414 = vadd.f32 %v1412, %v1413
      %v1415 = vrot.slane %v1414, 1
      %v1416 = vadd.f32 %v1414, %v1415
      %vm1417 = vcmask 1040384
      %v1418 = vsel %vm1417, %v1395, %v1416
      %1419 = vst [vmem:[%s216] sm:$0x3] %v1418
      %s1420 = smul.u32 4, %s20
      %p1421 = scmp.lt.s32.totalorder %s19, 1
      %s1422 = scalar_select %p1421, %s19, 1
      %p1423 = scmp.lt.s32.totalorder %s1420, 15
      %s1424 = scalar_select %p1423, %s1420, 15
      %s1425 = smul.addr %s1424, 2
      %s1426 = smul.addr %s1422, 32
      %s1427 = sadd.s32 %s1425, %s1426
      %s1428 = smul.addr %s1427, 4
      %s1429 = scalar_lea.vmem %s2, %s1428
      %p1430 = scmp.lt.s32.totalorder %s19, 1
      %s1431 = scalar_select %p1430, %s19, 1
      %p1432 = scmp.lt.s32.totalorder %s20, 3
      %s1433 = scalar_select %p1432, %s20, 3
      %s1434 = smul.addr %s1431, 4
      %s1435 = sadd.s32 %s1433, %s1434
      %s1436 = smul.addr %s1435, 2
      %s1437 = scalar_lea.vmem %s3, %s1436
      // Predicated region
      $region29: #{residual_blk_forward.3} parent=27 // pred_check
        %p1438 = pneg %p94
      $region30: #{residual_blk_forward.3} parent=27 // pred_check_branch
        %1440 = sbr.rel (%p1438) target = $region32
      $region31: #{residual_blk_forward.3} parent=27 // pred_region
        %s1441 = smul.u32 4, %s20
      $region32: #{residual_blk_forward.3} parent=27 // pred_fallthru
        _
      // Predicated region
      $region33: #{residual_blk_forward.3} parent=27 // pred_check
        %p1442 = pneg %p122
      $region34: #{residual_blk_forward.3} parent=27 // pred_check_branch
        %1444 = sbr.rel (%p1442) target = $region36
      $region35: #{residual_blk_forward.3} parent=27 // pred_region
        _
      $region36: #{residual_blk_forward.3} parent=27 // pred_fallthru
        _
    $region28: #{residual_blk_forward.3} parent=5 // pred_fallthru
      _
    %p1445 = scmp.le.s32.totalorder 2, %s10
    // Predicated region
    $region37: #{residual_blk_forward.3} parent=5 // pred_check
      %p1446 = pneg %p1445
    $region38: #{residual_blk_forward.3} parent=5 // pred_check_branch
      %1448 = sbr.rel (%p1446) target = $region40
    $region39: #{residual_blk_forward.3} parent=5 // pred_region
      %s1449 = ssub.s32 %s10, 2
      // Predicated region
      $region41: #{residual_blk_forward.3} parent=39 // pred_check
        %p1450 = pneg %p100
      $region42: #{residual_blk_forward.3} parent=39 // pred_check_branch
        %1452 = sbr.rel (%p1450) target = $region44
      $region43: #{residual_blk_forward.3} parent=39 // pred_region
        %s1453 = smul.u32 4, %s22
        %p1454 = scmp.lt.s32.totalorder %s21, 1
        %s1455 = scalar_select %p1454, %s21, 1
        %p1456 = scmp.lt.s32.totalorder %s1453, 15
        %s1457 = scalar_select %p1456, %s1453, 15
        %s1458 = smul.addr %s1457, 2
        %s1459 = smul.addr %s1455, 32
        %s1460 = sadd.s32 %s1458, %s1459
        %s1461 = smul.addr %s1460, 4
        %s1462 = scalar_lea.vmem %s2, %s1461
      $region44: #{residual_blk_forward.3} parent=39 // pred_fallthru
        _
      // Predicated region
      $region45: #{residual_blk_forward.3} parent=39 // pred_check
        %p1463 = pneg %p128
      $region46: #{residual_blk_forward.3} parent=39 // pred_check_branch
        %1465 = sbr.rel (%p1463) target = $region48
      $region47: #{residual_blk_forward.3} parent=39 // pred_region
        %p1466 = scmp.lt.s32.totalorder %s21, 1
        %s1467 = scalar_select %p1466, %s21, 1
        %p1468 = scmp.lt.s32.totalorder %s22, 3
        %s1469 = scalar_select %p1468, %s22, 3
        %s1470 = smul.addr %s1467, 4
        %s1471 = sadd.s32 %s1469, %s1470
        %s1472 = smul.addr %s1471, 2
        %s1473 = scalar_lea.vmem %s3, %s1472
      $region48: #{residual_blk_forward.3} parent=39 // pred_fallthru
        _
    $region40: #{residual_blk_forward.3} parent=5 // pred_fallthru
      _
  $region6: #{residual_blk_forward.3} parent=0 // loop_footer
    %s14 = sadd.s32 1, %s10
  $region7: #{residual_blk_forward.3} parent=0 // loop_footer_branch
    %9 = sbr.rel target = $region3
  $region8: #{residual_blk_forward.3} parent=0 // loop_exit
    _

// kernel: residual_blk_forward.4
$region0: #{residual_blk_forward.4}
  #allocation0 [shape = 'u32[]', space=smem, size = 0x4, offset = 0x4, fixed_abs, tag = 'smem constant byte address 0x4 - core index']
  #allocation1 [shape = 'u32[144,128]{1,0:T(1,128)}', space=vmem, size = 0x12000, scoped, tag = 'internal scratch']
  %s0 = inlined_call_operand.vmem [shape: bf16[2,16,16,128], index: 0, kind: input, shape index: {}]
  %s1 = inlined_call_operand.vmem [shape: f32[1,128], index: 1, kind: input, shape index: {}]
  %s2 = inlined_call_operand.vmem [shape: f32[1,128], index: 2, kind: input, shape index: {}]
  %s3 = inlined_call_operand.vmem [shape: bf16[3,384,128], index: 3, kind: input, shape index: {}]
  %s4 = inlined_call_operand.vmem [shape: bf16[2,16,16,128], index: 4, kind: output, shape index: {0}]
  %s5 = inlined_call_operand.vmem [shape: f32[2,4,2,128], index: 5, kind: output, shape index: {1}]
  %6 = xla_tuple %s4, %s5
  %s7 = sld [smem:[#allocation0]]
  $region57: #{residual_blk_forward.4} parent=0
    _
  %s9 = ssub.s32 1, %s7
  %s10 = scalar_select 0, %s9, %s7
  loop: start=0, step=1, limit=10
  $region2: #{residual_blk_forward.4} parent=0 // loop_pre_header
    _
  $region3: #{residual_blk_forward.4} parent=0 // loop_header
    %s12 = sphi 0, %s16
    %p13 = scmp.ge.s32.totalorder %s12, 10
    %s19 = sphi 0, %s31
    %s20 = sphi 0, %s27
    %s21 = sphi 0, %s19
    %s22 = sphi 0, %s20
    %s23 = sphi 0, %s21
    %s24 = sphi 0, %s22
    %s34 = sphi 0, %s36
    %s37 = sphi 0, %s34
    %s38 = sphi 0, %s37
    %s54 = sphi 0, %s38
    %s58 = sphi 0, %s58
    %s60 = sphi 0, %s58
    %s61 = sphi 0, %s60
    %s75 = sphi 0, %s61
    %s79 = sphi 0, %s79
    %s81 = sphi 0, %s79
    %s82 = sphi 0, %s81
    %s96 = sphi 0, %s82
    %s100 = sphi 0, %s100
    %s102 = sphi 0, %s100
    %s103 = sphi 0, %s102
    %s117 = sphi 0, %s103
    %s125 = sphi 0, %s127
    %s128 = sphi 0, %s125
    %s129 = sphi 0, %s128
    %s145 = sphi 0, %s129
    %s153 = sphi 0, %s155
    %s156 = sphi 0, %s153
    %s157 = sphi 0, %s156
    %s173 = sphi 0, %s157
  $region4: #{residual_blk_forward.4} parent=0 // loop_header_branch
    %15 = sbr.rel (%p13) target = $region8
  $region5: #{residual_blk_forward.4} parent=0 // loop_body
    %s17 = ssub.s32 %s12, 1
    %s18 = ssub.s32 %s12, 2
    %s25 = sadd.s32 1, %s20
    %p26 = scmp.ge.s32.totalorder %s25, 4
    %s27 = scalar_select %p26, 0, %s25
    %s28 = sadd.s32 1, %s19
    %s29 = scalar_select %p26, %s28, %s19
    %p30 = scmp.ge.s32.totalorder %s29, 2
    %s31 = scalar_select %p30, 0, %s29
    %s32 = ssub.s32 %s19, %s31
    %p33 = scmp.eq.s32.totalorder %s32, 0
    %s35 = sadd.s32 %s34, 1
    %s36 = scalar_select %p33, %s34, %s35
    %p39 = pneg %p33
    %p40 = scmp.eq.s32.totalorder %s12, 7
    %p41 = por %p39, %p40
    %p42 = scmp.ne.s32.totalorder %s34, %s37
    %p43 = scmp.eq.s32.totalorder %s12, 0
    %p44 = por %p42, %p43
    %p45 = scmp.ne.s32.totalorder %s34, %s37
    %p46 = scmp.eq.s32.totalorder %s17, 7
    %p47 = por %p45, %p46
    %p48 = scmp.ne.s32.totalorder %s37, %s38
    %p49 = scmp.eq.s32.totalorder %s17, 0
    %p50 = por %p48, %p49
    %p51 = scmp.ne.s32.totalorder %s37, %s38
    %p52 = scmp.eq.s32.totalorder %s18, 7
    %p53 = por %p51, %p52
    %p55 = scmp.ne.s32.totalorder %s38, %s54
    %p56 = scmp.eq.s32.totalorder %s18, 0
    %p57 = por %p55, %p56
    %s59 = sadd.s32 %s58, 1
    %p62 = scmp.eq.s32.totalorder %s12, 7
    %p63 = scmp.ne.s32.totalorder %s58, %s60
    %p64 = scmp.eq.s32.totalorder %s12, 0
    %p65 = por %p63, %p64
    %p66 = scmp.ne.s32.totalorder %s58, %s60
    %p67 = scmp.eq.s32.totalorder %s17, 7
    %p68 = por %p66, %p67
    %p69 = scmp.ne.s32.totalorder %s60, %s61
    %p70 = scmp.eq.s32.totalorder %s17, 0
    %p71 = por %p69, %p70
    %p72 = scmp.ne.s32.totalorder %s60, %s61
    %p73 = scmp.eq.s32.totalorder %s18, 7
    %p74 = por %p72, %p73
    %p76 = scmp.ne.s32.totalorder %s61, %s75
    %p77 = scmp.eq.s32.totalorder %s18, 0
    %p78 = por %p76, %p77
    %s80 = sadd.s32 %s79, 1
    %p83 = scmp.eq.s32.totalorder %s12, 7
    %p84 = scmp.ne.s32.totalorder %s79, %s81
    %p85 = scmp.eq.s32.totalorder %s12, 0
    %p86 = por %p84, %p85
    %p87 = scmp.ne.s32.totalorder %s79, %s81
    %p88 = scmp.eq.s32.totalorder %s17, 7
    %p89 = por %p87, %p88
    %p90 = scmp.ne.s32.totalorder %s81, %s82
    %p91 = scmp.eq.s32.totalorder %s17, 0
    %p92 = por %p90, %p91
    %p93 = scmp.ne.s32.totalorder %s81, %s82
    %p94 = scmp.eq.s32.totalorder %s18, 7
    %p95 = por %p93, %p94
    %p97 = scmp.ne.s32.totalorder %s82, %s96
    %p98 = scmp.eq.s32.totalorder %s18, 0
    %p99 = por %p97, %p98
    %s101 = sadd.s32 %s100, 1
    %p104 = scmp.eq.s32.totalorder %s12, 7
    %p105 = scmp.ne.s32.totalorder %s100, %s102
    %p106 = scmp.eq.s32.totalorder %s12, 0
    %p107 = por %p105, %p106
    %p108 = scmp.ne.s32.totalorder %s100, %s102
    %p109 = scmp.eq.s32.totalorder %s17, 7
    %p110 = por %p108, %p109
    %p111 = scmp.ne.s32.totalorder %s102, %s103
    %p112 = scmp.eq.s32.totalorder %s17, 0
    %p113 = por %p111, %p112
    %p114 = scmp.ne.s32.totalorder %s102, %s103
    %p115 = scmp.eq.s32.totalorder %s18, 7
    %p116 = por %p114, %p115
    %p118 = scmp.ne.s32.totalorder %s103, %s117
    %p119 = scmp.eq.s32.totalorder %s18, 0
    %p120 = por %p118, %p119
    %s121 = ssub.s32 %s19, %s31
    %s122 = ssub.s32 %s20, %s27
    %s123 = sor.u32 %s121, %s122
    %p124 = scmp.eq.s32.totalorder %s123, 0
    %s126 = sadd.s32 %s125, 1
    %s127 = scalar_select %p124, %s125, %s126
    %p130 = pneg %p124
    %p131 = scmp.eq.s32.totalorder %s12, 7
    %p132 = por %p130, %p131
    %p133 = scmp.ne.s32.totalorder %s125, %s128
    %p134 = scmp.eq.s32.totalorder %s12, 0
    %p135 = por %p133, %p134
    %p136 = scmp.ne.s32.totalorder %s125, %s128
    %p137 = scmp.eq.s32.totalorder %s17, 7
    %p138 = por %p136, %p137
    %p139 = scmp.ne.s32.totalorder %s128, %s129
    %p140 = scmp.eq.s32.totalorder %s17, 0
    %p141 = por %p139, %p140
    %p142 = scmp.ne.s32.totalorder %s128, %s129
    %p143 = scmp.eq.s32.totalorder %s18, 7
    %p144 = por %p142, %p143
    %p146 = scmp.ne.s32.totalorder %s129, %s145
    %p147 = scmp.eq.s32.totalorder %s18, 0
    %p148 = por %p146, %p147
    %s149 = ssub.s32 %s19, %s31
    %s150 = ssub.s32 %s20, %s27
    %s151 = sor.u32 %s149, %s150
    %p152 = scmp.eq.s32.totalorder %s151, 0
    %s154 = sadd.s32 %s153, 1
    %s155 = scalar_select %p152, %s153, %s154
    %p158 = pneg %p152
    %p159 = scmp.eq.s32.totalorder %s12, 7
    %p160 = por %p158, %p159
    %p161 = scmp.ne.s32.totalorder %s153, %s156
    %p162 = scmp.eq.s32.totalorder %s12, 0
    %p163 = por %p161, %p162
    %p164 = scmp.ne.s32.totalorder %s153, %s156
    %p165 = scmp.eq.s32.totalorder %s17, 7
    %p166 = por %p164, %p165
    %p167 = scmp.ne.s32.totalorder %s156, %s157
    %p168 = scmp.eq.s32.totalorder %s17, 0
    %p169 = por %p167, %p168
    %p170 = scmp.ne.s32.totalorder %s156, %s157
    %p171 = scmp.eq.s32.totalorder %s18, 7
    %p172 = por %p170, %p171
    %p174 = scmp.ne.s32.totalorder %s157, %s173
    %p175 = scmp.eq.s32.totalorder %s18, 0
    %p176 = por %p174, %p175
    %p177 = scmp.le.s32.totalorder 1, %s12
    %p178 = scmp.lt.s32.totalorder %s12, 9
    %p179 = pnand %p177, %p178
    %p180 = pneg %p179
    // Predicated region
    $region9: #{residual_blk_forward.4} parent=5 // pred_check
      _
    $region10: #{residual_blk_forward.4} parent=5 // pred_check_branch
      %182 = sbr.rel (%p179) target = $region12
    $region11: #{residual_blk_forward.4} parent=5 // pred_region
      %s183 = ssub.s32 %s12, 1
      // Predicated region
      $region13: #{residual_blk_forward.4} parent=11 // pred_check
        %p184 = pneg %p71
      $region14: #{residual_blk_forward.4} parent=11 // pred_check_branch
        %186 = sbr.rel (%p184) target = $region16
      $region15: #{residual_blk_forward.4} parent=11 // pred_region
        _
      $region16: #{residual_blk_forward.4} parent=11 // pred_fallthru
        _
      // Predicated region
      $region17: #{residual_blk_forward.4} parent=11 // pred_check
        %p187 = pneg %p92
      $region18: #{residual_blk_forward.4} parent=11 // pred_check_branch
        %189 = sbr.rel (%p187) target = $region20
      $region19: #{residual_blk_forward.4} parent=11 // pred_region
        _
      $region20: #{residual_blk_forward.4} parent=11 // pred_fallthru
        _
      // Predicated region
      $region21: #{residual_blk_forward.4} parent=11 // pred_check
        %p190 = pneg %p113
      $region22: #{residual_blk_forward.4} parent=11 // pred_check_branch
        %192 = sbr.rel (%p190) target = $region24
      $region23: #{residual_blk_forward.4} parent=11 // pred_region
        _
      $region24: #{residual_blk_forward.4} parent=11 // pred_fallthru
        _
    $region12: #{residual_blk_forward.4} parent=5 // pred_fallthru
      _
    %p193 = scmp.lt.s32.totalorder %s12, 8
    // Predicated region
    $region25: #{residual_blk_forward.4} parent=5 // pred_check
      %p194 = pneg %p193
    $region26: #{residual_blk_forward.4} parent=5 // pred_check_branch
      %196 = sbr.rel (%p194) target = $region28
    $region27: #{residual_blk_forward.4} parent=5 // pred_region
      // Predicated region
      $region29: #{residual_blk_forward.4} parent=27 // pred_check
        %p197 = pneg %p44
      $region30: #{residual_blk_forward.4} parent=27 // pred_check_branch
        %199 = sbr.rel (%p197) target = $region32
      $region31: #{residual_blk_forward.4} parent=27 // pred_region
        %p200 = scmp.lt.s32.totalorder %s19, 1
        %s201 = scalar_select %p200, %s19, 1
        %s202 = smul.addr %s201, 32
        %s203 = smul.addr %s202, 4
        %s204 = scalar_lea.vmem %s0, %s203
      $region32: #{residual_blk_forward.4} parent=27 // pred_fallthru
        _
    $region28: #{residual_blk_forward.4} parent=5 // pred_fallthru
      _
    %p205 = scmp.le.s32.totalorder 1, %s12
    %p206 = scmp.lt.s32.totalorder %s12, 9
    %p207 = pnand %p205, %p206
    %p208 = pneg %p207
    // Predicated region
    $region33: #{residual_blk_forward.4} parent=5 // pred_check
      _
    $region34: #{residual_blk_forward.4} parent=5 // pred_check_branch
      %210 = sbr.rel (%p207) target = $region36
    $region35: #{residual_blk_forward.4} parent=5 // pred_region
      %s211 = ssub.s32 %s12, 1
      %p212 = scmp.lt.s32.totalorder %s21, 1
      %s213 = scalar_select %p212, %s21, 1
      %s214 = smul.addr %s213, 32
      %s215 = smul.addr %s214, 4
      %s216 = scalar_lea.vmem %s0, %s215
      %p217 = pneg %p50
      %p218 = pneg %p47
      %p219 = pneg %p71
      %p220 = pneg %p68
      %p221 = pneg %p92
      %p222 = pneg %p89
      %p223 = pneg %p113
      %p224 = pneg %p110
      %p225 = pneg %p141
      %p226 = pneg %p138
      %s227 = smul.u32 4, %s22
      %p228 = scmp.lt.s32.totalorder %s21, 1
      %s229 = scalar_select %p228, %s21, 1
      %p230 = scmp.lt.s32.totalorder %s227, 15
      %s231 = scalar_select %p230, %s227, 15
      %s232 = smul.addr %s231, 2
      %s233 = smul.addr %s229, 32
      %s234 = sadd.s32 %s232, %s233
      %s235 = smul.addr %s234, 4
      %s236 = scalar_lea.vmem %s4, %s235
      %p237 = pneg %p169
      %p238 = pneg %p166
      %p239 = scmp.lt.s32.totalorder %s21, 1
      %s240 = scalar_select %p239, %s21, 1
      %p241 = scmp.lt.s32.totalorder %s22, 3
      %s242 = scalar_select %p241, %s22, 3
      %s243 = smul.addr %s240, 4
      %s244 = sadd.s32 %s242, %s243
      %s245 = smul.addr %s244, 2
      %s246 = scalar_lea.vmem %s5, %s245
      %p247 = scmp.lt.s32.totalorder %s21, 1
      %s248 = scalar_select %p247, %s21, 1
      %s249 = smul.addr %s248, 32
      %s250 = smul.addr %s249, 4
      %s251 = scalar_lea.vmem %s0, %s250
      %s252 = smul.u32 4, %s22
      %p253 = scmp.lt.s32.totalorder %s21, 1
      %s254 = scalar_select %p253, %s21, 1
      %p255 = scmp.lt.s32.totalorder %s252, 15
      %s256 = scalar_select %p255, %s252, 15
      %s257 = smul.addr %s256, 2
      %s258 = smul.addr %s254, 32
      %s259 = sadd.s32 %s257, %s258
      %s260 = smul.addr %s259, 4
      %s261 = scalar_lea.vmem %s4, %s260
      %s262 = smul.u32 4, %s22
      %p263 = scmp.lt.s32.totalorder %s21, 1
      %s264 = scalar_select %p263, %s21, 1
      %p265 = scmp.lt.s32.totalorder %s22, 3
      %s266 = scalar_select %p265, %s22, 3
      %s267 = smul.addr %s264, 4
      %s268 = sadd.s32 %s266, %s267
      %s269 = smul.addr %s268, 2
      %s270 = scalar_lea.vmem %s5, %s269
      %s272 = smul.u32 %s22, 4
      %v273 = vld [vmem:[%s1] sm:$0x1]
      %v274 = vld [vmem:[%s2] sm:$0x1]
      %p275 = scmp.gt.s32.totalorder %s272, 0
      %s276 = ssub.s32 %s272, 1
      %p277 = scmp.gt.s32.totalorder %s276, 0
      %s278 = scalar_select %p277, %s276, 0
      %s279 = smul.u32 %s278, 2
      %s280 = smul.addr %s279, 4
      %s281 = scalar_lea.vmem %s251, %s280
      %v282 = vld [vmem:[%s281] sm:$0xf]
      %v283 = vld [vmem:[%s281 + $0x4] sm:$0xf]
      %v284 = vunpack.c.l.bf16 %v282
      %v285 = vunpack.c.l.bf16 %v283
      %v287 = vlaneseq
      %v288 = vshrl.u32 %v287, 7
      %v289 = vsub.s32 0, %v288
      %v290 = vrot.slane %v273, %v289
      %v292 = vmul.f32 %v284, %v290
      %v293 = vmul.f32 %v285, %v290
      %v295 = vlaneseq
      %v296 = vshrl.u32 %v295, 7
      %v297 = vsub.s32 0, %v296
      %v298 = vrot.slane %v274, %v297
      %v300 = vadd.f32 %v292, %v298
      %v301 = vadd.f32 %v293, %v298
      %v302 = vmax.f32 %v300, 0.0
      %v303 = vmax.f32 %v301, 0.0
      %s304 = scalar_select %p275, 1, 0
      %v305 = vstv %s304
      %vm306 = vcmp.eq.s32.totalorder %v305, 1
      %v307 = vsel %vm306, %v302, 0.0
      %v308 = vsel %vm306, %v303, 0.0
      %s309 = smul.u32 %s272, 2
      %s310 = smul.addr %s309, 4
      %s311 = scalar_lea.vmem %s251, %s310
      %v312 = vld [vmem:[%s311] sm:$0xf]
      %v313 = vld [vmem:[%s311 + $0x4] sm:$0xf]
      %v314 = vld [vmem:[%s311 + $0x8] sm:$0xf]
      %v315 = vld [vmem:[%s311 + $0xc] sm:$0xf]
      %v316 = vld [vmem:[%s311 + $0x10] sm:$0xf]
      %v317 = vld [vmem:[%s311 + $0x14] sm:$0xf]
      %v318 = vld [vmem:[%s311 + $0x18] sm:$0xf]
      %v319 = vld [vmem:[%s311 + $0x1c] sm:$0xf]
      %v320 = vunpack.c.l.bf16 %v312
      %v321 = vunpack.c.l.bf16 %v313
      %v322 = vunpack.c.l.bf16 %v314
      %v323 = vunpack.c.l.bf16 %v315
      %v324 = vunpack.c.l.bf16 %v316
      %v325 = vunpack.c.l.bf16 %v317
      %v326 = vunpack.c.l.bf16 %v318
      %v327 = vunpack.c.l.bf16 %v319
      %v328 = vmul.f32 %v320, %v290
      %v329 = vmul.f32 %v321, %v290
      %v330 = vmul.f32 %v322, %v290
      %v331 = vmul.f32 %v323, %v290
      %v332 = vmul.f32 %v324, %v290
      %v333 = vmul.f32 %v325, %v290
      %v334 = vmul.f32 %v326, %v290
      %v335 = vmul.f32 %v327, %v290
      %v336 = vadd.f32 %v328, %v298
      %v337 = vadd.f32 %v329, %v298
      %v338 = vadd.f32 %v330, %v298
      %v339 = vadd.f32 %v331, %v298
      %v340 = vadd.f32 %v332, %v298
      %v341 = vadd.f32 %v333, %v298
      %v342 = vadd.f32 %v334, %v298
      %v343 = vadd.f32 %v335, %v298
      %v344 = vmax.f32 %v336, 0.0
      %v345 = vmax.f32 %v337, 0.0
      %v346 = vmax.f32 %v338, 0.0
      %v347 = vmax.f32 %v339, 0.0
      %v348 = vmax.f32 %v340, 0.0
      %v349 = vmax.f32 %v341, 0.0
      %v350 = vmax.f32 %v342, 0.0
      %v351 = vmax.f32 %v343, 0.0
      %s352 = sadd.s32 %s272, 4
      %p353 = scmp.lt.s32.totalorder %s352, 16
      %p354 = scmp.lt.s32.totalorder %s352, 15
      %s355 = scalar_select %p354, %s352, 15
      %s356 = smul.u32 %s355, 2
      %s357 = smul.addr %s356, 4
      %s358 = scalar_lea.vmem %s251, %s357
      %v359 = vld [vmem:[%s358] sm:$0xf]
      %v360 = vld [vmem:[%s358 + $0x4] sm:$0xf]
      %v361 = vunpack.c.l.bf16 %v359
      %v362 = vunpack.c.l.bf16 %v360
      %v363 = vmul.f32 %v361, %v290
      %v364 = vmul.f32 %v362, %v290
      %v365 = vadd.f32 %v363, %v298
      %v366 = vadd.f32 %v364, %v298
      %v367 = vmax.f32 %v365, 0.0
      %v368 = vmax.f32 %v366, 0.0
      %s369 = scalar_select %p353, 1, 0
      %v370 = vstv %s369
      %vm371 = vcmp.eq.s32.totalorder %v370, 1
      %v372 = vsel %vm371, %v367, 0.0
      %v373 = vsel %vm371, %v368, 0.0
      %v374 = vpack.c.bf16 %v308, %v307
      %v375 = vpack.c.bf16 %v345, %v344
      %v376 = vpack.c.bf16 %v347, %v346
      %v377 = vpack.c.bf16 %v349, %v348
      %v378 = vpack.c.bf16 %v351, %v350
      %v379 = vpack.c.bf16 %v373, %v372
      %v381 = vshrl.u32 %v374, 16
      %v383 = vrot.slane %v381, 7
      %v384 = vshll.u32 %v374, 16
      %v386 = vor.u32 %v383, %v384
      %v388 = vshrl.u32 %v375, 16
      %v390 = vrot.slane %v388, 7
      %v391 = vshll.u32 %v375, 16
      %v393 = vor.u32 %v390, %v391
      %v395 = vshrl.u32 %v376, 16
      %v397 = vrot.slane %v395, 7
      %v398 = vshll.u32 %v376, 16
      %v400 = vor.u32 %v397, %v398
      %v402 = vshrl.u32 %v377, 16
      %v404 = vrot.slane %v402, 7
      %v405 = vshll.u32 %v377, 16
      %v407 = vor.u32 %v404, %v405
      %v409 = vshrl.u32 %v378, 16
      %v411 = vrot.slane %v409, 7
      %v412 = vshll.u32 %v378, 16
      %v414 = vor.u32 %v411, %v412
      %v416 = vshrl.u32 %v379, 16
      %v418 = vrot.slane %v416, 7
      %v419 = vshll.u32 %v379, 16
      %v421 = vor.u32 %v418, %v419
      %vm434 = vcmask 1040384
      %vm435 = vsmask.f32 256
      %vm436 = vmand %vm434, %vm435
      %v437 = vsel %vm436, 0, %v386
      %v438 = vsel %vm436, 0, %v393
      %v439 = vsel %vm436, 0, %v400
      %v440 = vsel %vm436, 0, %v407
      %v441 = vsel %vm436, 0, %v414
      %v442 = vsel %vm436, 0, %v421
      %v443 = vsel %vm436, %v383, 0
      %v444 = vsel %vm436, %v390, 0
      %v445 = vsel %vm436, %v397, 0
      %v446 = vsel %vm436, %v404, 0
      %v447 = vsel %vm436, %v411, 0
      %v448 = vsel %vm436, %v418, 0
      %vm449 = vsmask.f32 7424
      %v451 = vshrl.u32 %v437, 16
      %v453 = vshll.u32 %v437, 16
      %v455 = vrot.slane %v453, 1
      %v456 = vor.u32 %v451, %v455
      %v458 = vshll.u32 %v443, 16
      %v460 = vrot.slane %v458, 1
      %v461 = vsel %vm449, %v456, %v460
      %v463 = vshrl.u32 %v438, 16
      %v465 = vshll.u32 %v438, 16
      %v467 = vrot.slane %v465, 1
      %v468 = vor.u32 %v463, %v467
      %v470 = vshll.u32 %v444, 16
      %v472 = vrot.slane %v470, 1
      %v473 = vsel %vm449, %v468, %v472
      %v475 = vshrl.u32 %v439, 16
      %v477 = vshll.u32 %v439, 16
      %v479 = vrot.slane %v477, 1
      %v480 = vor.u32 %v475, %v479
      %v482 = vshll.u32 %v445, 16
      %v484 = vrot.slane %v482, 1
      %v485 = vsel %vm449, %v480, %v484
      %v487 = vshrl.u32 %v440, 16
      %v489 = vshll.u32 %v440, 16
      %v491 = vrot.slane %v489, 1
      %v492 = vor.u32 %v487, %v491
      %v494 = vshll.u32 %v446, 16
      %v496 = vrot.slane %v494, 1
      %v497 = vsel %vm449, %v492, %v496
      %vm510 = vcmask 1046528
      %v511 = vrot.slane %v437, 1
      %v512 = vrot.slane %v443, 1
      %v513 = vsel %vm510, %v511, %v512
      %v514 = vrot.slane %v438, 1
      %v515 = vrot.slane %v444, 1
      %v516 = vsel %vm510, %v514, %v515
      %v517 = vrot.slane %v439, 1
      %v518 = vrot.slane %v445, 1
      %v519 = vsel %vm510, %v517, %v518
      %v520 = vrot.slane %v440, 1
      %v521 = vrot.slane %v446, 1
      %v522 = vsel %vm510, %v520, %v521
      %v527 = vld [vmem:[%s3] sm:$0xf]
      %v528 = vld [vmem:[%s3 + $0x4] sm:$0xf]
      %v529 = vld [vmem:[%s3 + $0x8] sm:$0xf]
      %v530 = vld [vmem:[%s3 + $0xc] sm:$0xf]
      %v531 = vld [vmem:[%s3 + $0x10] sm:$0xf]
      %v532 = vld [vmem:[%s3 + $0x14] sm:$0xf]
      %v533 = vld [vmem:[%s3 + $0x18] sm:$0xf]
      %v534 = vld [vmem:[%s3 + $0x1c] sm:$0xf]
      %v535 = vld [vmem:[%s3 + $0x20] sm:$0xf]
      %v536 = vld [vmem:[%s3 + $0x24] sm:$0xf]
      %v537 = vld [vmem:[%s3 + $0x28] sm:$0xf]
      %v538 = vld [vmem:[%s3 + $0x2c] sm:$0xf]
      %v539 = vld [vmem:[%s3 + $0x30] sm:$0xf]
      %v540 = vld [vmem:[%s3 + $0x34] sm:$0xf]
      %v541 = vld [vmem:[%s3 + $0x38] sm:$0xf]
      %v542 = vld [vmem:[%s3 + $0x3c] sm:$0xf]
      %v543 = vld [vmem:[%s3 + $0x40] sm:$0xf]
      %v544 = vld [vmem:[%s3 + $0x44] sm:$0xf]
      %v545 = vld [vmem:[%s3 + $0x48] sm:$0xf]
      %v546 = vld [vmem:[%s3 + $0x4c] sm:$0xf]
      %v547 = vld [vmem:[%s3 + $0x50] sm:$0xf]
      %v548 = vld [vmem:[%s3 + $0x54] sm:$0xf]
      %v549 = vld [vmem:[%s3 + $0x58] sm:$0xf]
      %v550 = vld [vmem:[%s3 + $0x5c] sm:$0xf]
      %v551 = vld [vmem:[%s3 + $0x60] sm:$0xf]
      %v552 = vld [vmem:[%s3 + $0x64] sm:$0xf]
      %v553 = vld [vmem:[%s3 + $0x68] sm:$0xf]
      %v554 = vld [vmem:[%s3 + $0x6c] sm:$0xf]
      %v555 = vld [vmem:[%s3 + $0x70] sm:$0xf]
      %v556 = vld [vmem:[%s3 + $0x74] sm:$0xf]
      %v557 = vld [vmem:[%s3 + $0x78] sm:$0xf]
      %v558 = vld [vmem:[%s3 + $0x7c] sm:$0xf]
      %v559 = vld [vmem:[%s3 + $0x80] sm:$0xf]
      %v560 = vld [vmem:[%s3 + $0x84] sm:$0xf]
      %v561 = vld [vmem:[%s3 + $0x88] sm:$0xf]
      %v562 = vld [vmem:[%s3 + $0x8c] sm:$0xf]
      %v563 = vld [vmem:[%s3 + $0x90] sm:$0xf]
      %v564 = vld [vmem:[%s3 + $0x94] sm:$0xf]
      %v565 = vld [vmem:[%s3 + $0x98] sm:$0xf]
      %v566 = vld [vmem:[%s3 + $0x9c] sm:$0xf]
      %v567 = vld [vmem:[%s3 + $0xa0] sm:$0xf]
      %v568 = vld [vmem:[%s3 + $0xa4] sm:$0xf]
      %v569 = vld [vmem:[%s3 + $0xa8] sm:$0xf]
      %v570 = vld [vmem:[%s3 + $0xac] sm:$0xf]
      %v571 = vld [vmem:[%s3 + $0xb0] sm:$0xf]
      %v572 = vld [vmem:[%s3 + $0xb4] sm:$0xf]
      %v573 = vld [vmem:[%s3 + $0xb8] sm:$0xf]
      %v574 = vld [vmem:[%s3 + $0xbc] sm:$0xf]
      %v576 = vshrl.u32 %v441, 16
      %v578 = vshll.u32 %v441, 16
      %v580 = vrot.slane %v578, 1
      %v581 = vor.u32 %v576, %v580
      %v583 = vshll.u32 %v447, 16
      %v585 = vrot.slane %v583, 1
      %v586 = vsel %vm449, %v581, %v585
      %v590 = vrot.slane %v441, 1
      %v591 = vrot.slane %v447, 1
      %v592 = vsel %vm510, %v590, %v591
      %s594 = scalar_lea.vmem %s3, 192
      %v595 = vld [vmem:[%s594] sm:$0xf]
      %v596 = vld [vmem:[%s594 + $0x4] sm:$0xf]
      %v597 = vld [vmem:[%s594 + $0x8] sm:$0xf]
      %v598 = vld [vmem:[%s594 + $0xc] sm:$0xf]
      %v599 = vld [vmem:[%s594 + $0x10] sm:$0xf]
      %v600 = vld [vmem:[%s594 + $0x14] sm:$0xf]
      %v601 = vld [vmem:[%s594 + $0x18] sm:$0xf]
      %v602 = vld [vmem:[%s594 + $0x1c] sm:$0xf]
      %v603 = vld [vmem:[%s594 + $0x20] sm:$0xf]
      %v604 = vld [vmem:[%s594 + $0x24] sm:$0xf]
      %v605 = vld [vmem:[%s594 + $0x28] sm:$0xf]
      %v606 = vld [vmem:[%s594 + $0x2c] sm:$0xf]
      %v607 = vld [vmem:[%s594 + $0x30] sm:$0xf]
      %v608 = vld [vmem:[%s594 + $0x34] sm:$0xf]
      %v609 = vld [vmem:[%s594 + $0x38] sm:$0xf]
      %v610 = vld [vmem:[%s594 + $0x3c] sm:$0xf]
      %v611 = vld [vmem:[%s594 + $0x40] sm:$0xf]
      %v612 = vld [vmem:[%s594 + $0x44] sm:$0xf]
      %v613 = vld [vmem:[%s594 + $0x48] sm:$0xf]
      %v614 = vld [vmem:[%s594 + $0x4c] sm:$0xf]
      %v615 = vld [vmem:[%s594 + $0x50] sm:$0xf]
      %v616 = vld [vmem:[%s594 + $0x54] sm:$0xf]
      %v617 = vld [vmem:[%s594 + $0x58] sm:$0xf]
      %v618 = vld [vmem:[%s594 + $0x5c] sm:$0xf]
      %v619 = vld [vmem:[%s594 + $0x60] sm:$0xf]
      %v620 = vld [vmem:[%s594 + $0x64] sm:$0xf]
      %v621 = vld [vmem:[%s594 + $0x68] sm:$0xf]
      %v622 = vld [vmem:[%s594 + $0x6c] sm:$0xf]
      %v623 = vld [vmem:[%s594 + $0x70] sm:$0xf]
      %v624 = vld [vmem:[%s594 + $0x74] sm:$0xf]
      %v625 = vld [vmem:[%s594 + $0x78] sm:$0xf]
      %v626 = vld [vmem:[%s594 + $0x7c] sm:$0xf]
      %v627 = vld [vmem:[%s594 + $0x80] sm:$0xf]
      %v628 = vld [vmem:[%s594 + $0x84] sm:$0xf]
      %v629 = vld [vmem:[%s594 + $0x88] sm:$0xf]
      %v630 = vld [vmem:[%s594 + $0x8c] sm:$0xf]
      %v631 = vld [vmem:[%s594 + $0x90] sm:$0xf]
      %v632 = vld [vmem:[%s594 + $0x94] sm:$0xf]
      %v633 = vld [vmem:[%s594 + $0x98] sm:$0xf]
      %v634 = vld [vmem:[%s594 + $0x9c] sm:$0xf]
      %v635 = vld [vmem:[%s594 + $0xa0] sm:$0xf]
      %v636 = vld [vmem:[%s594 + $0xa4] sm:$0xf]
      %v637 = vld [vmem:[%s594 + $0xa8] sm:$0xf]
      %v638 = vld [vmem:[%s594 + $0xac] sm:$0xf]
      %v639 = vld [vmem:[%s594 + $0xb0] sm:$0xf]
      %v640 = vld [vmem:[%s594 + $0xb4] sm:$0xf]
      %v641 = vld [vmem:[%s594 + $0xb8] sm:$0xf]
      %v642 = vld [vmem:[%s594 + $0xbc] sm:$0xf]
      %v691 = vunpack.c.l.b16 %v595
      %v692 = vunpack.c.l.b16 %v596
      %v693 = vunpack.c.l.b16 %v597
      %v694 = vunpack.c.l.b16 %v598
      %v695 = vunpack.c.l.b16 %v599
      %v696 = vunpack.c.l.b16 %v600
      %v697 = vunpack.c.l.b16 %v601
      %v698 = vunpack.c.l.b16 %v602
      %v699 = vunpack.c.l.b16 %v603
      %v700 = vunpack.c.l.b16 %v604
      %v701 = vunpack.c.l.b16 %v605
      %v702 = vunpack.c.l.b16 %v606
      %v703 = vunpack.c.l.b16 %v607
      %v704 = vunpack.c.l.b16 %v608
      %v705 = vunpack.c.l.b16 %v609
      %v706 = vunpack.c.l.b16 %v610
      %v707 = vunpack.c.l.b16 %v611
      %v708 = vunpack.c.l.b16 %v612
      %v709 = vunpack.c.l.b16 %v613
      %v710 = vunpack.c.l.b16 %v614
      %v711 = vunpack.c.l.b16 %v615
      %v712 = vunpack.c.l.b16 %v616
      %v713 = vunpack.c.l.b16 %v617
      %v714 = vunpack.c.l.b16 %v618
      %v715 = vunpack.c.l.b16 %v619
      %v716 = vunpack.c.l.b16 %v620
      %v717 = vunpack.c.l.b16 %v621
      %v718 = vunpack.c.l.b16 %v622
      %v719 = vunpack.c.l.b16 %v623
      %v720 = vunpack.c.l.b16 %v624
      %v721 = vunpack.c.l.b16 %v625
      %v722 = vunpack.c.l.b16 %v626
      %v723 = vunpack.c.l.b16 %v627
      %v724 = vunpack.c.l.b16 %v628
      %v725 = vunpack.c.l.b16 %v629
      %v726 = vunpack.c.l.b16 %v630
      %v727 = vunpack.c.l.b16 %v631
      %v728 = vunpack.c.l.b16 %v632
      %v729 = vunpack.c.l.b16 %v633
      %v730 = vunpack.c.l.b16 %v634
      %v731 = vunpack.c.l.b16 %v635
      %v732 = vunpack.c.l.b16 %v636
      %v733 = vunpack.c.l.b16 %v637
      %v734 = vunpack.c.l.b16 %v638
      %v735 = vunpack.c.l.b16 %v639
      %v736 = vunpack.c.l.b16 %v640
      %v737 = vunpack.c.l.b16 %v641
      %v738 = vunpack.c.l.b16 %v642
      %v739 = vpack.c.b16 %v692, %v691
      %v740 = vpack.c.b16 %v694, %v693
      %v741 = vpack.c.b16 %v696, %v695
      %v742 = vpack.c.b16 %v698, %v697
      %v743 = vpack.c.b16 %v700, %v699
      %v744 = vpack.c.b16 %v702, %v701
      %v745 = vpack.c.b16 %v704, %v703
      %v746 = vpack.c.b16 %v706, %v705
      %v747 = vpack.c.b16 %v708, %v707
      %v748 = vpack.c.b16 %v710, %v709
      %v749 = vpack.c.b16 %v712, %v711
      %v750 = vpack.c.b16 %v714, %v713
      %v751 = vpack.c.b16 %v716, %v715
      %v752 = vpack.c.b16 %v718, %v717
      %v753 = vpack.c.b16 %v720, %v719
      %v754 = vpack.c.b16 %v722, %v721
      %v755 = vpack.c.b16 %v724, %v723
      %v756 = vpack.c.b16 %v726, %v725
      %v757 = vpack.c.b16 %v728, %v727
      %v758 = vpack.c.b16 %v730, %v729
      %v759 = vpack.c.b16 %v732, %v731
      %v760 = vpack.c.b16 %v734, %v733
      %v761 = vpack.c.b16 %v736, %v735
      %v762 = vpack.c.b16 %v738, %v737
      %787 = vmatprep.subr.bf16.mxu0 0
      %788 = vmatpush1.bf16.msra.mxu0 %v746
      %789 = vmatprep.subr.bf16.mxu0 0
      %790 = vmatpush1.bf16.msra.mxu0 %v745
      %791 = vmatprep.subr.bf16.mxu0 0
      %792 = vmatpush1.bf16.msra.mxu0 %v744
      %793 = vmatprep.subr.bf16.mxu0 0
      %794 = vmatpush1.bf16.msra.mxu0 %v743
      %795 = vmatprep.subr.bf16.mxu0 0
      %796 = vmatpush1.bf16.msra.mxu0 %v742
      %797 = vmatprep.subr.bf16.mxu0 0
      %798 = vmatpush1.bf16.msra.mxu0 %v741
      %799 = vmatprep.subr.bf16.mxu0 0
      %800 = vmatpush1.bf16.msra.mxu0 %v740
      %801 = vmatprep.subr.bf16.mxu0 0
      %802 = vmatpush1.bf16.msra.mxu0 %v739
      %803 = vmatprep.subr.bf16.mxu0 0
      %804 = vmatpush2.bf16.msra.mxu0 %v754
      %805 = vmatprep.subr.bf16.mxu0 0
      %806 = vmatpush2.bf16.msra.mxu0 %v753
      %807 = vmatprep.subr.bf16.mxu0 0
      %808 = vmatpush2.bf16.msra.mxu0 %v752
      %809 = vmatprep.subr.bf16.mxu0 0
      %810 = vmatpush2.bf16.msra.mxu0 %v751
      %811 = vmatprep.subr.bf16.mxu0 0
      %812 = vmatpush2.bf16.msra.mxu0 %v750
      %813 = vmatprep.subr.bf16.mxu0 0
      %814 = vmatpush2.bf16.msra.mxu0 %v749
      %815 = vmatprep.subr.bf16.mxu0 0
      %816 = vmatpush2.bf16.msra.mxu0 %v748
      %817 = vmatprep.subr.bf16.mxu0 0
      %818 = vmatpush2.bf16.msra.mxu0 %v747
      %819 = vmatprep.mubr.bf16.mxu0 %v473
      %820 = vmatmul.mubr.bf16.gmra.mxu0 %v438
      %v821 = vpop.f32.mrf.mxu0
      %v822 = vadd.f32 0.0, %v821
      %v823 = vpop.f32.mrf.mxu0
      %v824 = vpop.f32.mrf.mxu0
      %v825 = vadd.f32 0.0, %v824
      %v826 = vpop.f32.mrf.mxu0
      %827 = vmatprep.mubr.bf16.mxu0 %v485
      %828 = vmatmul.mubr.bf16.gmra.mxu0 %v439
      %v829 = vpop.f32.mrf.mxu0
      %v830 = vadd.f32 0.0, %v829
      %v831 = vpop.f32.mrf.mxu0
      %v832 = vpop.f32.mrf.mxu0
      %v833 = vadd.f32 0.0, %v832
      %v834 = vpop.f32.mrf.mxu0
      %835 = vmatprep.mubr.bf16.mxu0 %v497
      %836 = vmatmul.mubr.bf16.gmra.mxu0 %v440
      %v837 = vpop.f32.mrf.mxu0
      %v838 = vadd.f32 0.0, %v837
      %v839 = vpop.f32.mrf.mxu0
      %v840 = vpop.f32.mrf.mxu0
      %v841 = vadd.f32 0.0, %v840
      %v842 = vpop.f32.mrf.mxu0
      %843 = vmatprep.mubr.bf16.mxu0 %v586
      %844 = vmatmul.mubr.bf16.gmra.mxu0 %v441
      %v845 = vpop.f32.mrf.mxu0
      %v846 = vadd.f32 0.0, %v845
      %v847 = vpop.f32.mrf.mxu0
      %v848 = vpop.f32.mrf.mxu0
      %v849 = vadd.f32 0.0, %v848
      %v850 = vpop.f32.mrf.mxu0
      %851 = vdwg.mxu0
      %852 = vmatprep.subr.bf16.mxu0 0
      %853 = vmatpush1.bf16.msra.mxu0 %v762
      %854 = vmatprep.subr.bf16.mxu0 0
      %855 = vmatpush1.bf16.msra.mxu0 %v761
      %856 = vmatprep.subr.bf16.mxu0 0
      %857 = vmatpush1.bf16.msra.mxu0 %v760
      %858 = vmatprep.subr.bf16.mxu0 0
      %859 = vmatpush1.bf16.msra.mxu0 %v759
      %860 = vmatprep.subr.bf16.mxu0 0
      %861 = vmatpush1.bf16.msra.mxu0 %v758
      %862 = vmatprep.subr.bf16.mxu0 0
      %863 = vmatpush1.bf16.msra.mxu0 %v757
      %864 = vmatprep.subr.bf16.mxu0 0
      %865 = vmatpush1.bf16.msra.mxu0 %v756
      %866 = vmatprep.subr.bf16.mxu0 0
      %867 = vmatpush1.bf16.msra.mxu0 %v755
      %868 = vmatprep.subr.bf16.mxu0 0
      %869 = vmatpush2.bf16.msra.mxu0 0
      %870 = vmatprep.subr.bf16.mxu0 0
      %871 = vmatpush2.bf16.msra.mxu0 0
      %872 = vmatprep.subr.bf16.mxu0 0
      %873 = vmatpush2.bf16.msra.mxu0 0
      %874 = vmatprep.subr.bf16.mxu0 0
      %875 = vmatpush2.bf16.msra.mxu0 0
      %876 = vmatprep.subr.bf16.mxu0 0
      %877 = vmatpush2.bf16.msra.mxu0 0
      %878 = vmatprep.subr.bf16.mxu0 0
      %879 = vmatpush2.bf16.msra.mxu0 0
      %880 = vmatprep.subr.bf16.mxu0 0
      %881 = vmatpush2.bf16.msra.mxu0 0
      %882 = vmatprep.subr.bf16.mxu0 0
      %883 = vmatpush2.bf16.msra.mxu0 0
      %884 = vmatprep.mubr.bf16.mxu0 0
      %885 = vmatmul.mubr.bf16.gmra.mxu0 %v516
      %v886 = vpop.f32.mrf.mxu0
      %v887 = vadd.f32 %v822, %v886
      %v888 = vpop.f32.mrf.mxu0
      %v889 = vpop.f32.mrf.mxu0
      %v890 = vadd.f32 %v825, %v889
      %v891 = vpop.f32.mrf.mxu0
      %892 = vmatprep.mubr.bf16.mxu0 0
      %893 = vmatmul.mubr.bf16.gmra.mxu0 %v519
      %v894 = vpop.f32.mrf.mxu0
      %v895 = vadd.f32 %v830, %v894
      %v896 = vpop.f32.mrf.mxu0
      %v897 = vpop.f32.mrf.mxu0
      %v898 = vadd.f32 %v833, %v897
      %v899 = vpop.f32.mrf.mxu0
      %900 = vmatprep.mubr.bf16.mxu0 0
      %901 = vmatmul.mubr.bf16.gmra.mxu0 %v522
      %v902 = vpop.f32.mrf.mxu0
      %v903 = vadd.f32 %v838, %v902
      %v904 = vpop.f32.mrf.mxu0
      %v905 = vpop.f32.mrf.mxu0
      %v906 = vadd.f32 %v841, %v905
      %v907 = vpop.f32.mrf.mxu0
      %908 = vmatprep.mubr.bf16.mxu0 0
      %909 = vmatmul.mubr.bf16.gmra.mxu0 %v592
      %v910 = vpop.f32.mrf.mxu0
      %v911 = vadd.f32 %v846, %v910
      %v912 = vpop.f32.mrf.mxu0
      %v913 = vpop.f32.mrf.mxu0
      %v914 = vadd.f32 %v849, %v913
      %v915 = vpop.f32.mrf.mxu0
      %916 = vdwg.mxu0
      %v965 = vunpack.c.l.b16 %v527
      %v966 = vunpack.c.l.b16 %v528
      %v967 = vunpack.c.l.b16 %v529
      %v968 = vunpack.c.l.b16 %v530
      %v969 = vunpack.c.l.b16 %v531
      %v970 = vunpack.c.l.b16 %v532
      %v971 = vunpack.c.l.b16 %v533
      %v972 = vunpack.c.l.b16 %v534
      %v973 = vunpack.c.l.b16 %v535
      %v974 = vunpack.c.l.b16 %v536
      %v975 = vunpack.c.l.b16 %v537
      %v976 = vunpack.c.l.b16 %v538
      %v977 = vunpack.c.l.b16 %v539
      %v978 = vunpack.c.l.b16 %v540
      %v979 = vunpack.c.l.b16 %v541
      %v980 = vunpack.c.l.b16 %v542
      %v981 = vunpack.c.l.b16 %v543
      %v982 = vunpack.c.l.b16 %v544
      %v983 = vunpack.c.l.b16 %v545
      %v984 = vunpack.c.l.b16 %v546
      %v985 = vunpack.c.l.b16 %v547
      %v986 = vunpack.c.l.b16 %v548
      %v987 = vunpack.c.l.b16 %v549
      %v988 = vunpack.c.l.b16 %v550
      %v989 = vunpack.c.l.b16 %v551
      %v990 = vunpack.c.l.b16 %v552
      %v991 = vunpack.c.l.b16 %v553
      %v992 = vunpack.c.l.b16 %v554
      %v993 = vunpack.c.l.b16 %v555
      %v994 = vunpack.c.l.b16 %v556
      %v995 = vunpack.c.l.b16 %v557
      %v996 = vunpack.c.l.b16 %v558
      %v997 = vunpack.c.l.b16 %v559
      %v998 = vunpack.c.l.b16 %v560
      %v999 = vunpack.c.l.b16 %v561
      %v1000 = vunpack.c.l.b16 %v562
      %v1001 = vunpack.c.l.b16 %v563
      %v1002 = vunpack.c.l.b16 %v564
      %v1003 = vunpack.c.l.b16 %v565
      %v1004 = vunpack.c.l.b16 %v566
      %v1005 = vunpack.c.l.b16 %v567
      %v1006 = vunpack.c.l.b16 %v568
      %v1007 = vunpack.c.l.b16 %v569
      %v1008 = vunpack.c.l.b16 %v570
      %v1009 = vunpack.c.l.b16 %v571
      %v1010 = vunpack.c.l.b16 %v572
      %v1011 = vunpack.c.l.b16 %v573
      %v1012 = vunpack.c.l.b16 %v574
      %v1013 = vpack.c.b16 %v966, %v965
      %v1014 = vpack.c.b16 %v968, %v967
      %v1015 = vpack.c.b16 %v970, %v969
      %v1016 = vpack.c.b16 %v972, %v971
      %v1017 = vpack.c.b16 %v974, %v973
      %v1018 = vpack.c.b16 %v976, %v975
      %v1019 = vpack.c.b16 %v978, %v977
      %v1020 = vpack.c.b16 %v980, %v979
      %v1021 = vpack.c.b16 %v982, %v981
      %v1022 = vpack.c.b16 %v984, %v983
      %v1023 = vpack.c.b16 %v986, %v985
      %v1024 = vpack.c.b16 %v988, %v987
      %v1025 = vpack.c.b16 %v990, %v989
      %v1026 = vpack.c.b16 %v992, %v991
      %v1027 = vpack.c.b16 %v994, %v993
      %v1028 = vpack.c.b16 %v996, %v995
      %v1029 = vpack.c.b16 %v998, %v997
      %v1030 = vpack.c.b16 %v1000, %v999
      %v1031 = vpack.c.b16 %v1002, %v1001
      %v1032 = vpack.c.b16 %v1004, %v1003
      %v1033 = vpack.c.b16 %v1006, %v1005
      %v1034 = vpack.c.b16 %v1008, %v1007
      %v1035 = vpack.c.b16 %v1010, %v1009
      %v1036 = vpack.c.b16 %v1012, %v1011
      %1061 = vmatprep.subr.bf16.mxu0 0
      %1062 = vmatpush1.bf16.msra.mxu0 %v1020
      %1063 = vmatprep.subr.bf16.mxu0 0
      %1064 = vmatpush1.bf16.msra.mxu0 %v1019
      %1065 = vmatprep.subr.bf16.mxu0 0
      %1066 = vmatpush1.bf16.msra.mxu0 %v1018
      %1067 = vmatprep.subr.bf16.mxu0 0
      %1068 = vmatpush1.bf16.msra.mxu0 %v1017
      %1069 = vmatprep.subr.bf16.mxu0 0
      %1070 = vmatpush1.bf16.msra.mxu0 %v1016
      %1071 = vmatprep.subr.bf16.mxu0 0
      %1072 = vmatpush1.bf16.msra.mxu0 %v1015
      %1073 = vmatprep.subr.bf16.mxu0 0
      %1074 = vmatpush1.bf16.msra.mxu0 %v1014
      %1075 = vmatprep.subr.bf16.mxu0 0
      %1076 = vmatpush1.bf16.msra.mxu0 %v1013
      %1077 = vmatprep.subr.bf16.mxu0 0
      %1078 = vmatpush2.bf16.msra.mxu0 %v1028
      %1079 = vmatprep.subr.bf16.mxu0 0
      %1080 = vmatpush2.bf16.msra.mxu0 %v1027
      %1081 = vmatprep.subr.bf16.mxu0 0
      %1082 = vmatpush2.bf16.msra.mxu0 %v1026
      %1083 = vmatprep.subr.bf16.mxu0 0
      %1084 = vmatpush2.bf16.msra.mxu0 %v1025
      %1085 = vmatprep.subr.bf16.mxu0 0
      %1086 = vmatpush2.bf16.msra.mxu0 %v1024
      %1087 = vmatprep.subr.bf16.mxu0 0
      %1088 = vmatpush2.bf16.msra.mxu0 %v1023
      %1089 = vmatprep.subr.bf16.mxu0 0
      %1090 = vmatpush2.bf16.msra.mxu0 %v1022
      %1091 = vmatprep.subr.bf16.mxu0 0
      %1092 = vmatpush2.bf16.msra.mxu0 %v1021
      %1093 = vmatprep.mubr.bf16.mxu0 %v461
      %1094 = vmatmul.mubr.bf16.gmra.mxu0 %v437
      %v1095 = vpop.f32.mrf.mxu0
      %v1096 = vadd.f32 %v887, %v1095
      %v1097 = vpop.f32.mrf.mxu0
      %v1098 = vpop.f32.mrf.mxu0
      %v1099 = vadd.f32 %v890, %v1098
      %v1100 = vpop.f32.mrf.mxu0
      %1101 = vmatprep.mubr.bf16.mxu0 %v473
      %1102 = vmatmul.mubr.bf16.gmra.mxu0 %v438
      %v1103 = vpop.f32.mrf.mxu0
      %v1104 = vadd.f32 %v895, %v1103
      %v1105 = vpop.f32.mrf.mxu0
      %v1106 = vpop.f32.mrf.mxu0
      %v1107 = vadd.f32 %v898, %v1106
      %v1108 = vpop.f32.mrf.mxu0
      %1109 = vmatprep.mubr.bf16.mxu0 %v485
      %1110 = vmatmul.mubr.bf16.gmra.mxu0 %v439
      %v1111 = vpop.f32.mrf.mxu0
      %v1112 = vadd.f32 %v903, %v1111
      %v1113 = vpop.f32.mrf.mxu0
      %v1114 = vpop.f32.mrf.mxu0
      %v1115 = vadd.f32 %v906, %v1114
      %v1116 = vpop.f32.mrf.mxu0
      %1117 = vmatprep.mubr.bf16.mxu0 %v497
      %1118 = vmatmul.mubr.bf16.gmra.mxu0 %v440
      %v1119 = vpop.f32.mrf.mxu0
      %v1120 = vadd.f32 %v911, %v1119
      %v1121 = vpop.f32.mrf.mxu0
      %v1122 = vpop.f32.mrf.mxu0
      %v1123 = vadd.f32 %v914, %v1122
      %v1124 = vpop.f32.mrf.mxu0
      %1125 = vdwg.mxu0
      %1126 = vmatprep.subr.bf16.mxu0 0
      %1127 = vmatpush1.bf16.msra.mxu0 %v1036
      %1128 = vmatprep.subr.bf16.mxu0 0
      %1129 = vmatpush1.bf16.msra.mxu0 %v1035
      %1130 = vmatprep.subr.bf16.mxu0 0
      %1131 = vmatpush1.bf16.msra.mxu0 %v1034
      %1132 = vmatprep.subr.bf16.mxu0 0
      %1133 = vmatpush1.bf16.msra.mxu0 %v1033
      %1134 = vmatprep.subr.bf16.mxu0 0
      %1135 = vmatpush1.bf16.msra.mxu0 %v1032
      %1136 = vmatprep.subr.bf16.mxu0 0
      %1137 = vmatpush1.bf16.msra.mxu0 %v1031
      %1138 = vmatprep.subr.bf16.mxu0 0
      %1139 = vmatpush1.bf16.msra.mxu0 %v1030
      %1140 = vmatprep.subr.bf16.mxu0 0
      %1141 = vmatpush1.bf16.msra.mxu0 %v1029
      %1142 = vmatprep.subr.bf16.mxu0 0
      %1143 = vmatpush2.bf16.msra.mxu0 0
      %1144 = vmatprep.subr.bf16.mxu0 0
      %1145 = vmatpush2.bf16.msra.mxu0 0
      %1146 = vmatprep.subr.bf16.mxu0 0
      %1147 = vmatpush2.bf16.msra.mxu0 0
      %1148 = vmatprep.subr.bf16.mxu0 0
      %1149 = vmatpush2.bf16.msra.mxu0 0
      %1150 = vmatprep.subr.bf16.mxu0 0
      %1151 = vmatpush2.bf16.msra.mxu0 0
      %1152 = vmatprep.subr.bf16.mxu0 0
      %1153 = vmatpush2.bf16.msra.mxu0 0
      %1154 = vmatprep.subr.bf16.mxu0 0
      %1155 = vmatpush2.bf16.msra.mxu0 0
      %1156 = vmatprep.subr.bf16.mxu0 0
      %1157 = vmatpush2.bf16.msra.mxu0 0
      %1158 = vmatprep.mubr.bf16.mxu0 0
      %1159 = vmatmul.mubr.bf16.gmra.mxu0 %v513
      %v1160 = vpop.f32.mrf.mxu0
      %v1161 = vadd.f32 %v1096, %v1160
      %v1162 = vpop.f32.mrf.mxu0
      %v1163 = vpop.f32.mrf.mxu0
      %v1164 = vadd.f32 %v1099, %v1163
      %v1165 = vpop.f32.mrf.mxu0
      %1166 = vmatprep.mubr.bf16.mxu0 0
      %1167 = vmatmul.mubr.bf16.gmra.mxu0 %v516
      %v1168 = vpop.f32.mrf.mxu0
      %v1169 = vadd.f32 %v1104, %v1168
      %v1170 = vpop.f32.mrf.mxu0
      %v1171 = vpop.f32.mrf.mxu0
      %v1172 = vadd.f32 %v1107, %v1171
      %v1173 = vpop.f32.mrf.mxu0
      %1174 = vmatprep.mubr.bf16.mxu0 0
      %1175 = vmatmul.mubr.bf16.gmra.mxu0 %v519
      %v1176 = vpop.f32.mrf.mxu0
      %v1177 = vadd.f32 %v1112, %v1176
      %v1178 = vpop.f32.mrf.mxu0
      %v1179 = vpop.f32.mrf.mxu0
      %v1180 = vadd.f32 %v1115, %v1179
      %v1181 = vpop.f32.mrf.mxu0
      %1182 = vmatprep.mubr.bf16.mxu0 0
      %1183 = vmatmul.mubr.bf16.gmra.mxu0 %v522
      %v1184 = vpop.f32.mrf.mxu0
      %v1185 = vadd.f32 %v1120, %v1184
      %v1186 = vpop.f32.mrf.mxu0
      %v1187 = vpop.f32.mrf.mxu0
      %v1188 = vadd.f32 %v1123, %v1187
      %v1189 = vpop.f32.mrf.mxu0
      %1190 = vdwg.mxu0
      %v1192 = vshrl.u32 %v442, 16
      %v1194 = vshll.u32 %v442, 16
      %v1196 = vrot.slane %v1194, 1
      %v1197 = vor.u32 %v1192, %v1196
      %v1199 = vshll.u32 %v448, 16
      %v1201 = vrot.slane %v1199, 1
      %v1202 = vsel %vm449, %v1197, %v1201
      %v1206 = vrot.slane %v442, 1
      %v1207 = vrot.slane %v448, 1
      %v1208 = vsel %vm510, %v1206, %v1207
      %s1210 = scalar_lea.vmem %s3, 384
      %v1211 = vld [vmem:[%s1210] sm:$0xf]
      %v1212 = vld [vmem:[%s1210 + $0x4] sm:$0xf]
      %v1213 = vld [vmem:[%s1210 + $0x8] sm:$0xf]
      %v1214 = vld [vmem:[%s1210 + $0xc] sm:$0xf]
      %v1215 = vld [vmem:[%s1210 + $0x10] sm:$0xf]
      %v1216 = vld [vmem:[%s1210 + $0x14] sm:$0xf]
      %v1217 = vld [vmem:[%s1210 + $0x18] sm:$0xf]
      %v1218 = vld [vmem:[%s1210 + $0x1c] sm:$0xf]
      %v1219 = vld [vmem:[%s1210 + $0x20] sm:$0xf]
      %v1220 = vld [vmem:[%s1210 + $0x24] sm:$0xf]
      %v1221 = vld [vmem:[%s1210 + $0x28] sm:$0xf]
      %v1222 = vld [vmem:[%s1210 + $0x2c] sm:$0xf]
      %v1223 = vld [vmem:[%s1210 + $0x30] sm:$0xf]
      %v1224 = vld [vmem:[%s1210 + $0x34] sm:$0xf]
      %v1225 = vld [vmem:[%s1210 + $0x38] sm:$0xf]
      %v1226 = vld [vmem:[%s1210 + $0x3c] sm:$0xf]
      %v1227 = vld [vmem:[%s1210 + $0x40] sm:$0xf]
      %v1228 = vld [vmem:[%s1210 + $0x44] sm:$0xf]
      %v1229 = vld [vmem:[%s1210 + $0x48] sm:$0xf]
      %v1230 = vld [vmem:[%s1210 + $0x4c] sm:$0xf]
      %v1231 = vld [vmem:[%s1210 + $0x50] sm:$0xf]
      %v1232 = vld [vmem:[%s1210 + $0x54] sm:$0xf]
      %v1233 = vld [vmem:[%s1210 + $0x58] sm:$0xf]
      %v1234 = vld [vmem:[%s1210 + $0x5c] sm:$0xf]
      %v1235 = vld [vmem:[%s1210 + $0x60] sm:$0xf]
      %v1236 = vld [vmem:[%s1210 + $0x64] sm:$0xf]
      %v1237 = vld [vmem:[%s1210 + $0x68] sm:$0xf]
      %v1238 = vld [vmem:[%s1210 + $0x6c] sm:$0xf]
      %v1239 = vld [vmem:[%s1210 + $0x70] sm:$0xf]
      %v1240 = vld [vmem:[%s1210 + $0x74] sm:$0xf]
      %v1241 = vld [vmem:[%s1210 + $0x78] sm:$0xf]
      %v1242 = vld [vmem:[%s1210 + $0x7c] sm:$0xf]
      %v1243 = vld [vmem:[%s1210 + $0x80] sm:$0xf]
      %v1244 = vld [vmem:[%s1210 + $0x84] sm:$0xf]
      %v1245 = vld [vmem:[%s1210 + $0x88] sm:$0xf]
      %v1246 = vld [vmem:[%s1210 + $0x8c] sm:$0xf]
      %v1247 = vld [vmem:[%s1210 + $0x90] sm:$0xf]
      %v1248 = vld [vmem:[%s1210 + $0x94] sm:$0xf]
      %v1249 = vld [vmem:[%s1210 + $0x98] sm:$0xf]
      %v1250 = vld [vmem:[%s1210 + $0x9c] sm:$0xf]
      %v1251 = vld [vmem:[%s1210 + $0xa0] sm:$0xf]
      %v1252 = vld [vmem:[%s1210 + $0xa4] sm:$0xf]
      %v1253 = vld [vmem:[%s1210 + $0xa8] sm:$0xf]
      %v1254 = vld [vmem:[%s1210 + $0xac] sm:$0xf]
      %v1255 = vld [vmem:[%s1210 + $0xb0] sm:$0xf]
      %v1256 = vld [vmem:[%s1210 + $0xb4] sm:$0xf]
      %v1257 = vld [vmem:[%s1210 + $0xb8] sm:$0xf]
      %v1258 = vld [vmem:[%s1210 + $0xbc] sm:$0xf]
      %v1307 = vunpack.c.l.b16 %v1211
      %v1308 = vunpack.c.l.b16 %v1212
      %v1309 = vunpack.c.l.b16 %v1213
      %v1310 = vunpack.c.l.b16 %v1214
      %v1311 = vunpack.c.l.b16 %v1215
      %v1312 = vunpack.c.l.b16 %v1216
      %v1313 = vunpack.c.l.b16 %v1217
      %v1314 = vunpack.c.l.b16 %v1218
      %v1315 = vunpack.c.l.b16 %v1219
      %v1316 = vunpack.c.l.b16 %v1220
      %v1317 = vunpack.c.l.b16 %v1221
      %v1318 = vunpack.c.l.b16 %v1222
      %v1319 = vunpack.c.l.b16 %v1223
      %v1320 = vunpack.c.l.b16 %v1224
      %v1321 = vunpack.c.l.b16 %v1225
      %v1322 = vunpack.c.l.b16 %v1226
      %v1323 = vunpack.c.l.b16 %v1227
      %v1324 = vunpack.c.l.b16 %v1228
      %v1325 = vunpack.c.l.b16 %v1229
      %v1326 = vunpack.c.l.b16 %v1230
      %v1327 = vunpack.c.l.b16 %v1231
      %v1328 = vunpack.c.l.b16 %v1232
      %v1329 = vunpack.c.l.b16 %v1233
      %v1330 = vunpack.c.l.b16 %v1234
      %v1331 = vunpack.c.l.b16 %v1235
      %v1332 = vunpack.c.l.b16 %v1236
      %v1333 = vunpack.c.l.b16 %v1237
      %v1334 = vunpack.c.l.b16 %v1238
      %v1335 = vunpack.c.l.b16 %v1239
      %v1336 = vunpack.c.l.b16 %v1240
      %v1337 = vunpack.c.l.b16 %v1241
      %v1338 = vunpack.c.l.b16 %v1242
      %v1339 = vunpack.c.l.b16 %v1243
      %v1340 = vunpack.c.l.b16 %v1244
      %v1341 = vunpack.c.l.b16 %v1245
      %v1342 = vunpack.c.l.b16 %v1246
      %v1343 = vunpack.c.l.b16 %v1247
      %v1344 = vunpack.c.l.b16 %v1248
      %v1345 = vunpack.c.l.b16 %v1249
      %v1346 = vunpack.c.l.b16 %v1250
      %v1347 = vunpack.c.l.b16 %v1251
      %v1348 = vunpack.c.l.b16 %v1252
      %v1349 = vunpack.c.l.b16 %v1253
      %v1350 = vunpack.c.l.b16 %v1254
      %v1351 = vunpack.c.l.b16 %v1255
      %v1352 = vunpack.c.l.b16 %v1256
      %v1353 = vunpack.c.l.b16 %v1257
      %v1354 = vunpack.c.l.b16 %v1258
      %v1355 = vpack.c.b16 %v1308, %v1307
      %v1356 = vpack.c.b16 %v1310, %v1309
      %v1357 = vpack.c.b16 %v1312, %v1311
      %v1358 = vpack.c.b16 %v1314, %v1313
      %v1359 = vpack.c.b16 %v1316, %v1315
      %v1360 = vpack.c.b16 %v1318, %v1317
      %v1361 = vpack.c.b16 %v1320, %v1319
      %v1362 = vpack.c.b16 %v1322, %v1321
      %v1363 = vpack.c.b16 %v1324, %v1323
      %v1364 = vpack.c.b16 %v1326, %v1325
      %v1365 = vpack.c.b16 %v1328, %v1327
      %v1366 = vpack.c.b16 %v1330, %v1329
      %v1367 = vpack.c.b16 %v1332, %v1331
      %v1368 = vpack.c.b16 %v1334, %v1333
      %v1369 = vpack.c.b16 %v1336, %v1335
      %v1370 = vpack.c.b16 %v1338, %v1337
      %v1371 = vpack.c.b16 %v1340, %v1339
      %v1372 = vpack.c.b16 %v1342, %v1341
      %v1373 = vpack.c.b16 %v1344, %v1343
      %v1374 = vpack.c.b16 %v1346, %v1345
      %v1375 = vpack.c.b16 %v1348, %v1347
      %v1376 = vpack.c.b16 %v1350, %v1349
      %v1377 = vpack.c.b16 %v1352, %v1351
      %v1378 = vpack.c.b16 %v1354, %v1353
      %1403 = vmatprep.subr.bf16.mxu0 0
      %1404 = vmatpush1.bf16.msra.mxu0 %v1362
      %1405 = vmatprep.subr.bf16.mxu0 0
      %1406 = vmatpush1.bf16.msra.mxu0 %v1361
      %1407 = vmatprep.subr.bf16.mxu0 0
      %1408 = vmatpush1.bf16.msra.mxu0 %v1360
      %1409 = vmatprep.subr.bf16.mxu0 0
      %1410 = vmatpush1.bf16.msra.mxu0 %v1359
      %1411 = vmatprep.subr.bf16.mxu0 0
      %1412 = vmatpush1.bf16.msra.mxu0 %v1358
      %1413 = vmatprep.subr.bf16.mxu0 0
      %1414 = vmatpush1.bf16.msra.mxu0 %v1357
      %1415 = vmatprep.subr.bf16.mxu0 0
      %1416 = vmatpush1.bf16.msra.mxu0 %v1356
      %1417 = vmatprep.subr.bf16.mxu0 0
      %1418 = vmatpush1.bf16.msra.mxu0 %v1355
      %1419 = vmatprep.subr.bf16.mxu0 0
      %1420 = vmatpush2.bf16.msra.mxu0 %v1370
      %1421 = vmatprep.subr.bf16.mxu0 0
      %1422 = vmatpush2.bf16.msra.mxu0 %v1369
      %1423 = vmatprep.subr.bf16.mxu0 0
      %1424 = vmatpush2.bf16.msra.mxu0 %v1368
      %1425 = vmatprep.subr.bf16.mxu0 0
      %1426 = vmatpush2.bf16.msra.mxu0 %v1367
      %1427 = vmatprep.subr.bf16.mxu0 0
      %1428 = vmatpush2.bf16.msra.mxu0 %v1366
      %1429 = vmatprep.subr.bf16.mxu0 0
      %1430 = vmatpush2.bf16.msra.mxu0 %v1365
      %1431 = vmatprep.subr.bf16.mxu0 0
      %1432 = vmatpush2.bf16.msra.mxu0 %v1364
      %1433 = vmatprep.subr.bf16.mxu0 0
      %1434 = vmatpush2.bf16.msra.mxu0 %v1363
      %1435 = vmatprep.mubr.bf16.mxu0 %v485
      %1436 = vmatmul.mubr.bf16.gmra.mxu0 %v439
      %v1437 = vpop.f32.mrf.mxu0
      %v1438 = vadd.f32 0.0, %v1437
      %v1439 = vpop.f32.mrf.mxu0
      %v1440 = vpop.f32.mrf.mxu0
      %v1441 = vadd.f32 0.0, %v1440
      %v1442 = vpop.f32.mrf.mxu0
      %1443 = vmatprep.mubr.bf16.mxu0 %v497
      %1444 = vmatmul.mubr.bf16.gmra.mxu0 %v440
      %v1445 = vpop.f32.mrf.mxu0
      %v1446 = vadd.f32 0.0, %v1445
      %v1447 = vpop.f32.mrf.mxu0
      %v1448 = vpop.f32.mrf.mxu0
      %v1449 = vadd.f32 0.0, %v1448
      %v1450 = vpop.f32.mrf.mxu0
      %1451 = vmatprep.mubr.bf16.mxu0 %v586
      %1452 = vmatmul.mubr.bf16.gmra.mxu0 %v441
      %v1453 = vpop.f32.mrf.mxu0
      %v1454 = vadd.f32 0.0, %v1453
      %v1455 = vpop.f32.mrf.mxu0
      %v1456 = vpop.f32.mrf.mxu0
      %v1457 = vadd.f32 0.0, %v1456
      %v1458 = vpop.f32.mrf.mxu0
      %1459 = vmatprep.mubr.bf16.mxu0 %v1202
      %1460 = vmatmul.mubr.bf16.gmra.mxu0 %v442
      %v1461 = vpop.f32.mrf.mxu0
      %v1462 = vadd.f32 0.0, %v1461
      %v1463 = vpop.f32.mrf.mxu0
      %v1464 = vpop.f32.mrf.mxu0
      %v1465 = vadd.f32 0.0, %v1464
      %v1466 = vpop.f32.mrf.mxu0
      %1467 = vdwg.mxu0
      %1468 = vmatprep.subr.bf16.mxu0 0
      %1469 = vmatpush1.bf16.msra.mxu0 %v1378
      %1470 = vmatprep.subr.bf16.mxu0 0
      %1471 = vmatpush1.bf16.msra.mxu0 %v1377
      %1472 = vmatprep.subr.bf16.mxu0 0
      %1473 = vmatpush1.bf16.msra.mxu0 %v1376
      %1474 = vmatprep.subr.bf16.mxu0 0
      %1475 = vmatpush1.bf16.msra.mxu0 %v1375
      %1476 = vmatprep.subr.bf16.mxu0 0
      %1477 = vmatpush1.bf16.msra.mxu0 %v1374
      %1478 = vmatprep.subr.bf16.mxu0 0
      %1479 = vmatpush1.bf16.msra.mxu0 %v1373
      %1480 = vmatprep.subr.bf16.mxu0 0
      %1481 = vmatpush1.bf16.msra.mxu0 %v1372
      %1482 = vmatprep.subr.bf16.mxu0 0
      %1483 = vmatpush1.bf16.msra.mxu0 %v1371
      %1484 = vmatprep.subr.bf16.mxu0 0
      %1485 = vmatpush2.bf16.msra.mxu0 0
      %1486 = vmatprep.subr.bf16.mxu0 0
      %1487 = vmatpush2.bf16.msra.mxu0 0
      %1488 = vmatprep.subr.bf16.mxu0 0
      %1489 = vmatpush2.bf16.msra.mxu0 0
      %1490 = vmatprep.subr.bf16.mxu0 0
      %1491 = vmatpush2.bf16.msra.mxu0 0
      %1492 = vmatprep.subr.bf16.mxu0 0
      %1493 = vmatpush2.bf16.msra.mxu0 0
      %1494 = vmatprep.subr.bf16.mxu0 0
      %1495 = vmatpush2.bf16.msra.mxu0 0
      %1496 = vmatprep.subr.bf16.mxu0 0
      %1497 = vmatpush2.bf16.msra.mxu0 0
      %1498 = vmatprep.subr.bf16.mxu0 0
      %1499 = vmatpush2.bf16.msra.mxu0 0
      %1500 = vmatprep.mubr.bf16.mxu0 0
      %1501 = vmatmul.mubr.bf16.gmra.mxu0 %v519
      %v1502 = vpop.f32.mrf.mxu0
      %v1503 = vadd.f32 %v1438, %v1502
      %v1504 = vpop.f32.mrf.mxu0
      %v1505 = vpop.f32.mrf.mxu0
      %v1506 = vadd.f32 %v1441, %v1505
      %v1507 = vpop.f32.mrf.mxu0
      %1508 = vmatprep.mubr.bf16.mxu0 0
      %1509 = vmatmul.mubr.bf16.gmra.mxu0 %v522
      %v1510 = vpop.f32.mrf.mxu0
      %v1511 = vadd.f32 %v1446, %v1510
      %v1512 = vpop.f32.mrf.mxu0
      %v1513 = vpop.f32.mrf.mxu0
      %v1514 = vadd.f32 %v1449, %v1513
      %v1515 = vpop.f32.mrf.mxu0
      %1516 = vmatprep.mubr.bf16.mxu0 0
      %1517 = vmatmul.mubr.bf16.gmra.mxu0 %v592
      %v1518 = vpop.f32.mrf.mxu0
      %v1519 = vadd.f32 %v1454, %v1518
      %v1520 = vpop.f32.mrf.mxu0
      %v1521 = vpop.f32.mrf.mxu0
      %v1522 = vadd.f32 %v1457, %v1521
      %v1523 = vpop.f32.mrf.mxu0
      %1524 = vmatprep.mubr.bf16.mxu0 0
      %1525 = vmatmul.mubr.bf16.gmra.mxu0 %v1208
      %v1526 = vpop.f32.mrf.mxu0
      %v1527 = vadd.f32 %v1462, %v1526
      %v1528 = vpop.f32.mrf.mxu0
      %v1529 = vpop.f32.mrf.mxu0
      %v1530 = vadd.f32 %v1465, %v1529
      %v1531 = vpop.f32.mrf.mxu0
      %1532 = vdwg.mxu0
      %v1533 = vadd.f32 %v1161, %v1503
      %v1534 = vadd.f32 %v1164, %v1506
      %v1535 = vadd.f32 %v1169, %v1511
      %v1536 = vadd.f32 %v1172, %v1514
      %v1537 = vadd.f32 %v1177, %v1519
      %v1538 = vadd.f32 %v1180, %v1522
      %v1539 = vadd.f32 %v1185, %v1527
      %v1540 = vadd.f32 %v1188, %v1530
      %v1541 = vpack.c.bf16 %v1534, %v1533
      %v1542 = vpack.c.bf16 %v1536, %v1535
      %v1543 = vpack.c.bf16 %v1538, %v1537
      %v1544 = vpack.c.bf16 %v1540, %v1539
      %v1549 = vunpack.c.l.b16 %v1541
      %v1550 = vunpack.c.h.b16 %v1541
      %v1551 = vunpack.c.l.b16 %v1542
      %v1552 = vunpack.c.h.b16 %v1542
      %v1553 = vunpack.c.l.b16 %v1543
      %v1554 = vunpack.c.h.b16 %v1543
      %v1555 = vunpack.c.l.b16 %v1544
      %v1556 = vunpack.c.h.b16 %v1544
      %v1557 = vpack.c.b16 %v1549, %v1549
      %v1558 = vpack.c.b16 %v1550, %v1550
      %v1559 = vpack.c.b16 %v1551, %v1551
      %v1560 = vpack.c.b16 %v1552, %v1552
      %v1561 = vpack.c.b16 %v1553, %v1553
      %v1562 = vpack.c.b16 %v1554, %v1554
      %v1563 = vpack.c.b16 %v1555, %v1555
      %v1564 = vpack.c.b16 %v1556, %v1556
      %1573 = vst [vmem:[%s261] sm:$0xf] %v1557
      %1574 = vst [vmem:[%s261 + $0x4] sm:$0xf] %v1558
      %1575 = vst [vmem:[%s261 + $0x8] sm:$0xf] %v1559
      %1576 = vst [vmem:[%s261 + $0xc] sm:$0xf] %v1560
      %1577 = vst [vmem:[%s261 + $0x10] sm:$0xf] %v1561
      %1578 = vst [vmem:[%s261 + $0x14] sm:$0xf] %v1562
      %1579 = vst [vmem:[%s261 + $0x18] sm:$0xf] %v1563
      %1580 = vst [vmem:[%s261 + $0x1c] sm:$0xf] %v1564
      %v1581 = vadd.f32 %v1533, %v1534
      %v1582 = vadd.f32 %v1581, %v1535
      %v1583 = vadd.f32 %v1582, %v1536
      %v1584 = vadd.f32 %v1583, %v1537
      %v1585 = vadd.f32 %v1584, %v1538
      %v1586 = vadd.f32 %v1585, %v1539
      %v1587 = vadd.f32 %v1586, %v1540
      %v1588 = vrot.slane %v1587, 4
      %v1589 = vadd.f32 %v1587, %v1588
      %v1590 = vrot.slane %v1589, 2
      %v1591 = vadd.f32 %v1589, %v1590
      %v1592 = vrot.slane %v1591, 1
      %v1593 = vadd.f32 %v1591, %v1592
      %v1594 = vmul.f32 %v1533, %v1533
      %v1595 = vmul.f32 %v1534, %v1534
      %v1596 = vmul.f32 %v1535, %v1535
      %v1597 = vmul.f32 %v1536, %v1536
      %v1598 = vmul.f32 %v1537, %v1537
      %v1599 = vmul.f32 %v1538, %v1538
      %v1600 = vmul.f32 %v1539, %v1539
      %v1601 = vmul.f32 %v1540, %v1540
      %v1602 = vadd.f32 %v1594, %v1595
      %v1603 = vadd.f32 %v1602, %v1596
      %v1604 = vadd.f32 %v1603, %v1597
      %v1605 = vadd.f32 %v1604, %v1598
      %v1606 = vadd.f32 %v1605, %v1599
      %v1607 = vadd.f32 %v1606, %v1600
      %v1608 = vadd.f32 %v1607, %v1601
      %v1609 = vrot.slane %v1608, 4
      %v1610 = vadd.f32 %v1608, %v1609
      %v1611 = vrot.slane %v1610, 2
      %v1612 = vadd.f32 %v1610, %v1611
      %v1613 = vrot.slane %v1612, 1
      %v1614 = vadd.f32 %v1612, %v1613
      %vm1615 = vcmask 1040384
      %v1616 = vsel %vm1615, %v1593, %v1614
      %1617 = vst [vmem:[%s270] sm:$0x3] %v1616
      %s1618 = smul.u32 4, %s22
      %p1619 = scmp.lt.s32.totalorder %s21, 1
      %s1620 = scalar_select %p1619, %s21, 1
      %p1621 = scmp.lt.s32.totalorder %s1618, 15
      %s1622 = scalar_select %p1621, %s1618, 15
      %s1623 = smul.addr %s1622, 2
      %s1624 = smul.addr %s1620, 32
      %s1625 = sadd.s32 %s1623, %s1624
      %s1626 = smul.addr %s1625, 4
      %s1627 = scalar_lea.vmem %s4, %s1626
      %p1628 = scmp.lt.s32.totalorder %s21, 1
      %s1629 = scalar_select %p1628, %s21, 1
      %p1630 = scmp.lt.s32.totalorder %s22, 3
      %s1631 = scalar_select %p1630, %s22, 3
      %s1632 = smul.addr %s1629, 4
      %s1633 = sadd.s32 %s1631, %s1632
      %s1634 = smul.addr %s1633, 2
      %s1635 = scalar_lea.vmem %s5, %s1634
      // Predicated region
      $region37: #{residual_blk_forward.4} parent=35 // pred_check
        %p1636 = pneg %p138
      $region38: #{residual_blk_forward.4} parent=35 // pred_check_branch
        %1638 = sbr.rel (%p1636) target = $region40
      $region39: #{residual_blk_forward.4} parent=35 // pred_region
        %s1639 = smul.u32 4, %s22
      $region40: #{residual_blk_forward.4} parent=35 // pred_fallthru
        _
      // Predicated region
      $region41: #{residual_blk_forward.4} parent=35 // pred_check
        %p1640 = pneg %p166
      $region42: #{residual_blk_forward.4} parent=35 // pred_check_branch
        %1642 = sbr.rel (%p1640) target = $region44
      $region43: #{residual_blk_forward.4} parent=35 // pred_region
        _
      $region44: #{residual_blk_forward.4} parent=35 // pred_fallthru
        _
    $region36: #{residual_blk_forward.4} parent=5 // pred_fallthru
      _
    %p1643 = scmp.le.s32.totalorder 2, %s12
    // Predicated region
    $region45: #{residual_blk_forward.4} parent=5 // pred_check
      %p1644 = pneg %p1643
    $region46: #{residual_blk_forward.4} parent=5 // pred_check_branch
      %1646 = sbr.rel (%p1644) target = $region48
    $region47: #{residual_blk_forward.4} parent=5 // pred_region
      %s1647 = ssub.s32 %s12, 2
      // Predicated region
      $region49: #{residual_blk_forward.4} parent=47 // pred_check
        %p1648 = pneg %p144
      $region50: #{residual_blk_forward.4} parent=47 // pred_check_branch
        %1650 = sbr.rel (%p1648) target = $region52
      $region51: #{residual_blk_forward.4} parent=47 // pred_region
        %s1651 = smul.u32 4, %s24
        %p1652 = scmp.lt.s32.totalorder %s23, 1
        %s1653 = scalar_select %p1652, %s23, 1
        %p1654 = scmp.lt.s32.totalorder %s1651, 15
        %s1655 = scalar_select %p1654, %s1651, 15
        %s1656 = smul.addr %s1655, 2
        %s1657 = smul.addr %s1653, 32
        %s1658 = sadd.s32 %s1656, %s1657
        %s1659 = smul.addr %s1658, 4
        %s1660 = scalar_lea.vmem %s4, %s1659
      $region52: #{residual_blk_forward.4} parent=47 // pred_fallthru
        _
      // Predicated region
      $region53: #{residual_blk_forward.4} parent=47 // pred_check
        %p1661 = pneg %p172
      $region54: #{residual_blk_forward.4} parent=47 // pred_check_branch
        %1663 = sbr.rel (%p1661) target = $region56
      $region55: #{residual_blk_forward.4} parent=47 // pred_region
        %p1664 = scmp.lt.s32.totalorder %s23, 1
        %s1665 = scalar_select %p1664, %s23, 1
        %p1666 = scmp.lt.s32.totalorder %s24, 3
        %s1667 = scalar_select %p1666, %s24, 3
        %s1668 = smul.addr %s1665, 4
        %s1669 = sadd.s32 %s1667, %s1668
        %s1670 = smul.addr %s1669, 2
        %s1671 = scalar_lea.vmem %s5, %s1670
      $region56: #{residual_blk_forward.4} parent=47 // pred_fallthru
        _
    $region48: #{residual_blk_forward.4} parent=5 // pred_fallthru
      _
  $region6: #{residual_blk_forward.4} parent=0 // loop_footer
    %s16 = sadd.s32 1, %s12
  $region7: #{residual_blk_forward.4} parent=0 // loop_footer_branch
    %11 = sbr.rel target = $region3
  $region8: #{residual_blk_forward.4} parent=0 // loop_exit
    _

</llo_original>
